<compile_context>
chip_gen: v5e
topology: v5e:2x2
jax: 0.10.0
libtpu: 0.0.40
codegen_flags: <defaults>
</compile_context>

<pallas_src>
import functools

import jax
import jax.numpy as jnp
from jax.experimental import pallas as pl
from jax.experimental.pallas import tpu as pltpu

BN_EPS = 1e-5
LEAKY_SLOPE = 0.2

HID1 = 1028          # logical hidden width of layer 1 (from the PyTorch module)
HID1_PAD = 1152      # padded to a multiple of 128 (9x128) for clean lane tiling
HID2 = 512
HID3 = 128


def _generator_kernel(z_ref, c_ref,
                      w1z_ref, w1c_ref, b1_ref, g1_ref, be1_ref,
                      w2_ref, b2_ref, g2_ref, be2_ref,
                      w3_ref, b3_ref, g3_ref, be3_ref,
                      w4_ref, b4_ref,
                      out_ref):
    """One mini-batch of the Generator forward pass, fully VMEM-resident."""

    def dot_bf16(x, w_ref):
        # Activations cast to the MXU-native bf16 input type; weights are
        # already bf16 in VMEM.  Accumulation stays in f32.
        return jnp.dot(x.astype(jnp.bfloat16), w_ref[...],
                       preferred_element_type=jnp.float32)

    def leaky_relu(x):
        # max(x, 0.2*x) == LeakyReLU(0.2) for slope in (0, 1).
        return jnp.maximum(x, LEAKY_SLOPE * x)

    def batch_norm(x, g_ref, be_ref):
        # Fused training-mode BatchNorm1d (biased variance), single pass of
        # cross-sublane reductions plus one scale/shift over x.
        mean = jnp.mean(x, axis=0, keepdims=True)
        ex2 = jnp.mean(x * x, axis=0, keepdims=True)
        var = jnp.maximum(ex2 - mean * mean, 0.0)   # guard against tiny negatives
        scale = g_ref[...] * jax.lax.rsqrt(var + BN_EPS)
        shift = be_ref[...] - mean * scale
        return x * scale + shift

    # Layer 1: split matmul replaces torch.cat((z, c), dim=1) @ W1.
    x = dot_bf16(z_ref[...], w1z_ref) + dot_bf16(c_ref[...], w1c_ref) + b1_ref[...]
    x = batch_norm(leaky_relu(x), g1_ref, be1_ref)

    x = batch_norm(leaky_relu(dot_bf16(x, w2_ref) + b2_ref[...]), g2_ref, be2_ref)
    x = batch_norm(leaky_relu(dot_bf16(x, w3_ref) + b3_ref[...]), g3_ref, be3_ref)
    # Lane-dense (B, OUT_PAD) store; wrapper slices back to input_size.
    out_ref[...] = (dot_bf16(x, w4_ref) + b4_ref[...]).astype(out_ref.dtype)


def _resident_spec(shape):
    """Full-array block with a constant index map -> stays VMEM-resident."""
    return pl.BlockSpec(shape, lambda s: tuple(0 for _ in shape))


def _step_spec(tail_shape):
    """(None, *tail): one mini-batch per grid step, leading axis squeezed."""
    return pl.BlockSpec((None, *tail_shape),
                        lambda s: (s,) + tuple(0 for _ in tail_shape))


def _pad_to_128(n):
    return max(128, ((n + 127) // 128) * 128)


@functools.partial(jax.jit, static_argnames=("input_size",))
def generator_forward(z, c, params, *, input_size):
    """Runs the Generator over one (B, ...) mini-batch or a stack (S, B, ...)
    of independent mini-batches in a single pallas_call (weights resident
    across the S grid steps)."""
    squeeze = (z.ndim == 2)
    if squeeze:
        z = z[None]
        c = c[None]
    S, B, d_lat = z.shape
    d_cond = c.shape[-1]

    h1p = params["w1z"].shape[1]
    h2 = params["w2"].shape[1]
    h3 = params["w3"].shape[1]
    out_pad = params["w4"].shape[1]

    weights = (params["w1z"], params["w1c"], params["b1"], params["g1"], params["be1"],
               params["w2"], params["b2"], params["g2"], params["be2"],
               params["w3"], params["b3"], params["g3"], params["be3"],
               params["w4"], params["b4"])

    in_specs = [_step_spec((B, d_lat)), _step_spec((B, d_cond))]
    in_specs += [_resident_spec(w.shape) for w in weights]
    out_spec = _step_spec((B, out_pad))

    # Advisory cost estimate so XLA can schedule around this custom call.
    flops = 2 * S * B * ((d_lat + d_cond) * h1p + h1p * h2 + h2 * h3 + h3 * out_pad)
    transcendentals = S * (h1p + h2 + h3)                      # rsqrt per BN column
    weight_bytes = sum(int(w.size) * w.dtype.itemsize for w in weights)
    act_bytes = S * B * 4 * (d_lat + d_cond + out_pad)
    cost = pl.CostEstimate(flops=flops, transcendentals=transcendentals,
                           bytes_accessed=weight_bytes + act_bytes)

    out = pl.pallas_call(
        _generator_kernel,
        out_shape=jax.ShapeDtypeStruct((S, B, out_pad), jnp.float32),
        grid=(S,),
        in_specs=in_specs,
        out_specs=out_spec,
        compiler_params=pltpu.CompilerParams(
            dimension_semantics=("parallel",),   # whole-mini-batch sharding (v7x 2 TCs)
            vmem_limit_bytes=8 << 20,            # working set << 8 MiB; safe on v7x
        ),
        cost_estimate=cost,
    )(z.astype(jnp.float32), c.astype(jnp.float32), *weights)

    out = out[..., :input_size]
    if squeeze:
        out = out[0]
    return out


def init_generator_params(key, latent_size, condition_size, input_size):
    """Deterministic synthetic parameters with the module's shapes.

    Linear weights are stored transposed relative to PyTorch, i.e. (in, out),
    so the kernel can do x @ W directly.  Weight matrices are bf16 (the
    DMA-dominant payload); biases / BN affine params stay f32.  The 1028-wide
    hidden dim is zero-padded to 1152 and W1 is pre-split into latent /
    condition row blocks; the output dim is zero-padded to a multiple of 128
    for lane-dense stores.
    """
    keys = jax.random.split(key, 4)

    def linear_init(k, d_in, d_out):
        bound = float(d_in) ** -0.5
        kw, kb = jax.random.split(k)
        w = jax.random.uniform(kw, (d_in, d_out), jnp.float32, -bound, bound)
        b = jax.random.uniform(kb, (1, d_out), jnp.float32, -bound, bound)
        return w, b

    d_in0 = latent_size + condition_size
    w1, b1 = linear_init(keys[0], d_in0, HID1)
    w2, b2 = linear_init(keys[1], HID1, HID2)
    w3, b3 = linear_init(keys[2], HID2, HID3)
    w4, b4 = linear_init(keys[3], HID3, input_size)

    # Hidden padding 1028 -> 1152: zero W1 cols + zero bias give zero padded
    # activations, BN (gamma=1, beta=0) keeps them zero, zero W2 rows keep
    # them out of layer 2.
    pad1 = HID1_PAD - HID1
    w1p = jnp.pad(w1, ((0, 0), (0, pad1)))
    b1p = jnp.pad(b1, ((0, 0), (0, pad1)))
    w2p = jnp.pad(w2, ((0, pad1), (0, 0)))

    # Output padding input_size -> multiple of 128: zero W4 cols / b4 entries;
    # the wrapper slices the padded columns off.
    out_pad = _pad_to_128(input_size)
    pad4 = out_pad - input_size
    w4p = jnp.pad(w4, ((0, 0), (0, pad4)))
    b4p = jnp.pad(b4, ((0, 0), (0, pad4)))

    bf16 = lambda a: a.astype(jnp.bfloat16)
    params = dict(
        w1z=bf16(w1p[:latent_size]),
        w1c=bf16(w1p[latent_size:]),
        b1=b1p,
        g1=jnp.ones((1, HID1_PAD), jnp.float32),
        be1=jnp.zeros((1, HID1_PAD), jnp.float32),
        w2=bf16(w2p), b2=b2,
        g2=jnp.ones((1, HID2), jnp.float32), be2=jnp.zeros((1, HID2), jnp.float32),
        w3=bf16(w3), b3=b3,
        g3=jnp.ones((1, HID3), jnp.float32), be3=jnp.zeros((1, HID3), jnp.float32),
        w4=bf16(w4p), b4=b4p,
    )
    return params


def _reference_forward(z, c, params, input_size):
    """Pure-JAX reference for ONE mini-batch on the unpadded logical weights.

    Mirrors the kernel's numerics (bf16 matmul operands, f32 accumulation,
    fused BN) so the comparison also validates that both paddings
    (1028->1152 and input_size->128) are semantically transparent.
    """
    w1 = jnp.concatenate([params["w1z"], params["w1c"]], axis=0)[:, :HID1]
    b1 = params["b1"][:, :HID1]
    g1 = params["g1"][:, :HID1]
    be1 = params["be1"][:, :HID1]
    w2 = params["w2"][:HID1, :]
    w4 = params["w4"][:, :input_size]
    b4 = params["b4"][:, :input_size]

    def dot_bf16(x, w):
        return jnp.dot(x.astype(jnp.bfloat16), w,
                       preferred_element_type=jnp.float32)

    def block(x, w, b, g, be):
        x = dot_bf16(x, w) + b
        x = jnp.maximum(x, LEAKY_SLOPE * x)
        mean = jnp.mean(x, axis=0, keepdims=True)
        var = jnp.maximum(jnp.mean(x * x, axis=0, keepdims=True) - mean * mean, 0.0)
        scale = g * jax.lax.rsqrt(var + BN_EPS)
        return x * scale + (be - mean * scale)

    zc = jnp.concatenate([z, c], axis=1).astype(jnp.float32)
    x = block(zc, w1, b1, g1, be1)
    x = block(x, w2, params["b2"], params["g2"], params["be2"])
    x = block(x, params["w3"], params["b3"], params["g3"], params["be3"])
    return dot_bf16(x, w4) + b4


if __name__ == "__main__":
    # Small shapes consistent with the module's forward.
    B = 8                # mini-batch size (BatchNorm couples within one mini-batch)
    S = 4                # independent mini-batches processed in one launch
    latent_size = 16
    condition_size = 8
    input_size = 32

    key = jax.random.PRNGKey(0)
    kp, kz, kc = jax.random.split(key, 3)

    params = init_generator_params(kp, latent_size, condition_size, input_size)
    z = jax.random.normal(kz, (S, B, latent_size), jnp.float32)
    c = jax.random.normal(kc, (S, B, condition_size), jnp.float32)

    # Batched-throughput path: S mini-batches, weights resident across grid steps.
    out = generator_forward(z, c, params, input_size=input_size)
    out = jax.block_until_ready(out)
    assert out.shape == (S, B, input_size)

    ref = jnp.stack([_reference_forward(z[s], c[s], params, input_size)
                     for s in range(S)])
    # bf16 matmul inputs + different reduction orders -> small f32 deltas.
    assert jnp.allclose(out, ref, atol=1e-2, rtol=1e-2), "batched mismatch vs reference"

    # Single-mini-batch path (exact module signature semantics).
    out1 = generator_forward(z[0], c[0], params, input_size=input_size)
    out1 = jax.block_until_ready(out1)
    assert out1.shape == (B, input_size)
    assert jnp.allclose(out1, ref[0], atol=1e-2, rtol=1e-2), "single-batch mismatch"

    print("KERNEL_OK")
</pallas_src>

<mosaic_0001>
module attributes {stable_mosaic.version = 11 : i64} {
  func.func @_generator_kernel(%arg0: i32, %arg1: memref<1x8x16xf32, #tpu.memory_space<vmem>>, %arg2: memref<1x8x8xf32, #tpu.memory_space<vmem>>, %arg3: memref<16x1152xbf16, #tpu.memory_space<vmem>>, %arg4: memref<8x1152xbf16, #tpu.memory_space<vmem>>, %arg5: memref<1x1152xf32, #tpu.memory_space<vmem>>, %arg6: memref<1x1152xf32, #tpu.memory_space<vmem>>, %arg7: memref<1x1152xf32, #tpu.memory_space<vmem>>, %arg8: memref<1152x512xbf16, #tpu.memory_space<vmem>>, %arg9: memref<1x512xf32, #tpu.memory_space<vmem>>, %arg10: memref<1x512xf32, #tpu.memory_space<vmem>>, %arg11: memref<1x512xf32, #tpu.memory_space<vmem>>, %arg12: memref<512x128xbf16, #tpu.memory_space<vmem>>, %arg13: memref<1x128xf32, #tpu.memory_space<vmem>>, %arg14: memref<1x128xf32, #tpu.memory_space<vmem>>, %arg15: memref<1x128xf32, #tpu.memory_space<vmem>>, %arg16: memref<128x128xbf16, #tpu.memory_space<vmem>>, %arg17: memref<1x128xf32, #tpu.memory_space<vmem>>, %arg18: memref<1x8x128xf32, #tpu.memory_space<vmem>>) attributes {dimension_semantics = [#tpu.dimension_semantics<parallel>], iteration_bounds = array<i64: 4>, scalar_prefetch = 0 : i64, scratch_operands = 0 : i64, tpu.core_type = #tpu.core_type<tc>, window_params = [{transform_indices = @transform_0, window_bounds = array<i64: 1, 8, 16>}, {transform_indices = @transform_1, window_bounds = array<i64: 1, 8, 8>}, {pipeline_mode = #tpu.pipeline_mode<synchronous>, transform_indices = @transform_2, window_bounds = array<i64: 16, 1152>}, {pipeline_mode = #tpu.pipeline_mode<synchronous>, transform_indices = @transform_3, window_bounds = array<i64: 8, 1152>}, {pipeline_mode = #tpu.pipeline_mode<synchronous>, transform_indices = @transform_4, window_bounds = array<i64: 1, 1152>}, {pipeline_mode = #tpu.pipeline_mode<synchronous>, transform_indices = @transform_5, window_bounds = array<i64: 1, 1152>}, {pipeline_mode = #tpu.pipeline_mode<synchronous>, transform_indices = @transform_6, window_bounds = array<i64: 1, 1152>}, {pipeline_mode = #tpu.pipeline_mode<synchronous>, transform_indices = @transform_7, window_bounds = array<i64: 1152, 512>}, {pipeline_mode = #tpu.pipeline_mode<synchronous>, transform_indices = @transform_8, window_bounds = array<i64: 1, 512>}, {pipeline_mode = #tpu.pipeline_mode<synchronous>, transform_indices = @transform_9, window_bounds = array<i64: 1, 512>}, {pipeline_mode = #tpu.pipeline_mode<synchronous>, transform_indices = @transform_10, window_bounds = array<i64: 1, 512>}, {pipeline_mode = #tpu.pipeline_mode<synchronous>, transform_indices = @transform_11, window_bounds = array<i64: 512, 128>}, {pipeline_mode = #tpu.pipeline_mode<synchronous>, transform_indices = @transform_12, window_bounds = array<i64: 1, 128>}, {pipeline_mode = #tpu.pipeline_mode<synchronous>, transform_indices = @transform_13, window_bounds = array<i64: 1, 128>}, {pipeline_mode = #tpu.pipeline_mode<synchronous>, transform_indices = @transform_14, window_bounds = array<i64: 1, 128>}, {pipeline_mode = #tpu.pipeline_mode<synchronous>, transform_indices = @transform_15, window_bounds = array<i64: 128, 128>}, {pipeline_mode = #tpu.pipeline_mode<synchronous>, transform_indices = @transform_16, window_bounds = array<i64: 1, 128>}, {transform_indices = @transform_17, window_bounds = array<i64: 1, 8, 128>}]} {
    %c0 = arith.constant 0 : index
    %c0_0 = arith.constant 0 : index
    %c0_1 = arith.constant 0 : index
    %0 = vector.load %arg1[%c0, %c0_0, %c0_1] : memref<1x8x16xf32, #tpu.memory_space<vmem>>, vector<1x8x16xf32>
    %1 = vector.shape_cast %0 : vector<1x8x16xf32> to vector<8x16xf32>
    %2 = arith.truncf %1 : vector<8x16xf32> to vector<8x16xbf16>
    %c0_2 = arith.constant 0 : index
    %c0_3 = arith.constant 0 : index
    %3 = vector.load %arg3[%c0_2, %c0_3] : memref<16x1152xbf16, #tpu.memory_space<vmem>>, vector<16x1152xbf16>
    %cst = arith.constant dense<0.000000e+00> : vector<8x1152xf32>
    %4 = tpu.matmul %2, %3, %cst {dimension_numbers = #tpu.dot_dimension_numbers<[1], [0], [0], [1], [0, 0, 1, 1], [], []>} : vector<8x16xbf16>, vector<16x1152xbf16>, vector<8x1152xf32> -> vector<8x1152xf32>
    %c0_4 = arith.constant 0 : index
    %c0_5 = arith.constant 0 : index
    %c0_6 = arith.constant 0 : index
    %5 = vector.load %arg2[%c0_4, %c0_5, %c0_6] : memref<1x8x8xf32, #tpu.memory_space<vmem>>, vector<1x8x8xf32>
    %6 = vector.shape_cast %5 : vector<1x8x8xf32> to vector<8x8xf32>
    %7 = arith.truncf %6 : vector<8x8xf32> to vector<8x8xbf16>
    %c0_7 = arith.constant 0 : index
    %c0_8 = arith.constant 0 : index
    %8 = vector.load %arg4[%c0_7, %c0_8] : memref<8x1152xbf16, #tpu.memory_space<vmem>>, vector<8x1152xbf16>
    %cst_9 = arith.constant dense<0.000000e+00> : vector<8x1152xf32>
    %9 = tpu.matmul %7, %8, %cst_9 {dimension_numbers = #tpu.dot_dimension_numbers<[1], [0], [0], [1], [0, 0, 1, 1], [], []>} : vector<8x8xbf16>, vector<8x1152xbf16>, vector<8x1152xf32> -> vector<8x1152xf32>
    %10 = arith.addf %4, %9 : vector<8x1152xf32>
    %c0_10 = arith.constant 0 : index
    %c0_11 = arith.constant 0 : index
    %11 = vector.load %arg5[%c0_10, %c0_11] : memref<1x1152xf32, #tpu.memory_space<vmem>>, vector<1x1152xf32>
    %12 = vector.broadcast %11 : vector<1x1152xf32> to vector<8x1152xf32>
    %13 = arith.addf %10, %12 : vector<8x1152xf32>
    %cst_12 = arith.constant 2.000000e-01 : f32
    %14 = vector.broadcast %cst_12 : f32 to vector<8x1152xf32>
    %15 = arith.mulf %14, %13 : vector<8x1152xf32>
    %16 = arith.maximumf %13, %15 : vector<8x1152xf32>
    %cst_13 = arith.constant dense<0.000000e+00> : vector<1152xf32>
    %17 = vector.multi_reduction <add>, %16, %cst_13 [0] : vector<8x1152xf32> to vector<1152xf32>
    %18 = vector.shape_cast %17 : vector<1152xf32> to vector<1x1152xf32>
    %cst_14 = arith.constant 8.000000e+00 : f32
    %19 = vector.broadcast %cst_14 : f32 to vector<1x1152xf32>
    %20 = arith.divf %18, %19 : vector<1x1152xf32>
    %21 = arith.mulf %16, %16 : vector<8x1152xf32>
    %cst_15 = arith.constant dense<0.000000e+00> : vector<1152xf32>
    %22 = vector.multi_reduction <add>, %21, %cst_15 [0] : vector<8x1152xf32> to vector<1152xf32>
    %23 = vector.shape_cast %22 : vector<1152xf32> to vector<1x1152xf32>
    %cst_16 = arith.constant 8.000000e+00 : f32
    %24 = vector.broadcast %cst_16 : f32 to vector<1x1152xf32>
    %25 = arith.divf %23, %24 : vector<1x1152xf32>
    %26 = arith.mulf %20, %20 : vector<1x1152xf32>
    %27 = arith.subf %25, %26 : vector<1x1152xf32>
    %cst_17 = arith.constant 0.000000e+00 : f32
    %28 = vector.broadcast %cst_17 : f32 to vector<1x1152xf32>
    %29 = arith.maximumf %27, %28 : vector<1x1152xf32>
    %c0_18 = arith.constant 0 : index
    %c0_19 = arith.constant 0 : index
    %30 = vector.load %arg6[%c0_18, %c0_19] : memref<1x1152xf32, #tpu.memory_space<vmem>>, vector<1x1152xf32>
    %cst_20 = arith.constant 9.99999974E-6 : f32
    %31 = vector.broadcast %cst_20 : f32 to vector<1x1152xf32>
    %32 = arith.addf %29, %31 : vector<1x1152xf32>
    %33 = math.rsqrt %32 : vector<1x1152xf32>
    %34 = arith.mulf %30, %33 : vector<1x1152xf32>
    %c0_21 = arith.constant 0 : index
    %c0_22 = arith.constant 0 : index
    %35 = vector.load %arg7[%c0_21, %c0_22] : memref<1x1152xf32, #tpu.memory_space<vmem>>, vector<1x1152xf32>
    %36 = arith.mulf %20, %34 : vector<1x1152xf32>
    %37 = arith.subf %35, %36 : vector<1x1152xf32>
    %38 = vector.broadcast %34 : vector<1x1152xf32> to vector<8x1152xf32>
    %39 = arith.mulf %16, %38 : vector<8x1152xf32>
    %40 = vector.broadcast %37 : vector<1x1152xf32> to vector<8x1152xf32>
    %41 = arith.addf %39, %40 : vector<8x1152xf32>
    %42 = arith.truncf %41 : vector<8x1152xf32> to vector<8x1152xbf16>
    %c0_23 = arith.constant 0 : index
    %c0_24 = arith.constant 0 : index
    %43 = vector.load %arg8[%c0_23, %c0_24] : memref<1152x512xbf16, #tpu.memory_space<vmem>>, vector<1152x512xbf16>
    %cst_25 = arith.constant dense<0.000000e+00> : vector<8x512xf32>
    %44 = tpu.matmul %42, %43, %cst_25 {dimension_numbers = #tpu.dot_dimension_numbers<[1], [0], [0], [1], [0, 0, 1, 1], [], []>} : vector<8x1152xbf16>, vector<1152x512xbf16>, vector<8x512xf32> -> vector<8x512xf32>
    %c0_26 = arith.constant 0 : index
    %c0_27 = arith.constant 0 : index
    %45 = vector.load %arg9[%c0_26, %c0_27] : memref<1x512xf32, #tpu.memory_space<vmem>>, vector<1x512xf32>
    %46 = vector.broadcast %45 : vector<1x512xf32> to vector<8x512xf32>
    %47 = arith.addf %44, %46 : vector<8x512xf32>
    %cst_28 = arith.constant 2.000000e-01 : f32
    %48 = vector.broadcast %cst_28 : f32 to vector<8x512xf32>
    %49 = arith.mulf %48, %47 : vector<8x512xf32>
    %50 = arith.maximumf %47, %49 : vector<8x512xf32>
    %cst_29 = arith.constant dense<0.000000e+00> : vector<512xf32>
    %51 = vector.multi_reduction <add>, %50, %cst_29 [0] : vector<8x512xf32> to vector<512xf32>
    %52 = vector.shape_cast %51 : vector<512xf32> to vector<1x512xf32>
    %cst_30 = arith.constant 8.000000e+00 : f32
    %53 = vector.broadcast %cst_30 : f32 to vector<1x512xf32>
    %54 = arith.divf %52, %53 : vector<1x512xf32>
    %55 = arith.mulf %50, %50 : vector<8x512xf32>
    %cst_31 = arith.constant dense<0.000000e+00> : vector<512xf32>
    %56 = vector.multi_reduction <add>, %55, %cst_31 [0] : vector<8x512xf32> to vector<512xf32>
    %57 = vector.shape_cast %56 : vector<512xf32> to vector<1x512xf32>
    %cst_32 = arith.constant 8.000000e+00 : f32
    %58 = vector.broadcast %cst_32 : f32 to vector<1x512xf32>
    %59 = arith.divf %57, %58 : vector<1x512xf32>
    %60 = arith.mulf %54, %54 : vector<1x512xf32>
    %61 = arith.subf %59, %60 : vector<1x512xf32>
    %cst_33 = arith.constant 0.000000e+00 : f32
    %62 = vector.broadcast %cst_33 : f32 to vector<1x512xf32>
    %63 = arith.maximumf %61, %62 : vector<1x512xf32>
    %c0_34 = arith.constant 0 : index
    %c0_35 = arith.constant 0 : index
    %64 = vector.load %arg10[%c0_34, %c0_35] : memref<1x512xf32, #tpu.memory_space<vmem>>, vector<1x512xf32>
    %cst_36 = arith.constant 9.99999974E-6 : f32
    %65 = vector.broadcast %cst_36 : f32 to vector<1x512xf32>
    %66 = arith.addf %63, %65 : vector<1x512xf32>
    %67 = math.rsqrt %66 : vector<1x512xf32>
    %68 = arith.mulf %64, %67 : vector<1x512xf32>
    %c0_37 = arith.constant 0 : index
    %c0_38 = arith.constant 0 : index
    %69 = vector.load %arg11[%c0_37, %c0_38] : memref<1x512xf32, #tpu.memory_space<vmem>>, vector<1x512xf32>
    %70 = arith.mulf %54, %68 : vector<1x512xf32>
    %71 = arith.subf %69, %70 : vector<1x512xf32>
    %72 = vector.broadcast %68 : vector<1x512xf32> to vector<8x512xf32>
    %73 = arith.mulf %50, %72 : vector<8x512xf32>
    %74 = vector.broadcast %71 : vector<1x512xf32> to vector<8x512xf32>
    %75 = arith.addf %73, %74 : vector<8x512xf32>
    %76 = arith.truncf %75 : vector<8x512xf32> to vector<8x512xbf16>
    %c0_39 = arith.constant 0 : index
    %c0_40 = arith.constant 0 : index
    %77 = vector.load %arg12[%c0_39, %c0_40] : memref<512x128xbf16, #tpu.memory_space<vmem>>, vector<512x128xbf16>
    %cst_41 = arith.constant dense<0.000000e+00> : vector<8x128xf32>
    %78 = tpu.matmul %76, %77, %cst_41 {dimension_numbers = #tpu.dot_dimension_numbers<[1], [0], [0], [1], [0, 0, 1, 1], [], []>} : vector<8x512xbf16>, vector<512x128xbf16>, vector<8x128xf32> -> vector<8x128xf32>
    %c0_42 = arith.constant 0 : index
    %c0_43 = arith.constant 0 : index
    %79 = vector.load %arg13[%c0_42, %c0_43] : memref<1x128xf32, #tpu.memory_space<vmem>>, vector<1x128xf32>
    %80 = vector.broadcast %79 : vector<1x128xf32> to vector<8x128xf32>
    %81 = arith.addf %78, %80 : vector<8x128xf32>
    %cst_44 = arith.constant 2.000000e-01 : f32
    %82 = vector.broadcast %cst_44 : f32 to vector<8x128xf32>
    %83 = arith.mulf %82, %81 : vector<8x128xf32>
    %84 = arith.maximumf %81, %83 : vector<8x128xf32>
    %cst_45 = arith.constant dense<0.000000e+00> : vector<128xf32>
    %85 = vector.multi_reduction <add>, %84, %cst_45 [0] : vector<8x128xf32> to vector<128xf32>
    %86 = vector.shape_cast %85 : vector<128xf32> to vector<1x128xf32>
    %cst_46 = arith.constant 8.000000e+00 : f32
    %87 = vector.broadcast %cst_46 : f32 to vector<1x128xf32>
    %88 = arith.divf %86, %87 : vector<1x128xf32>
    %89 = arith.mulf %84, %84 : vector<8x128xf32>
    %cst_47 = arith.constant dense<0.000000e+00> : vector<128xf32>
    %90 = vector.multi_reduction <add>, %89, %cst_47 [0] : vector<8x128xf32> to vector<128xf32>
    %91 = vector.shape_cast %90 : vector<128xf32> to vector<1x128xf32>
    %cst_48 = arith.constant 8.000000e+00 : f32
    %92 = vector.broadcast %cst_48 : f32 to vector<1x128xf32>
    %93 = arith.divf %91, %92 : vector<1x128xf32>
    %94 = arith.mulf %88, %88 : vector<1x128xf32>
    %95 = arith.subf %93, %94 : vector<1x128xf32>
    %cst_49 = arith.constant 0.000000e+00 : f32
    %96 = vector.broadcast %cst_49 : f32 to vector<1x128xf32>
    %97 = arith.maximumf %95, %96 : vector<1x128xf32>
    %c0_50 = arith.constant 0 : index
    %c0_51 = arith.constant 0 : index
    %98 = vector.load %arg14[%c0_50, %c0_51] : memref<1x128xf32, #tpu.memory_space<vmem>>, vector<1x128xf32>
    %cst_52 = arith.constant 9.99999974E-6 : f32
    %99 = vector.broadcast %cst_52 : f32 to vector<1x128xf32>
    %100 = arith.addf %97, %99 : vector<1x128xf32>
    %101 = math.rsqrt %100 : vector<1x128xf32>
    %102 = arith.mulf %98, %101 : vector<1x128xf32>
    %c0_53 = arith.constant 0 : index
    %c0_54 = arith.constant 0 : index
    %103 = vector.load %arg15[%c0_53, %c0_54] : memref<1x128xf32, #tpu.memory_space<vmem>>, vector<1x128xf32>
    %104 = arith.mulf %88, %102 : vector<1x128xf32>
    %105 = arith.subf %103, %104 : vector<1x128xf32>
    %106 = vector.broadcast %102 : vector<1x128xf32> to vector<8x128xf32>
    %107 = arith.mulf %84, %106 : vector<8x128xf32>
    %108 = vector.broadcast %105 : vector<1x128xf32> to vector<8x128xf32>
    %109 = arith.addf %107, %108 : vector<8x128xf32>
    %110 = arith.truncf %109 : vector<8x128xf32> to vector<8x128xbf16>
    %c0_55 = arith.constant 0 : index
    %c0_56 = arith.constant 0 : index
    %111 = vector.load %arg16[%c0_55, %c0_56] : memref<128x128xbf16, #tpu.memory_space<vmem>>, vector<128x128xbf16>
    %cst_57 = arith.constant dense<0.000000e+00> : vector<8x128xf32>
    %112 = tpu.matmul %110, %111, %cst_57 {dimension_numbers = #tpu.dot_dimension_numbers<[1], [0], [0], [1], [0, 0, 1, 1], [], []>} : vector<8x128xbf16>, vector<128x128xbf16>, vector<8x128xf32> -> vector<8x128xf32>
    %c0_58 = arith.constant 0 : index
    %c0_59 = arith.constant 0 : index
    %113 = vector.load %arg17[%c0_58, %c0_59] : memref<1x128xf32, #tpu.memory_space<vmem>>, vector<1x128xf32>
    %114 = vector.broadcast %113 : vector<1x128xf32> to vector<8x128xf32>
    %115 = arith.addf %112, %114 : vector<8x128xf32>
    %c0_60 = arith.constant 0 : index
    %c0_61 = arith.constant 0 : index
    %c0_62 = arith.constant 0 : index
    %116 = vector.load %arg18[%c0_60, %c0_61, %c0_62] : memref<1x8x128xf32, #tpu.memory_space<vmem>>, vector<1x8x128xf32>
    %117 = vector.shape_cast %116 : vector<1x8x128xf32> to vector<8x128xf32>
    %118 = vector.shape_cast %115 : vector<8x128xf32> to vector<1x8x128xf32>
    tpu.vector_store %arg18[%c0_60, %c0_61, %c0_62], %118 {strides = array<i32>} : memref<1x8x128xf32, #tpu.memory_space<vmem>>, vector<1x8x128xf32>,
    return
  }
  func.func @transform_0(%arg0: i32) -> (i32, i32, i32) {
    %c0_i32 = arith.constant 0 : i32
    %c0_i32_0 = arith.constant 0 : i32
    %c0_i32_1 = arith.constant 0 : i32
    return %arg0, %c0_i32, %c0_i32_0 : i32, i32, i32
  }
  func.func @transform_1(%arg0: i32) -> (i32, i32, i32) {
    %c0_i32 = arith.constant 0 : i32
    %c0_i32_0 = arith.constant 0 : i32
    %c0_i32_1 = arith.constant 0 : i32
    return %arg0, %c0_i32, %c0_i32_0 : i32, i32, i32
  }
  func.func @transform_2(%arg0: i32) -> (i32, i32) {
    %c0_i32 = arith.constant 0 : i32
    %c0_i32_0 = arith.constant 0 : i32
    %c0_i32_1 = arith.constant 0 : i32
    return %c0_i32, %c0_i32_0 : i32, i32
  }
  func.func @transform_3(%arg0: i32) -> (i32, i32) {
    %c0_i32 = arith.constant 0 : i32
    %c0_i32_0 = arith.constant 0 : i32
    %c0_i32_1 = arith.constant 0 : i32
    return %c0_i32, %c0_i32_0 : i32, i32
  }
  func.func @transform_4(%arg0: i32) -> (i32, i32) {
    %c0_i32 = arith.constant 0 : i32
    %c0_i32_0 = arith.constant 0 : i32
    %c0_i32_1 = arith.constant 0 : i32
    return %c0_i32, %c0_i32_0 : i32, i32
  }
  func.func @transform_5(%arg0: i32) -> (i32, i32) {
    %c0_i32 = arith.constant 0 : i32
    %c0_i32_0 = arith.constant 0 : i32
    %c0_i32_1 = arith.constant 0 : i32
    return %c0_i32, %c0_i32_0 : i32, i32
  }
  func.func @transform_6(%arg0: i32) -> (i32, i32) {
    %c0_i32 = arith.constant 0 : i32
    %c0_i32_0 = arith.constant 0 : i32
    %c0_i32_1 = arith.constant 0 : i32
    return %c0_i32, %c0_i32_0 : i32, i32
  }
  func.func @transform_7(%arg0: i32) -> (i32, i32) {
    %c0_i32 = arith.constant 0 : i32
    %c0_i32_0 = arith.constant 0 : i32
    %c0_i32_1 = arith.constant 0 : i32
    return %c0_i32, %c0_i32_0 : i32, i32
  }
  func.func @transform_8(%arg0: i32) -> (i32, i32) {
    %c0_i32 = arith.constant 0 : i32
    %c0_i32_0 = arith.constant 0 : i32
    %c0_i32_1 = arith.constant 0 : i32
    return %c0_i32, %c0_i32_0 : i32, i32
  }
  func.func @transform_9(%arg0: i32) -> (i32, i32) {
    %c0_i32 = arith.constant 0 : i32
    %c0_i32_0 = arith.constant 0 : i32
    %c0_i32_1 = arith.constant 0 : i32
    return %c0_i32, %c0_i32_0 : i32, i32
  }
  func.func @transform_10(%arg0: i32) -> (i32, i32) {
    %c0_i32 = arith.constant 0 : i32
    %c0_i32_0 = arith.constant 0 : i32
    %c0_i32_1 = arith.constant 0 : i32
    return %c0_i32, %c0_i32_0 : i32, i32
  }
  func.func @transform_11(%arg0: i32) -> (i32, i32) {
    %c0_i32 = arith.constant 0 : i32
    %c0_i32_0 = arith.constant 0 : i32
    %c0_i32_1 = arith.constant 0 : i32
    return %c0_i32, %c0_i32_0 : i32, i32
  }
  func.func @transform_12(%arg0: i32) -> (i32, i32) {
    %c0_i32 = arith.constant 0 : i32
    %c0_i32_0 = arith.constant 0 : i32
    %c0_i32_1 = arith.constant 0 : i32
    return %c0_i32, %c0_i32_0 : i32, i32
  }
  func.func @transform_13(%arg0: i32) -> (i32, i32) {
    %c0_i32 = arith.constant 0 : i32
    %c0_i32_0 = arith.constant 0 : i32
    %c0_i32_1 = arith.constant 0 : i32
    return %c0_i32, %c0_i32_0 : i32, i32
  }
  func.func @transform_14(%arg0: i32) -> (i32, i32) {
    %c0_i32 = arith.constant 0 : i32
    %c0_i32_0 = arith.constant 0 : i32
    %c0_i32_1 = arith.constant 0 : i32
    return %c0_i32, %c0_i32_0 : i32, i32
  }
  func.func @transform_15(%arg0: i32) -> (i32, i32) {
    %c0_i32 = arith.constant 0 : i32
    %c0_i32_0 = arith.constant 0 : i32
    %c0_i32_1 = arith.constant 0 : i32
    return %c0_i32, %c0_i32_0 : i32, i32
  }
  func.func @transform_16(%arg0: i32) -> (i32, i32) {
    %c0_i32 = arith.constant 0 : i32
    %c0_i32_0 = arith.constant 0 : i32
    %c0_i32_1 = arith.constant 0 : i32
    return %c0_i32, %c0_i32_0 : i32, i32
  }
  func.func @transform_17(%arg0: i32) -> (i32, i32, i32) {
    %c0_i32 = arith.constant 0 : i32
    %c0_i32_0 = arith.constant 0 : i32
    %c0_i32_1 = arith.constant 0 : i32
    return %arg0, %c0_i32, %c0_i32_0 : i32, i32, i32
  }
}

</mosaic_0001>

<llo_original>
// kernel: generator_forward.1
$region0: #{generator_forward.1}
  #allocation0 [shape = 'u32[]', space=smem, size = 0x4, offset = 0x4, fixed_abs, tag = 'smem constant byte address 0x4 - core index']
  #allocation1 [shape = 'u32[72,128]{1,0:T(1,128)}', space=vmem, size = 0x9000, scoped, tag = 'internal scratch']
  %s0 = inlined_call_operand.hbm [shape: f32[4,8,16], index: 0, kind: input, shape index: {}]
  %s1 = inlined_call_operand.hbm [shape: f32[4,8,8], index: 1, kind: input, shape index: {}]
  %s2 = inlined_call_operand.hbm [shape: bf16[16,1152], index: 2, kind: input, shape index: {}]
  %s3 = inlined_call_operand.hbm [shape: bf16[8,1152], index: 3, kind: input, shape index: {}]
  %s4 = inlined_call_operand.hbm [shape: f32[1,1152], index: 4, kind: input, shape index: {}]
  %s5 = inlined_call_operand.hbm [shape: f32[1,1152], index: 5, kind: input, shape index: {}]
  %s6 = inlined_call_operand.hbm [shape: f32[1,1152], index: 6, kind: input, shape index: {}]
  %s7 = inlined_call_operand.hbm [shape: bf16[1152,512], index: 7, kind: input, shape index: {}]
  %s8 = inlined_call_operand.hbm [shape: f32[1,512], index: 8, kind: input, shape index: {}]
  %s9 = inlined_call_operand.hbm [shape: f32[1,512], index: 9, kind: input, shape index: {}]
  %s10 = inlined_call_operand.hbm [shape: f32[1,512], index: 10, kind: input, shape index: {}]
  %s11 = inlined_call_operand.hbm [shape: bf16[512,128], index: 11, kind: input, shape index: {}]
  %s12 = inlined_call_operand.hbm [shape: f32[1,128], index: 12, kind: input, shape index: {}]
  %s13 = inlined_call_operand.hbm [shape: f32[1,128], index: 13, kind: input, shape index: {}]
  %s14 = inlined_call_operand.hbm [shape: f32[1,128], index: 14, kind: input, shape index: {}]
  %s15 = inlined_call_operand.hbm [shape: bf16[128,128], index: 15, kind: input, shape index: {}]
  %s16 = inlined_call_operand.hbm [shape: f32[1,128], index: 16, kind: input, shape index: {}]
  %s17 = inlined_call_operand.hbm [shape: f32[4,8,128], index: 17, kind: output, shape index: {}]
  %s18 = sld [smem:[#allocation0]]
  $region169: #{generator_forward.1} parent=0
    _
  %s20 = ssub.s32 1, %s18
  %s21 = scalar_select 0, %s20, %s18
  $region1: #{generator_forward.1} parent=0
    #allocation2 [shape = 'u8[8192]{0}', space=vmem, size = 0x2000, scoped, tag = 'input window, operand 0']
    #allocation3 [shape = 's32[2]{0}', space=sflag, size = 0x8, scoped, tag = 'scoped memory for generator_forward.1']
    #allocation4 [shape = 's32[2]{0}', space=sflag, size = 0x8, scoped, tag = 'scoped memory for generator_forward.1']
    #allocation5 [shape = 'u8[8192]{0}', space=vmem, size = 0x2000, scoped, tag = 'input window, operand 1']
    #allocation6 [shape = 's32[2]{0}', space=sflag, size = 0x8, scoped, tag = 'scoped memory for generator_forward.1']
    #allocation7 [shape = 'u8[36864]{0}', space=vmem, size = 0x9000, scoped, tag = 'input window, operand 2, single buffered']
    #allocation8 [shape = 'u8[18432]{0}', space=vmem, size = 0x4800, scoped, tag = 'input window, operand 3, single buffered']
    #allocation9 [shape = 's32[1]{0}', space=sflag, size = 0x4, scoped, tag = 'scoped memory for generator_forward.1']
    #allocation10 [shape = 'u8[4608]{0}', space=vmem, size = 0x1400, scoped, tag = 'input window, operand 4, single buffered']
    #allocation11 [shape = 'u8[4608]{0}', space=vmem, size = 0x1400, scoped, tag = 'input window, operand 5, single buffered']
    #allocation12 [shape = 's32[1]{0}', space=sflag, size = 0x4, scoped, tag = 'scoped memory for generator_forward.1']
    #allocation13 [shape = 'u8[4608]{0}', space=vmem, size = 0x1400, scoped, tag = 'input window, operand 6, single buffered']
    #allocation14 [shape = 'u8[1179648]{0}', space=vmem, size = 0x120000, scoped, tag = 'input window, operand 7, single buffered']
    #allocation15 [shape = 's32[1]{0}', space=sflag, size = 0x4, scoped, tag = 'scoped memory for generator_forward.1']
    #allocation16 [shape = 'u8[2048]{0}', space=vmem, size = 0x800, scoped, tag = 'input window, operand 8, single buffered']
    #allocation17 [shape = 'u8[2048]{0}', space=vmem, size = 0x800, scoped, tag = 'input window, operand 9, single buffered']
    #allocation18 [shape = 's32[1]{0}', space=sflag, size = 0x4, scoped, tag = 'scoped memory for generator_forward.1']
    #allocation19 [shape = 'u8[2048]{0}', space=vmem, size = 0x800, scoped, tag = 'input window, operand 10, single buffered']
    #allocation20 [shape = 'u8[131072]{0}', space=vmem, size = 0x20000, scoped, tag = 'input window, operand 11, single buffered']
    #allocation21 [shape = 's32[1]{0}', space=sflag, size = 0x4, scoped, tag = 'scoped memory for generator_forward.1']
    #allocation22 [shape = 'u8[512]{0}', space=vmem, size = 0x400, scoped, tag = 'input window, operand 12, single buffered']
    #allocation23 [shape = 'u8[512]{0}', space=vmem, size = 0x400, scoped, tag = 'input window, operand 13, single buffered']
    #allocation24 [shape = 's32[1]{0}', space=sflag, size = 0x4, scoped, tag = 'scoped memory for generator_forward.1']
    #allocation25 [shape = 'u8[512]{0}', space=vmem, size = 0x400, scoped, tag = 'input window, operand 14, single buffered']
    #allocation26 [shape = 'u8[32768]{0}', space=vmem, size = 0x8000, scoped, tag = 'input window, operand 15, single buffered']
    #allocation27 [shape = 's32[1]{0}', space=sflag, size = 0x4, scoped, tag = 'scoped memory for generator_forward.1']
    #allocation28 [shape = 'u8[512]{0}', space=vmem, size = 0x400, scoped, tag = 'input window, operand 16, single buffered']
    #allocation29 [shape = 'u8[8192]{0}', space=vmem, size = 0x2000, scoped, tag = 'output window, operand 0']
    %22 = vsyncpa [#allocation3], 0
    %s23 = scalar_lea.sflag [#allocation3], 1
    %24 = vsyncpa %s23, 0
    %25 = vsyncpa [#allocation6], 0
    %s26 = scalar_lea.sflag [#allocation6], 1
    %27 = vsyncpa %s26, 0
    %28 = vsyncpa [#allocation9], 0
    %29 = vsyncpa [#allocation12], 0
    %30 = vsyncpa [#allocation15], 0
    %31 = vsyncpa [#allocation18], 0
    %32 = vsyncpa [#allocation21], 0
    %33 = vsyncpa [#allocation24], 0
    %34 = vsyncpa [#allocation27], 0
    %35 = vsyncpa [#allocation4], 0
    %s36 = scalar_lea.sflag [#allocation4], 1
    %37 = vsyncpa %s36, 0
    loop: start=0, step=1, limit=6
    $region2: #{generator_forward.1} parent=1 // loop_pre_header
      _
    $region3: #{generator_forward.1} parent=1 // loop_header
      %s39 = sphi 0, %s43
      %p40 = scmp.ge.s32.totalorder %s39, 6
      %s49 = sphi 0, %s51
      %s52 = sphi 0, %s49
      %s53 = sphi 0, %s52
      %s69 = sphi 0, %s53
      %s75 = sphi 0, %s77
      %s78 = sphi 0, %s75
      %s79 = sphi 0, %s78
      %s95 = sphi 0, %s79
      %s99 = sphi 0, %s99
      %s101 = sphi 0, %s99
      %s102 = sphi 0, %s101
      %s116 = sphi 0, %s102
      %s120 = sphi 0, %s120
      %s122 = sphi 0, %s120
      %s123 = sphi 0, %s122
      %s137 = sphi 0, %s123
      %s141 = sphi 0, %s141
      %s143 = sphi 0, %s141
      %s144 = sphi 0, %s143
      %s158 = sphi 0, %s144
      %s162 = sphi 0, %s162
      %s164 = sphi 0, %s162
      %s165 = sphi 0, %s164
      %s179 = sphi 0, %s165
      %s183 = sphi 0, %s183
      %s185 = sphi 0, %s183
      %s186 = sphi 0, %s185
      %s200 = sphi 0, %s186
      %s204 = sphi 0, %s204
      %s206 = sphi 0, %s204
      %s207 = sphi 0, %s206
      %s221 = sphi 0, %s207
      %s225 = sphi 0, %s225
      %s227 = sphi 0, %s225
      %s228 = sphi 0, %s227
      %s242 = sphi 0, %s228
      %s246 = sphi 0, %s246
      %s248 = sphi 0, %s246
      %s249 = sphi 0, %s248
      %s263 = sphi 0, %s249
      %s267 = sphi 0, %s267
      %s269 = sphi 0, %s267
      %s270 = sphi 0, %s269
      %s284 = sphi 0, %s270
      %s288 = sphi 0, %s288
      %s290 = sphi 0, %s288
      %s291 = sphi 0, %s290
      %s305 = sphi 0, %s291
      %s309 = sphi 0, %s309
      %s311 = sphi 0, %s309
      %s312 = sphi 0, %s311
      %s326 = sphi 0, %s312
      %s330 = sphi 0, %s330
      %s332 = sphi 0, %s330
      %s333 = sphi 0, %s332
      %s347 = sphi 0, %s333
      %s351 = sphi 0, %s351
      %s353 = sphi 0, %s351
      %s354 = sphi 0, %s353
      %s368 = sphi 0, %s354
      %s372 = sphi 0, %s372
      %s374 = sphi 0, %s372
      %s375 = sphi 0, %s374
      %s389 = sphi 0, %s375
      %s393 = sphi 0, %s393
      %s395 = sphi 0, %s393
      %s396 = sphi 0, %s395
      %s410 = sphi 0, %s396
      %s416 = sphi 0, %s418
      %s419 = sphi 0, %s416
      %s420 = sphi 0, %s419
      %s436 = sphi 0, %s420
    $region4: #{generator_forward.1} parent=1 // loop_header_branch
      %42 = sbr.rel (%p40) target = $region8
    $region5: #{generator_forward.1} parent=1 // loop_body
      %s44 = ssub.s32 %s39, 1
      %s45 = ssub.s32 %s39, 2
      %s46 = sadd.s32 %s39, 1
      %s47 = ssub.s32 %s39, %s46
      %p48 = scmp.eq.s32.totalorder %s47, 0
      %s50 = sadd.s32 %s49, 1
      %s51 = scalar_select %p48, %s49, %s50
      %p54 = pneg %p48
      %p55 = scmp.eq.s32.totalorder %s39, 3
      %p56 = por %p54, %p55
      %p57 = scmp.ne.s32.totalorder %s49, %s52
      %p58 = scmp.eq.s32.totalorder %s39, 0
      %p59 = por %p57, %p58
      %p60 = scmp.ne.s32.totalorder %s49, %s52
      %p61 = scmp.eq.s32.totalorder %s44, 3
      %p62 = por %p60, %p61
      %p63 = scmp.ne.s32.totalorder %s52, %s53
      %p64 = scmp.eq.s32.totalorder %s44, 0
      %p65 = por %p63, %p64
      %p66 = scmp.ne.s32.totalorder %s52, %s53
      %p67 = scmp.eq.s32.totalorder %s45, 3
      %p68 = por %p66, %p67
      %p70 = scmp.ne.s32.totalorder %s53, %s69
      %p71 = scmp.eq.s32.totalorder %s45, 0
      %p72 = por %p70, %p71
      %s73 = ssub.s32 %s39, %s46
      %p74 = scmp.eq.s32.totalorder %s73, 0
      %s76 = sadd.s32 %s75, 1
      %s77 = scalar_select %p74, %s75, %s76
      %p80 = pneg %p74
      %p81 = scmp.eq.s32.totalorder %s39, 3
      %p82 = por %p80, %p81
      %p83 = scmp.ne.s32.totalorder %s75, %s78
      %p84 = scmp.eq.s32.totalorder %s39, 0
      %p85 = por %p83, %p84
      %p86 = scmp.ne.s32.totalorder %s75, %s78
      %p87 = scmp.eq.s32.totalorder %s44, 3
      %p88 = por %p86, %p87
      %p89 = scmp.ne.s32.totalorder %s78, %s79
      %p90 = scmp.eq.s32.totalorder %s44, 0
      %p91 = por %p89, %p90
      %p92 = scmp.ne.s32.totalorder %s78, %s79
      %p93 = scmp.eq.s32.totalorder %s45, 3
      %p94 = por %p92, %p93
      %p96 = scmp.ne.s32.totalorder %s79, %s95
      %p97 = scmp.eq.s32.totalorder %s45, 0
      %p98 = por %p96, %p97
      %s100 = sadd.s32 %s99, 1
      %p103 = scmp.eq.s32.totalorder %s39, 3
      %p104 = scmp.ne.s32.totalorder %s99, %s101
      %p105 = scmp.eq.s32.totalorder %s39, 0
      %p106 = por %p104, %p105
      %p107 = scmp.ne.s32.totalorder %s99, %s101
      %p108 = scmp.eq.s32.totalorder %s44, 3
      %p109 = por %p107, %p108
      %p110 = scmp.ne.s32.totalorder %s101, %s102
      %p111 = scmp.eq.s32.totalorder %s44, 0
      %p112 = por %p110, %p111
      %p113 = scmp.ne.s32.totalorder %s101, %s102
      %p114 = scmp.eq.s32.totalorder %s45, 3
      %p115 = por %p113, %p114
      %p117 = scmp.ne.s32.totalorder %s102, %s116
      %p118 = scmp.eq.s32.totalorder %s45, 0
      %p119 = por %p117, %p118
      %s121 = sadd.s32 %s120, 1
      %p124 = scmp.eq.s32.totalorder %s39, 3
      %p125 = scmp.ne.s32.totalorder %s120, %s122
      %p126 = scmp.eq.s32.totalorder %s39, 0
      %p127 = por %p125, %p126
      %p128 = scmp.ne.s32.totalorder %s120, %s122
      %p129 = scmp.eq.s32.totalorder %s44, 3
      %p130 = por %p128, %p129
      %p131 = scmp.ne.s32.totalorder %s122, %s123
      %p132 = scmp.eq.s32.totalorder %s44, 0
      %p133 = por %p131, %p132
      %p134 = scmp.ne.s32.totalorder %s122, %s123
      %p135 = scmp.eq.s32.totalorder %s45, 3
      %p136 = por %p134, %p135
      %p138 = scmp.ne.s32.totalorder %s123, %s137
      %p139 = scmp.eq.s32.totalorder %s45, 0
      %p140 = por %p138, %p139
      %s142 = sadd.s32 %s141, 1
      %p145 = scmp.eq.s32.totalorder %s39, 3
      %p146 = scmp.ne.s32.totalorder %s141, %s143
      %p147 = scmp.eq.s32.totalorder %s39, 0
      %p148 = por %p146, %p147
      %p149 = scmp.ne.s32.totalorder %s141, %s143
      %p150 = scmp.eq.s32.totalorder %s44, 3
      %p151 = por %p149, %p150
      %p152 = scmp.ne.s32.totalorder %s143, %s144
      %p153 = scmp.eq.s32.totalorder %s44, 0
      %p154 = por %p152, %p153
      %p155 = scmp.ne.s32.totalorder %s143, %s144
      %p156 = scmp.eq.s32.totalorder %s45, 3
      %p157 = por %p155, %p156
      %p159 = scmp.ne.s32.totalorder %s144, %s158
      %p160 = scmp.eq.s32.totalorder %s45, 0
      %p161 = por %p159, %p160
      %s163 = sadd.s32 %s162, 1
      %p166 = scmp.eq.s32.totalorder %s39, 3
      %p167 = scmp.ne.s32.totalorder %s162, %s164
      %p168 = scmp.eq.s32.totalorder %s39, 0
      %p169 = por %p167, %p168
      %p170 = scmp.ne.s32.totalorder %s162, %s164
      %p171 = scmp.eq.s32.totalorder %s44, 3
      %p172 = por %p170, %p171
      %p173 = scmp.ne.s32.totalorder %s164, %s165
      %p174 = scmp.eq.s32.totalorder %s44, 0
      %p175 = por %p173, %p174
      %p176 = scmp.ne.s32.totalorder %s164, %s165
      %p177 = scmp.eq.s32.totalorder %s45, 3
      %p178 = por %p176, %p177
      %p180 = scmp.ne.s32.totalorder %s165, %s179
      %p181 = scmp.eq.s32.totalorder %s45, 0
      %p182 = por %p180, %p181
      %s184 = sadd.s32 %s183, 1
      %p187 = scmp.eq.s32.totalorder %s39, 3
      %p188 = scmp.ne.s32.totalorder %s183, %s185
      %p189 = scmp.eq.s32.totalorder %s39, 0
      %p190 = por %p188, %p189
      %p191 = scmp.ne.s32.totalorder %s183, %s185
      %p192 = scmp.eq.s32.totalorder %s44, 3
      %p193 = por %p191, %p192
      %p194 = scmp.ne.s32.totalorder %s185, %s186
      %p195 = scmp.eq.s32.totalorder %s44, 0
      %p196 = por %p194, %p195
      %p197 = scmp.ne.s32.totalorder %s185, %s186
      %p198 = scmp.eq.s32.totalorder %s45, 3
      %p199 = por %p197, %p198
      %p201 = scmp.ne.s32.totalorder %s186, %s200
      %p202 = scmp.eq.s32.totalorder %s45, 0
      %p203 = por %p201, %p202
      %s205 = sadd.s32 %s204, 1
      %p208 = scmp.eq.s32.totalorder %s39, 3
      %p209 = scmp.ne.s32.totalorder %s204, %s206
      %p210 = scmp.eq.s32.totalorder %s39, 0
      %p211 = por %p209, %p210
      %p212 = scmp.ne.s32.totalorder %s204, %s206
      %p213 = scmp.eq.s32.totalorder %s44, 3
      %p214 = por %p212, %p213
      %p215 = scmp.ne.s32.totalorder %s206, %s207
      %p216 = scmp.eq.s32.totalorder %s44, 0
      %p217 = por %p215, %p216
      %p218 = scmp.ne.s32.totalorder %s206, %s207
      %p219 = scmp.eq.s32.totalorder %s45, 3
      %p220 = por %p218, %p219
      %p222 = scmp.ne.s32.totalorder %s207, %s221
      %p223 = scmp.eq.s32.totalorder %s45, 0
      %p224 = por %p222, %p223
      %s226 = sadd.s32 %s225, 1
      %p229 = scmp.eq.s32.totalorder %s39, 3
      %p230 = scmp.ne.s32.totalorder %s225, %s227
      %p231 = scmp.eq.s32.totalorder %s39, 0
      %p232 = por %p230, %p231
      %p233 = scmp.ne.s32.totalorder %s225, %s227
      %p234 = scmp.eq.s32.totalorder %s44, 3
      %p235 = por %p233, %p234
      %p236 = scmp.ne.s32.totalorder %s227, %s228
      %p237 = scmp.eq.s32.totalorder %s44, 0
      %p238 = por %p236, %p237
      %p239 = scmp.ne.s32.totalorder %s227, %s228
      %p240 = scmp.eq.s32.totalorder %s45, 3
      %p241 = por %p239, %p240
      %p243 = scmp.ne.s32.totalorder %s228, %s242
      %p244 = scmp.eq.s32.totalorder %s45, 0
      %p245 = por %p243, %p244
      %s247 = sadd.s32 %s246, 1
      %p250 = scmp.eq.s32.totalorder %s39, 3
      %p251 = scmp.ne.s32.totalorder %s246, %s248
      %p252 = scmp.eq.s32.totalorder %s39, 0
      %p253 = por %p251, %p252
      %p254 = scmp.ne.s32.totalorder %s246, %s248
      %p255 = scmp.eq.s32.totalorder %s44, 3
      %p256 = por %p254, %p255
      %p257 = scmp.ne.s32.totalorder %s248, %s249
      %p258 = scmp.eq.s32.totalorder %s44, 0
      %p259 = por %p257, %p258
      %p260 = scmp.ne.s32.totalorder %s248, %s249
      %p261 = scmp.eq.s32.totalorder %s45, 3
      %p262 = por %p260, %p261
      %p264 = scmp.ne.s32.totalorder %s249, %s263
      %p265 = scmp.eq.s32.totalorder %s45, 0
      %p266 = por %p264, %p265
      %s268 = sadd.s32 %s267, 1
      %p271 = scmp.eq.s32.totalorder %s39, 3
      %p272 = scmp.ne.s32.totalorder %s267, %s269
      %p273 = scmp.eq.s32.totalorder %s39, 0
      %p274 = por %p272, %p273
      %p275 = scmp.ne.s32.totalorder %s267, %s269
      %p276 = scmp.eq.s32.totalorder %s44, 3
      %p277 = por %p275, %p276
      %p278 = scmp.ne.s32.totalorder %s269, %s270
      %p279 = scmp.eq.s32.totalorder %s44, 0
      %p280 = por %p278, %p279
      %p281 = scmp.ne.s32.totalorder %s269, %s270
      %p282 = scmp.eq.s32.totalorder %s45, 3
      %p283 = por %p281, %p282
      %p285 = scmp.ne.s32.totalorder %s270, %s284
      %p286 = scmp.eq.s32.totalorder %s45, 0
      %p287 = por %p285, %p286
      %s289 = sadd.s32 %s288, 1
      %p292 = scmp.eq.s32.totalorder %s39, 3
      %p293 = scmp.ne.s32.totalorder %s288, %s290
      %p294 = scmp.eq.s32.totalorder %s39, 0
      %p295 = por %p293, %p294
      %p296 = scmp.ne.s32.totalorder %s288, %s290
      %p297 = scmp.eq.s32.totalorder %s44, 3
      %p298 = por %p296, %p297
      %p299 = scmp.ne.s32.totalorder %s290, %s291
      %p300 = scmp.eq.s32.totalorder %s44, 0
      %p301 = por %p299, %p300
      %p302 = scmp.ne.s32.totalorder %s290, %s291
      %p303 = scmp.eq.s32.totalorder %s45, 3
      %p304 = por %p302, %p303
      %p306 = scmp.ne.s32.totalorder %s291, %s305
      %p307 = scmp.eq.s32.totalorder %s45, 0
      %p308 = por %p306, %p307
      %s310 = sadd.s32 %s309, 1
      %p313 = scmp.eq.s32.totalorder %s39, 3
      %p314 = scmp.ne.s32.totalorder %s309, %s311
      %p315 = scmp.eq.s32.totalorder %s39, 0
      %p316 = por %p314, %p315
      %p317 = scmp.ne.s32.totalorder %s309, %s311
      %p318 = scmp.eq.s32.totalorder %s44, 3
      %p319 = por %p317, %p318
      %p320 = scmp.ne.s32.totalorder %s311, %s312
      %p321 = scmp.eq.s32.totalorder %s44, 0
      %p322 = por %p320, %p321
      %p323 = scmp.ne.s32.totalorder %s311, %s312
      %p324 = scmp.eq.s32.totalorder %s45, 3
      %p325 = por %p323, %p324
      %p327 = scmp.ne.s32.totalorder %s312, %s326
      %p328 = scmp.eq.s32.totalorder %s45, 0
      %p329 = por %p327, %p328
      %s331 = sadd.s32 %s330, 1
      %p334 = scmp.eq.s32.totalorder %s39, 3
      %p335 = scmp.ne.s32.totalorder %s330, %s332
      %p336 = scmp.eq.s32.totalorder %s39, 0
      %p337 = por %p335, %p336
      %p338 = scmp.ne.s32.totalorder %s330, %s332
      %p339 = scmp.eq.s32.totalorder %s44, 3
      %p340 = por %p338, %p339
      %p341 = scmp.ne.s32.totalorder %s332, %s333
      %p342 = scmp.eq.s32.totalorder %s44, 0
      %p343 = por %p341, %p342
      %p344 = scmp.ne.s32.totalorder %s332, %s333
      %p345 = scmp.eq.s32.totalorder %s45, 3
      %p346 = por %p344, %p345
      %p348 = scmp.ne.s32.totalorder %s333, %s347
      %p349 = scmp.eq.s32.totalorder %s45, 0
      %p350 = por %p348, %p349
      %s352 = sadd.s32 %s351, 1
      %p355 = scmp.eq.s32.totalorder %s39, 3
      %p356 = scmp.ne.s32.totalorder %s351, %s353
      %p357 = scmp.eq.s32.totalorder %s39, 0
      %p358 = por %p356, %p357
      %p359 = scmp.ne.s32.totalorder %s351, %s353
      %p360 = scmp.eq.s32.totalorder %s44, 3
      %p361 = por %p359, %p360
      %p362 = scmp.ne.s32.totalorder %s353, %s354
      %p363 = scmp.eq.s32.totalorder %s44, 0
      %p364 = por %p362, %p363
      %p365 = scmp.ne.s32.totalorder %s353, %s354
      %p366 = scmp.eq.s32.totalorder %s45, 3
      %p367 = por %p365, %p366
      %p369 = scmp.ne.s32.totalorder %s354, %s368
      %p370 = scmp.eq.s32.totalorder %s45, 0
      %p371 = por %p369, %p370
      %s373 = sadd.s32 %s372, 1
      %p376 = scmp.eq.s32.totalorder %s39, 3
      %p377 = scmp.ne.s32.totalorder %s372, %s374
      %p378 = scmp.eq.s32.totalorder %s39, 0
      %p379 = por %p377, %p378
      %p380 = scmp.ne.s32.totalorder %s372, %s374
      %p381 = scmp.eq.s32.totalorder %s44, 3
      %p382 = por %p380, %p381
      %p383 = scmp.ne.s32.totalorder %s374, %s375
      %p384 = scmp.eq.s32.totalorder %s44, 0
      %p385 = por %p383, %p384
      %p386 = scmp.ne.s32.totalorder %s374, %s375
      %p387 = scmp.eq.s32.totalorder %s45, 3
      %p388 = por %p386, %p387
      %p390 = scmp.ne.s32.totalorder %s375, %s389
      %p391 = scmp.eq.s32.totalorder %s45, 0
      %p392 = por %p390, %p391
      %s394 = sadd.s32 %s393, 1
      %p397 = scmp.eq.s32.totalorder %s39, 3
      %p398 = scmp.ne.s32.totalorder %s393, %s395
      %p399 = scmp.eq.s32.totalorder %s39, 0
      %p400 = por %p398, %p399
      %p401 = scmp.ne.s32.totalorder %s393, %s395
      %p402 = scmp.eq.s32.totalorder %s44, 3
      %p403 = por %p401, %p402
      %p404 = scmp.ne.s32.totalorder %s395, %s396
      %p405 = scmp.eq.s32.totalorder %s44, 0
      %p406 = por %p404, %p405
      %p407 = scmp.ne.s32.totalorder %s395, %s396
      %p408 = scmp.eq.s32.totalorder %s45, 3
      %p409 = por %p407, %p408
      %p411 = scmp.ne.s32.totalorder %s396, %s410
      %p412 = scmp.eq.s32.totalorder %s45, 0
      %p413 = por %p411, %p412
      %s414 = ssub.s32 %s39, %s46
      %p415 = scmp.eq.s32.totalorder %s414, 0
      %s417 = sadd.s32 %s416, 1
      %s418 = scalar_select %p415, %s416, %s417
      %p421 = pneg %p415
      %p422 = scmp.eq.s32.totalorder %s39, 3
      %p423 = por %p421, %p422
      %p424 = scmp.ne.s32.totalorder %s416, %s419
      %p425 = scmp.eq.s32.totalorder %s39, 0
      %p426 = por %p424, %p425
      %p427 = scmp.ne.s32.totalorder %s416, %s419
      %p428 = scmp.eq.s32.totalorder %s44, 3
      %p429 = por %p427, %p428
      %p430 = scmp.ne.s32.totalorder %s419, %s420
      %p431 = scmp.eq.s32.totalorder %s44, 0
      %p432 = por %p430, %p431
      %p433 = scmp.ne.s32.totalorder %s419, %s420
      %p434 = scmp.eq.s32.totalorder %s45, 3
      %p435 = por %p433, %p434
      %p437 = scmp.ne.s32.totalorder %s420, %s436
      %p438 = scmp.eq.s32.totalorder %s45, 0
      %p439 = por %p437, %p438
      %p440 = scmp.le.s32.totalorder 1, %s39
      %p441 = scmp.lt.s32.totalorder %s39, 5
      %p442 = pnand %p440, %p441
      %p443 = pneg %p442
      // Predicated region
      $region9: #{generator_forward.1} parent=5 // pred_check
        _
      $region10: #{generator_forward.1} parent=5 // pred_check_branch
        %445 = sbr.rel (%p442) target = $region12
      $region11: #{generator_forward.1} parent=5 // pred_region
        %s446 = ssub.s32 %s39, 1
        // Predicated region
        $region13: #{generator_forward.1} parent=11 // pred_check
          %p447 = pneg %p112
        $region14: #{generator_forward.1} parent=11 // pred_check_branch
          %449 = sbr.rel (%p447) target = $region16
        $region15: #{generator_forward.1} parent=11 // pred_region
          %451 = vsyncadd [#allocation6], 0
          %s452 = sshll.u32 %s2, 4
          %s453 = int_to_ptr.hbm [resolvable:$true] %s452
          %s454 = sshll.u32 [#allocation7], 4
          %s455 = int_to_ptr.vmem [resolvable:$true] %s454
          %460 = dma.hbm_to_vmem [thread:$0]  %s453, 1152, %s455, [#allocation6], 576, 576, 36
        $region16: #{generator_forward.1} parent=11 // pred_fallthru
          _
        // Predicated region
        $region17: #{generator_forward.1} parent=11 // pred_check
          %p461 = pneg %p133
        $region18: #{generator_forward.1} parent=11 // pred_check_branch
          %463 = sbr.rel (%p461) target = $region20
        $region19: #{generator_forward.1} parent=11 // pred_region
          %465 = vsyncadd [#allocation9], 0
          %s467 = sshll.u32 %s3, 4
          %s468 = int_to_ptr.hbm [resolvable:$true] %s467
          %s469 = sshll.u32 [#allocation8], 4
          %s470 = int_to_ptr.vmem [resolvable:$true] %s469
          %472 = dma.hbm_to_vmem [thread:$0]  %s468, 576, %s470, [#allocation9]
        $region20: #{generator_forward.1} parent=11 // pred_fallthru
          _
        // Predicated region
        $region21: #{generator_forward.1} parent=11 // pred_check
          %p473 = pneg %p154
        $region22: #{generator_forward.1} parent=11 // pred_check_branch
          %475 = sbr.rel (%p473) target = $region24
        $region23: #{generator_forward.1} parent=11 // pred_region
          %477 = vsyncadd [#allocation9], 0
          %s479 = sshll.u32 %s4, 4
          %s480 = int_to_ptr.hbm [resolvable:$true] %s479
          %s481 = sshll.u32 [#allocation10], 4
          %s482 = int_to_ptr.vmem [resolvable:$true] %s481
          %484 = dma.hbm_to_vmem [thread:$0]  %s480, 144, %s482, [#allocation9]
        $region24: #{generator_forward.1} parent=11 // pred_fallthru
          _
        // Predicated region
        $region25: #{generator_forward.1} parent=11 // pred_check
          %p485 = pneg %p175
        $region26: #{generator_forward.1} parent=11 // pred_check_branch
          %487 = sbr.rel (%p485) target = $region28
        $region27: #{generator_forward.1} parent=11 // pred_region
          %489 = vsyncadd [#allocation12], 0
          %s491 = sshll.u32 %s5, 4
          %s492 = int_to_ptr.hbm [resolvable:$true] %s491
          %s493 = sshll.u32 [#allocation11], 4
          %s494 = int_to_ptr.vmem [resolvable:$true] %s493
          %496 = dma.hbm_to_vmem [thread:$0]  %s492, 144, %s494, [#allocation12]
        $region28: #{generator_forward.1} parent=11 // pred_fallthru
          _
        // Predicated region
        $region29: #{generator_forward.1} parent=11 // pred_check
          %p497 = pneg %p196
        $region30: #{generator_forward.1} parent=11 // pred_check_branch
          %499 = sbr.rel (%p497) target = $region32
        $region31: #{generator_forward.1} parent=11 // pred_region
          %501 = vsyncadd [#allocation12], 0
          %s503 = sshll.u32 %s6, 4
          %s504 = int_to_ptr.hbm [resolvable:$true] %s503
          %s505 = sshll.u32 [#allocation13], 4
          %s506 = int_to_ptr.vmem [resolvable:$true] %s505
          %508 = dma.hbm_to_vmem [thread:$0]  %s504, 144, %s506, [#allocation12]
        $region32: #{generator_forward.1} parent=11 // pred_fallthru
          _
        // Predicated region
        $region33: #{generator_forward.1} parent=11 // pred_check
          %p509 = pneg %p217
        $region34: #{generator_forward.1} parent=11 // pred_check_branch
          %511 = sbr.rel (%p509) target = $region36
        $region35: #{generator_forward.1} parent=11 // pred_region
          %513 = vsyncadd [#allocation15], 0
          %s514 = sshll.u32 %s7, 4
          %s515 = int_to_ptr.hbm [resolvable:$true] %s514
          %s516 = sshll.u32 [#allocation14], 4
          %s517 = int_to_ptr.vmem [resolvable:$true] %s516
          %522 = dma.hbm_to_vmem [thread:$0]  %s515, 36864, %s517, [#allocation15], 256, 256, 16
        $region36: #{generator_forward.1} parent=11 // pred_fallthru
          _
        // Predicated region
        $region37: #{generator_forward.1} parent=11 // pred_check
          %p523 = pneg %p238
        $region38: #{generator_forward.1} parent=11 // pred_check_branch
          %525 = sbr.rel (%p523) target = $region40
        $region39: #{generator_forward.1} parent=11 // pred_region
          %527 = vsyncadd [#allocation15], 0
          %s529 = sshll.u32 %s8, 4
          %s530 = int_to_ptr.hbm [resolvable:$true] %s529
          %s531 = sshll.u32 [#allocation16], 4
          %s532 = int_to_ptr.vmem [resolvable:$true] %s531
          %534 = dma.hbm_to_vmem [thread:$0]  %s530, 64, %s532, [#allocation15]
        $region40: #{generator_forward.1} parent=11 // pred_fallthru
          _
        // Predicated region
        $region41: #{generator_forward.1} parent=11 // pred_check
          %p535 = pneg %p259
        $region42: #{generator_forward.1} parent=11 // pred_check_branch
          %537 = sbr.rel (%p535) target = $region44
        $region43: #{generator_forward.1} parent=11 // pred_region
          %539 = vsyncadd [#allocation18], 0
          %s541 = sshll.u32 %s9, 4
          %s542 = int_to_ptr.hbm [resolvable:$true] %s541
          %s543 = sshll.u32 [#allocation17], 4
          %s544 = int_to_ptr.vmem [resolvable:$true] %s543
          %546 = dma.hbm_to_vmem [thread:$0]  %s542, 64, %s544, [#allocation18]
        $region44: #{generator_forward.1} parent=11 // pred_fallthru
          _
        // Predicated region
        $region45: #{generator_forward.1} parent=11 // pred_check
          %p547 = pneg %p280
        $region46: #{generator_forward.1} parent=11 // pred_check_branch
          %549 = sbr.rel (%p547) target = $region48
        $region47: #{generator_forward.1} parent=11 // pred_region
          %551 = vsyncadd [#allocation18], 0
          %s553 = sshll.u32 %s10, 4
          %s554 = int_to_ptr.hbm [resolvable:$true] %s553
          %s555 = sshll.u32 [#allocation19], 4
          %s556 = int_to_ptr.vmem [resolvable:$true] %s555
          %558 = dma.hbm_to_vmem [thread:$0]  %s554, 64, %s556, [#allocation18]
        $region48: #{generator_forward.1} parent=11 // pred_fallthru
          _
        // Predicated region
        $region49: #{generator_forward.1} parent=11 // pred_check
          %p559 = pneg %p301
        $region50: #{generator_forward.1} parent=11 // pred_check_branch
          %561 = sbr.rel (%p559) target = $region52
        $region51: #{generator_forward.1} parent=11 // pred_region
          %563 = vsyncadd [#allocation21], 0
          %s564 = sshll.u32 %s11, 4
          %s565 = int_to_ptr.hbm [resolvable:$true] %s564
          %s566 = sshll.u32 [#allocation20], 4
          %s567 = int_to_ptr.vmem [resolvable:$true] %s566
          %572 = dma.hbm_to_vmem [thread:$0]  %s565, 4096, %s567, [#allocation21], 64, 64, 4
        $region52: #{generator_forward.1} parent=11 // pred_fallthru
          _
        // Predicated region
        $region53: #{generator_forward.1} parent=11 // pred_check
          %p573 = pneg %p322
        $region54: #{generator_forward.1} parent=11 // pred_check_branch
          %575 = sbr.rel (%p573) target = $region56
        $region55: #{generator_forward.1} parent=11 // pred_region
          %577 = vsyncadd [#allocation21], 0
          %s579 = sshll.u32 %s12, 4
          %s580 = int_to_ptr.hbm [resolvable:$true] %s579
          %s581 = sshll.u32 [#allocation22], 4
          %s582 = int_to_ptr.vmem [resolvable:$true] %s581
          %584 = dma.hbm_to_vmem [thread:$0]  %s580, 16, %s582, [#allocation21]
        $region56: #{generator_forward.1} parent=11 // pred_fallthru
          _
        // Predicated region
        $region57: #{generator_forward.1} parent=11 // pred_check
          %p585 = pneg %p343
        $region58: #{generator_forward.1} parent=11 // pred_check_branch
          %587 = sbr.rel (%p585) target = $region60
        $region59: #{generator_forward.1} parent=11 // pred_region
          %589 = vsyncadd [#allocation24], 0
          %s591 = sshll.u32 %s13, 4
          %s592 = int_to_ptr.hbm [resolvable:$true] %s591
          %s593 = sshll.u32 [#allocation23], 4
          %s594 = int_to_ptr.vmem [resolvable:$true] %s593
          %596 = dma.hbm_to_vmem [thread:$0]  %s592, 16, %s594, [#allocation24]
        $region60: #{generator_forward.1} parent=11 // pred_fallthru
          _
        // Predicated region
        $region61: #{generator_forward.1} parent=11 // pred_check
          %p597 = pneg %p364
        $region62: #{generator_forward.1} parent=11 // pred_check_branch
          %599 = sbr.rel (%p597) target = $region64
        $region63: #{generator_forward.1} parent=11 // pred_region
          %601 = vsyncadd [#allocation24], 0
          %s603 = sshll.u32 %s14, 4
          %s604 = int_to_ptr.hbm [resolvable:$true] %s603
          %s605 = sshll.u32 [#allocation25], 4
          %s606 = int_to_ptr.vmem [resolvable:$true] %s605
          %608 = dma.hbm_to_vmem [thread:$0]  %s604, 16, %s606, [#allocation24]
        $region64: #{generator_forward.1} parent=11 // pred_fallthru
          _
        // Predicated region
        $region65: #{generator_forward.1} parent=11 // pred_check
          %p609 = pneg %p385
        $region66: #{generator_forward.1} parent=11 // pred_check_branch
          %611 = sbr.rel (%p609) target = $region68
        $region67: #{generator_forward.1} parent=11 // pred_region
          %613 = vsyncadd [#allocation27], 0
          %s614 = sshll.u32 %s15, 4
          %s615 = int_to_ptr.hbm [resolvable:$true] %s614
          %s616 = sshll.u32 [#allocation26], 4
          %s617 = int_to_ptr.vmem [resolvable:$true] %s616
          %622 = dma.hbm_to_vmem [thread:$0]  %s615, 1024, %s617, [#allocation27], 64, 64, 4
        $region68: #{generator_forward.1} parent=11 // pred_fallthru
          _
        // Predicated region
        $region69: #{generator_forward.1} parent=11 // pred_check
          %p623 = pneg %p406
        $region70: #{generator_forward.1} parent=11 // pred_check_branch
          %625 = sbr.rel (%p623) target = $region72
        $region71: #{generator_forward.1} parent=11 // pred_region
          %627 = vsyncadd [#allocation27], 0
          %s629 = sshll.u32 %s16, 4
          %s630 = int_to_ptr.hbm [resolvable:$true] %s629
          %s631 = sshll.u32 [#allocation28], 4
          %s632 = int_to_ptr.vmem [resolvable:$true] %s631
          %634 = dma.hbm_to_vmem [thread:$0]  %s630, 16, %s632, [#allocation27]
        $region72: #{generator_forward.1} parent=11 // pred_fallthru
          _
      $region12: #{generator_forward.1} parent=5 // pred_fallthru
        _
      %p635 = scmp.lt.s32.totalorder %s39, 4
      // Predicated region
      $region73: #{generator_forward.1} parent=5 // pred_check
        %p636 = pneg %p635
      $region74: #{generator_forward.1} parent=5 // pred_check_branch
        %638 = sbr.rel (%p636) target = $region76
      $region75: #{generator_forward.1} parent=5 // pred_region
        // Predicated region
        $region77: #{generator_forward.1} parent=75 // pred_check
          %p639 = pneg %p59
        $region78: #{generator_forward.1} parent=75 // pred_check_branch
          %641 = sbr.rel (%p639) target = $region80
        $region79: #{generator_forward.1} parent=75 // pred_region
          %s642 = sand.u32 %s49, 1
          %s643 = scalar_lea.sflag [#allocation3], %s642
          %s644 = sand.u32 %s49, 1
          %s645 = smul.addr %s644, 8
          %s646 = scalar_lea.vmem [#allocation2], %s645
          %648 = vsyncadd %s643, 0
          %s649 = smul.addr %s39, 8
          %s650 = scalar_lea.hbm %s0, %s649
          %s652 = sshll.u32 %s650, 4
          %s653 = int_to_ptr.hbm [resolvable:$true] %s652
          %s654 = sshll.u32 %s646, 4
          %s655 = int_to_ptr.vmem [resolvable:$true] %s654
          %657 = dma.hbm_to_vmem [thread:$0]  %s653, 128, %s655, %s643
        $region80: #{generator_forward.1} parent=75 // pred_fallthru
          _
        // Predicated region
        $region81: #{generator_forward.1} parent=75 // pred_check
          %p658 = pneg %p85
        $region82: #{generator_forward.1} parent=75 // pred_check_branch
          %660 = sbr.rel (%p658) target = $region84
        $region83: #{generator_forward.1} parent=75 // pred_region
          %s661 = sand.u32 %s39, 1
          %s662 = scalar_lea.sflag [#allocation6], %s661
          %s663 = sand.u32 %s75, 1
          %s664 = smul.addr %s663, 8
          %s665 = scalar_lea.vmem [#allocation5], %s664
          %667 = vsyncadd %s662, 0
          %s668 = smul.addr %s39, 8
          %s669 = scalar_lea.hbm %s1, %s668
          %s671 = sshll.u32 %s669, 4
          %s672 = int_to_ptr.hbm [resolvable:$true] %s671
          %s673 = sshll.u32 %s665, 4
          %s674 = int_to_ptr.vmem [resolvable:$true] %s673
          %676 = dma.hbm_to_vmem [thread:$0]  %s672, 128, %s674, %s662
        $region84: #{generator_forward.1} parent=75 // pred_fallthru
          _
      $region76: #{generator_forward.1} parent=5 // pred_fallthru
        _
      %p677 = scmp.le.s32.totalorder 1, %s39
      %p678 = scmp.lt.s32.totalorder %s39, 5
      %p679 = pnand %p677, %p678
      %p680 = pneg %p679
      // Predicated region
      $region85: #{generator_forward.1} parent=5 // pred_check
        _
      $region86: #{generator_forward.1} parent=5 // pred_check_branch
        %682 = sbr.rel (%p679) target = $region88
      $region87: #{generator_forward.1} parent=5 // pred_region
        %s683 = ssub.s32 %s39, 1
        %s684 = sand.u32 %s52, 1
        %s685 = scalar_lea.sflag [#allocation3], %s684
        %s686 = sand.u32 %s52, 1
        %s687 = smul.addr %s686, 8
        %s688 = scalar_lea.vmem [#allocation2], %s687
        // Predicated region
        $region89: #{generator_forward.1} parent=87 // pred_check
          %p689 = pneg %p65
        $region90: #{generator_forward.1} parent=87 // pred_check_branch
          %691 = sbr.rel (%p689) target = $region92
        $region91: #{generator_forward.1} parent=87 // pred_region
          %693 = dma.done %s685, 128
        $region92: #{generator_forward.1} parent=87 // pred_fallthru
          _
        %s694 = sand.u32 %s44, 1
        %s695 = scalar_lea.sflag [#allocation6], %s694
        %s696 = sand.u32 %s78, 1
        %s697 = smul.addr %s696, 8
        %s698 = scalar_lea.vmem [#allocation5], %s697
        // Predicated region
        $region93: #{generator_forward.1} parent=87 // pred_check
          %p699 = pneg %p91
        $region94: #{generator_forward.1} parent=87 // pred_check_branch
          %701 = sbr.rel (%p699) target = $region96
        $region95: #{generator_forward.1} parent=87 // pred_region
          %703 = dma.done %s695, 128
        $region96: #{generator_forward.1} parent=87 // pred_fallthru
          _
        // Predicated region
        $region97: #{generator_forward.1} parent=87 // pred_check
          %p704 = pneg %p112
        $region98: #{generator_forward.1} parent=87 // pred_check_branch
          %706 = sbr.rel (%p704) target = $region100
        $region99: #{generator_forward.1} parent=87 // pred_region
          %708 = dma.done [#allocation6], 1152
        $region100: #{generator_forward.1} parent=87 // pred_fallthru
          _
        // Predicated region
        $region101: #{generator_forward.1} parent=87 // pred_check
          %p709 = pneg %p133
        $region102: #{generator_forward.1} parent=87 // pred_check_branch
          %711 = sbr.rel (%p709) target = $region104
        $region103: #{generator_forward.1} parent=87 // pred_region
          %713 = dma.done [#allocation9], 576
        $region104: #{generator_forward.1} parent=87 // pred_fallthru
          _
        // Predicated region
        $region105: #{generator_forward.1} parent=87 // pred_check
          %p714 = pneg %p154
        $region106: #{generator_forward.1} parent=87 // pred_check_branch
          %716 = sbr.rel (%p714) target = $region108
        $region107: #{generator_forward.1} parent=87 // pred_region
          %718 = dma.done [#allocation9], 144
        $region108: #{generator_forward.1} parent=87 // pred_fallthru
          _
        // Predicated region
        $region109: #{generator_forward.1} parent=87 // pred_check
          %p719 = pneg %p175
        $region110: #{generator_forward.1} parent=87 // pred_check_branch
          %721 = sbr.rel (%p719) target = $region112
        $region111: #{generator_forward.1} parent=87 // pred_region
          %723 = dma.done [#allocation12], 144
        $region112: #{generator_forward.1} parent=87 // pred_fallthru
          _
        // Predicated region
        $region113: #{generator_forward.1} parent=87 // pred_check
          %p724 = pneg %p196
        $region114: #{generator_forward.1} parent=87 // pred_check_branch
          %726 = sbr.rel (%p724) target = $region116
        $region115: #{generator_forward.1} parent=87 // pred_region
          %728 = dma.done [#allocation12], 144
        $region116: #{generator_forward.1} parent=87 // pred_fallthru
          _
        // Predicated region
        $region117: #{generator_forward.1} parent=87 // pred_check
          %p729 = pneg %p217
        $region118: #{generator_forward.1} parent=87 // pred_check_branch
          %731 = sbr.rel (%p729) target = $region120
        $region119: #{generator_forward.1} parent=87 // pred_region
          %733 = dma.done [#allocation15], 36864
        $region120: #{generator_forward.1} parent=87 // pred_fallthru
          _
        // Predicated region
        $region121: #{generator_forward.1} parent=87 // pred_check
          %p734 = pneg %p238
        $region122: #{generator_forward.1} parent=87 // pred_check_branch
          %736 = sbr.rel (%p734) target = $region124
        $region123: #{generator_forward.1} parent=87 // pred_region
          %738 = dma.done [#allocation15], 64
        $region124: #{generator_forward.1} parent=87 // pred_fallthru
          _
        // Predicated region
        $region125: #{generator_forward.1} parent=87 // pred_check
          %p739 = pneg %p259
        $region126: #{generator_forward.1} parent=87 // pred_check_branch
          %741 = sbr.rel (%p739) target = $region128
        $region127: #{generator_forward.1} parent=87 // pred_region
          %743 = dma.done [#allocation18], 64
        $region128: #{generator_forward.1} parent=87 // pred_fallthru
          _
        // Predicated region
        $region129: #{generator_forward.1} parent=87 // pred_check
          %p744 = pneg %p280
        $region130: #{generator_forward.1} parent=87 // pred_check_branch
          %746 = sbr.rel (%p744) target = $region132
        $region131: #{generator_forward.1} parent=87 // pred_region
          %748 = dma.done [#allocation18], 64
        $region132: #{generator_forward.1} parent=87 // pred_fallthru
          _
        // Predicated region
        $region133: #{generator_forward.1} parent=87 // pred_check
          %p749 = pneg %p301
        $region134: #{generator_forward.1} parent=87 // pred_check_branch
          %751 = sbr.rel (%p749) target = $region136
        $region135: #{generator_forward.1} parent=87 // pred_region
          %753 = dma.done [#allocation21], 4096
        $region136: #{generator_forward.1} parent=87 // pred_fallthru
          _
        // Predicated region
        $region137: #{generator_forward.1} parent=87 // pred_check
          %p754 = pneg %p322
        $region138: #{generator_forward.1} parent=87 // pred_check_branch
          %756 = sbr.rel (%p754) target = $region140
        $region139: #{generator_forward.1} parent=87 // pred_region
          %758 = dma.done [#allocation21], 16
        $region140: #{generator_forward.1} parent=87 // pred_fallthru
          _
        // Predicated region
        $region141: #{generator_forward.1} parent=87 // pred_check
          %p759 = pneg %p343
        $region142: #{generator_forward.1} parent=87 // pred_check_branch
          %761 = sbr.rel (%p759) target = $region144
        $region143: #{generator_forward.1} parent=87 // pred_region
          %763 = dma.done [#allocation24], 16
        $region144: #{generator_forward.1} parent=87 // pred_fallthru
          _
        // Predicated region
        $region145: #{generator_forward.1} parent=87 // pred_check
          %p764 = pneg %p364
        $region146: #{generator_forward.1} parent=87 // pred_check_branch
          %766 = sbr.rel (%p764) target = $region148
        $region147: #{generator_forward.1} parent=87 // pred_region
          %768 = dma.done [#allocation24], 16
        $region148: #{generator_forward.1} parent=87 // pred_fallthru
          _
        // Predicated region
        $region149: #{generator_forward.1} parent=87 // pred_check
          %p769 = pneg %p385
        $region150: #{generator_forward.1} parent=87 // pred_check_branch
          %771 = sbr.rel (%p769) target = $region152
        $region151: #{generator_forward.1} parent=87 // pred_region
          %773 = dma.done [#allocation27], 1024
        $region152: #{generator_forward.1} parent=87 // pred_fallthru
          _
        // Predicated region
        $region153: #{generator_forward.1} parent=87 // pred_check
          %p774 = pneg %p406
        $region154: #{generator_forward.1} parent=87 // pred_check_branch
          %776 = sbr.rel (%p774) target = $region156
        $region155: #{generator_forward.1} parent=87 // pred_region
          %778 = dma.done [#allocation27], 16
        $region156: #{generator_forward.1} parent=87 // pred_fallthru
          _
        %s779 = sand.u32 %s52, 1
        %s780 = scalar_lea.sflag [#allocation3], %s779
        %s781 = sand.u32 %s52, 1
        %s782 = smul.addr %s781, 8
        %s783 = scalar_lea.vmem [#allocation2], %s782
        %p784 = pneg %p65
        %p785 = pneg %p62
        %s786 = sand.u32 %s44, 1
        %s787 = scalar_lea.sflag [#allocation6], %s786
        %s788 = sand.u32 %s78, 1
        %s789 = smul.addr %s788, 8
        %s790 = scalar_lea.vmem [#allocation5], %s789
        %p791 = pneg %p91
        %p792 = pneg %p88
        %p793 = pneg %p112
        %p794 = pneg %p109
        %p795 = pneg %p133
        %p796 = pneg %p130
        %p797 = pneg %p154
        %p798 = pneg %p151
        %p799 = pneg %p175
        %p800 = pneg %p172
        %p801 = pneg %p196
        %p802 = pneg %p193
        %p803 = pneg %p217
        %p804 = pneg %p214
        %p805 = pneg %p238
        %p806 = pneg %p235
        %p807 = pneg %p259
        %p808 = pneg %p256
        %p809 = pneg %p280
        %p810 = pneg %p277
        %p811 = pneg %p301
        %p812 = pneg %p298
        %p813 = pneg %p322
        %p814 = pneg %p319
        %p815 = pneg %p343
        %p816 = pneg %p340
        %p817 = pneg %p364
        %p818 = pneg %p361
        %p819 = pneg %p385
        %p820 = pneg %p382
        %p821 = pneg %p406
        %p822 = pneg %p403
        %p823 = pneg %p432
        %p824 = pneg %p429
        %s825 = sand.u32 %s419, 1
        %s826 = scalar_lea.sflag [#allocation4], %s825
        %s827 = sand.u32 %s419, 1
        %s828 = smul.addr %s827, 8
        %s829 = scalar_lea.vmem [#allocation29], %s828
        %v831 = vld [vmem:[%s688] sm:$0xff]
        %v832 = vpack.c.bf16 %v831, %v831
        %v833 = vld [vmem:[#allocation7] sm:$0xff]
        %v834 = vld [vmem:[#allocation7 + $0x8] sm:$0xff]
        %v835 = vld [vmem:[#allocation7 + $0x10] sm:$0xff]
        %v836 = vld [vmem:[#allocation7 + $0x18] sm:$0xff]
        %v837 = vld [vmem:[#allocation7 + $0x20] sm:$0xf]
        %v838 = vld [vmem:[#allocation7 + $0x24] sm:$0xff]
        %v839 = vld [vmem:[#allocation7 + $0x2c] sm:$0xff]
        %v840 = vld [vmem:[#allocation7 + $0x34] sm:$0xff]
        %v841 = vld [vmem:[#allocation7 + $0x3c] sm:$0xff]
        %v842 = vld [vmem:[#allocation7 + $0x44] sm:$0xf]
        %v843 = vld [vmem:[%s698] sm:$0xff]
        %v844 = vpack.c.bf16 %v843, %v843
        %v845 = vld [vmem:[#allocation8] sm:$0xff]
        %v846 = vld [vmem:[#allocation8 + $0x8] sm:$0xff]
        %v847 = vld [vmem:[#allocation8 + $0x10] sm:$0xff]
        %v848 = vld [vmem:[#allocation8 + $0x18] sm:$0xff]
        %v849 = vld [vmem:[#allocation8 + $0x20] sm:$0xf]
        %v855 = vunpack.c.l.b16 %v845
        %v856 = vunpack.c.h.b16 %v845
        %v857 = vunpack.c.l.b16 %v846
        %v858 = vunpack.c.h.b16 %v846
        %v859 = vunpack.c.l.b16 %v847
        %v860 = vunpack.c.h.b16 %v847
        %v861 = vunpack.c.l.b16 %v848
        %v862 = vunpack.c.h.b16 %v848
        %v863 = vunpack.c.l.b16 %v849
        %v864 = vpack.c.b16 %v855, %v855
        %v865 = vpack.c.b16 %v856, %v856
        %v866 = vpack.c.b16 %v857, %v857
        %v867 = vpack.c.b16 %v858, %v858
        %v868 = vpack.c.b16 %v859, %v859
        %v869 = vpack.c.b16 %v860, %v860
        %v870 = vpack.c.b16 %v861, %v861
        %v871 = vpack.c.b16 %v862, %v862
        %v872 = vpack.c.b16 %v863, %v863
        %vm873 = vcmask 64512
        %v875 = vsel %vm873, %v844, 0
        %vm877 = vcmask 1043456
        %v879 = vsel %vm877, %v864, 0
        %v882 = vsel %vm877, %v865, 0
        %v885 = vsel %vm877, %v866, 0
        %v888 = vsel %vm877, %v867, 0
        %v891 = vsel %vm877, %v868, 0
        %v894 = vsel %vm877, %v869, 0
        %v897 = vsel %vm877, %v870, 0
        %v900 = vsel %vm877, %v871, 0
        %v903 = vsel %vm877, %v872, 0
        %905 = vmatpush.bf16.msra.mxu0 0
        %906 = vmatpush.bf16.msra.mxu0 0
        %907 = vmatpush.bf16.msra.mxu0 0
        %908 = vmatpush.bf16.msra.mxu0 0
        %909 = vmatpush.bf16.msra.mxu0 0
        %910 = vmatpush.bf16.msra.mxu0 0
        %911 = vmatpush.bf16.msra.mxu0 0
        %912 = vmatpush.bf16.msra.mxu0 %v879
        %913 = vmatmul.bf16.gmra.mxu0 %v875
        %v914 = vpop.f32.mrf.mxu0
        %v915 = vadd.f32 0.0, %v914
        %v916 = vpop.f32.mrf.mxu0
        %917 = vdwg.mxu0
        %918 = vmatpush.bf16.msra.mxu0 0
        %919 = vmatpush.bf16.msra.mxu0 0
        %920 = vmatpush.bf16.msra.mxu0 0
        %921 = vmatpush.bf16.msra.mxu0 0
        %922 = vmatpush.bf16.msra.mxu0 0
        %923 = vmatpush.bf16.msra.mxu0 0
        %924 = vmatpush.bf16.msra.mxu0 0
        %925 = vmatpush.bf16.msra.mxu0 %v882
        %926 = vmatmul.bf16.gmra.mxu0 %v875
        %v927 = vpop.f32.mrf.mxu0
        %v928 = vadd.f32 0.0, %v927
        %v929 = vpop.f32.mrf.mxu0
        %930 = vdwg.mxu0
        %931 = vmatpush.bf16.msra.mxu0 0
        %932 = vmatpush.bf16.msra.mxu0 0
        %933 = vmatpush.bf16.msra.mxu0 0
        %934 = vmatpush.bf16.msra.mxu0 0
        %935 = vmatpush.bf16.msra.mxu0 0
        %936 = vmatpush.bf16.msra.mxu0 0
        %937 = vmatpush.bf16.msra.mxu0 0
        %938 = vmatpush.bf16.msra.mxu0 %v885
        %939 = vmatmul.bf16.gmra.mxu0 %v875
        %v940 = vpop.f32.mrf.mxu0
        %v941 = vadd.f32 0.0, %v940
        %v942 = vpop.f32.mrf.mxu0
        %943 = vdwg.mxu0
        %944 = vmatpush.bf16.msra.mxu0 0
        %945 = vmatpush.bf16.msra.mxu0 0
        %946 = vmatpush.bf16.msra.mxu0 0
        %947 = vmatpush.bf16.msra.mxu0 0
        %948 = vmatpush.bf16.msra.mxu0 0
        %949 = vmatpush.bf16.msra.mxu0 0
        %950 = vmatpush.bf16.msra.mxu0 0
        %951 = vmatpush.bf16.msra.mxu0 %v888
        %952 = vmatmul.bf16.gmra.mxu0 %v875
        %v953 = vpop.f32.mrf.mxu0
        %v954 = vadd.f32 0.0, %v953
        %v955 = vpop.f32.mrf.mxu0
        %956 = vdwg.mxu0
        %957 = vmatpush.bf16.msra.mxu0 0
        %958 = vmatpush.bf16.msra.mxu0 0
        %959 = vmatpush.bf16.msra.mxu0 0
        %960 = vmatpush.bf16.msra.mxu0 0
        %961 = vmatpush.bf16.msra.mxu0 0
        %962 = vmatpush.bf16.msra.mxu0 0
        %963 = vmatpush.bf16.msra.mxu0 0
        %964 = vmatpush.bf16.msra.mxu0 %v891
        %965 = vmatmul.bf16.gmra.mxu0 %v875
        %v966 = vpop.f32.mrf.mxu0
        %v967 = vadd.f32 0.0, %v966
        %v968 = vpop.f32.mrf.mxu0
        %969 = vdwg.mxu0
        %970 = vmatpush.bf16.msra.mxu0 0
        %971 = vmatpush.bf16.msra.mxu0 0
        %972 = vmatpush.bf16.msra.mxu0 0
        %973 = vmatpush.bf16.msra.mxu0 0
        %974 = vmatpush.bf16.msra.mxu0 0
        %975 = vmatpush.bf16.msra.mxu0 0
        %976 = vmatpush.bf16.msra.mxu0 0
        %977 = vmatpush.bf16.msra.mxu0 %v894
        %978 = vmatmul.bf16.gmra.mxu0 %v875
        %v979 = vpop.f32.mrf.mxu0
        %v980 = vadd.f32 0.0, %v979
        %v981 = vpop.f32.mrf.mxu0
        %982 = vdwg.mxu0
        %983 = vmatpush.bf16.msra.mxu0 0
        %984 = vmatpush.bf16.msra.mxu0 0
        %985 = vmatpush.bf16.msra.mxu0 0
        %986 = vmatpush.bf16.msra.mxu0 0
        %987 = vmatpush.bf16.msra.mxu0 0
        %988 = vmatpush.bf16.msra.mxu0 0
        %989 = vmatpush.bf16.msra.mxu0 0
        %990 = vmatpush.bf16.msra.mxu0 %v897
        %991 = vmatmul.bf16.gmra.mxu0 %v875
        %v992 = vpop.f32.mrf.mxu0
        %v993 = vadd.f32 0.0, %v992
        %v994 = vpop.f32.mrf.mxu0
        %995 = vdwg.mxu0
        %996 = vmatpush.bf16.msra.mxu0 0
        %997 = vmatpush.bf16.msra.mxu0 0
        %998 = vmatpush.bf16.msra.mxu0 0
        %999 = vmatpush.bf16.msra.mxu0 0
        %1000 = vmatpush.bf16.msra.mxu0 0
        %1001 = vmatpush.bf16.msra.mxu0 0
        %1002 = vmatpush.bf16.msra.mxu0 0
        %1003 = vmatpush.bf16.msra.mxu0 %v900
        %1004 = vmatmul.bf16.gmra.mxu0 %v875
        %v1005 = vpop.f32.mrf.mxu0
        %v1006 = vadd.f32 0.0, %v1005
        %v1007 = vpop.f32.mrf.mxu0
        %1008 = vdwg.mxu0
        %1009 = vmatpush.bf16.msra.mxu0 0
        %1010 = vmatpush.bf16.msra.mxu0 0
        %1011 = vmatpush.bf16.msra.mxu0 0
        %1012 = vmatpush.bf16.msra.mxu0 0
        %1013 = vmatpush.bf16.msra.mxu0 0
        %1014 = vmatpush.bf16.msra.mxu0 0
        %1015 = vmatpush.bf16.msra.mxu0 0
        %1016 = vmatpush.bf16.msra.mxu0 %v903
        %1017 = vmatmul.bf16.gmra.mxu0 %v875
        %v1018 = vpop.f32.mrf.mxu0
        %v1019 = vadd.f32 0.0, %v1018
        %v1020 = vpop.f32.mrf.mxu0
        %1021 = vdwg.mxu0
        %v1032 = vunpack.c.l.b16 %v833
        %v1033 = vunpack.c.h.b16 %v833
        %v1034 = vunpack.c.l.b16 %v834
        %v1035 = vunpack.c.h.b16 %v834
        %v1036 = vunpack.c.l.b16 %v835
        %v1037 = vunpack.c.h.b16 %v835
        %v1038 = vunpack.c.l.b16 %v836
        %v1039 = vunpack.c.h.b16 %v836
        %v1040 = vunpack.c.l.b16 %v837
        %v1041 = vunpack.c.l.b16 %v838
        %v1042 = vunpack.c.h.b16 %v838
        %v1043 = vunpack.c.l.b16 %v839
        %v1044 = vunpack.c.h.b16 %v839
        %v1045 = vunpack.c.l.b16 %v840
        %v1046 = vunpack.c.h.b16 %v840
        %v1047 = vunpack.c.l.b16 %v841
        %v1048 = vunpack.c.h.b16 %v841
        %v1049 = vunpack.c.l.b16 %v842
        %v1050 = vpack.c.b16 %v1041, %v1032
        %v1051 = vpack.c.b16 %v1042, %v1033
        %v1052 = vpack.c.b16 %v1043, %v1034
        %v1053 = vpack.c.b16 %v1044, %v1035
        %v1054 = vpack.c.b16 %v1045, %v1036
        %v1055 = vpack.c.b16 %v1046, %v1037
        %v1056 = vpack.c.b16 %v1047, %v1038
        %v1057 = vpack.c.b16 %v1048, %v1039
        %v1058 = vpack.c.b16 %v1049, %v1040
        %vm1068 = vcmask 130048
        %v1070 = vsel %vm1068, %v832, 0
        %1072 = vmatpush.bf16.msra.mxu0 0
        %1073 = vmatpush.bf16.msra.mxu0 0
        %1074 = vmatpush.bf16.msra.mxu0 0
        %1075 = vmatpush.bf16.msra.mxu0 0
        %1076 = vmatpush.bf16.msra.mxu0 0
        %1077 = vmatpush.bf16.msra.mxu0 0
        %1078 = vmatpush.bf16.msra.mxu0 0
        %1079 = vmatpush.bf16.msra.mxu0 %v1050
        %1080 = vmatmul.bf16.gmra.mxu0 %v1070
        %v1081 = vpop.f32.mrf.mxu0
        %v1082 = vadd.f32 %v915, %v1081
        %v1083 = vpop.f32.mrf.mxu0
        %1084 = vdwg.mxu0
        %1085 = vmatpush.bf16.msra.mxu0 0
        %1086 = vmatpush.bf16.msra.mxu0 0
        %1087 = vmatpush.bf16.msra.mxu0 0
        %1088 = vmatpush.bf16.msra.mxu0 0
        %1089 = vmatpush.bf16.msra.mxu0 0
        %1090 = vmatpush.bf16.msra.mxu0 0
        %1091 = vmatpush.bf16.msra.mxu0 0
        %1092 = vmatpush.bf16.msra.mxu0 %v1051
        %1093 = vmatmul.bf16.gmra.mxu0 %v1070
        %v1094 = vpop.f32.mrf.mxu0
        %v1095 = vadd.f32 %v928, %v1094
        %v1096 = vpop.f32.mrf.mxu0
        %1097 = vdwg.mxu0
        %1098 = vmatpush.bf16.msra.mxu0 0
        %1099 = vmatpush.bf16.msra.mxu0 0
        %1100 = vmatpush.bf16.msra.mxu0 0
        %1101 = vmatpush.bf16.msra.mxu0 0
        %1102 = vmatpush.bf16.msra.mxu0 0
        %1103 = vmatpush.bf16.msra.mxu0 0
        %1104 = vmatpush.bf16.msra.mxu0 0
        %1105 = vmatpush.bf16.msra.mxu0 %v1052
        %1106 = vmatmul.bf16.gmra.mxu0 %v1070
        %v1107 = vpop.f32.mrf.mxu0
        %v1108 = vadd.f32 %v941, %v1107
        %v1109 = vpop.f32.mrf.mxu0
        %1110 = vdwg.mxu0
        %1111 = vmatpush.bf16.msra.mxu0 0
        %1112 = vmatpush.bf16.msra.mxu0 0
        %1113 = vmatpush.bf16.msra.mxu0 0
        %1114 = vmatpush.bf16.msra.mxu0 0
        %1115 = vmatpush.bf16.msra.mxu0 0
        %1116 = vmatpush.bf16.msra.mxu0 0
        %1117 = vmatpush.bf16.msra.mxu0 0
        %1118 = vmatpush.bf16.msra.mxu0 %v1053
        %1119 = vmatmul.bf16.gmra.mxu0 %v1070
        %v1120 = vpop.f32.mrf.mxu0
        %v1121 = vadd.f32 %v954, %v1120
        %v1122 = vpop.f32.mrf.mxu0
        %1123 = vdwg.mxu0
        %1124 = vmatpush.bf16.msra.mxu0 0
        %1125 = vmatpush.bf16.msra.mxu0 0
        %1126 = vmatpush.bf16.msra.mxu0 0
        %1127 = vmatpush.bf16.msra.mxu0 0
        %1128 = vmatpush.bf16.msra.mxu0 0
        %1129 = vmatpush.bf16.msra.mxu0 0
        %1130 = vmatpush.bf16.msra.mxu0 0
        %1131 = vmatpush.bf16.msra.mxu0 %v1054
        %1132 = vmatmul.bf16.gmra.mxu0 %v1070
        %v1133 = vpop.f32.mrf.mxu0
        %v1134 = vadd.f32 %v967, %v1133
        %v1135 = vpop.f32.mrf.mxu0
        %1136 = vdwg.mxu0
        %1137 = vmatpush.bf16.msra.mxu0 0
        %1138 = vmatpush.bf16.msra.mxu0 0
        %1139 = vmatpush.bf16.msra.mxu0 0
        %1140 = vmatpush.bf16.msra.mxu0 0
        %1141 = vmatpush.bf16.msra.mxu0 0
        %1142 = vmatpush.bf16.msra.mxu0 0
        %1143 = vmatpush.bf16.msra.mxu0 0
        %1144 = vmatpush.bf16.msra.mxu0 %v1055
        %1145 = vmatmul.bf16.gmra.mxu0 %v1070
        %v1146 = vpop.f32.mrf.mxu0
        %v1147 = vadd.f32 %v980, %v1146
        %v1148 = vpop.f32.mrf.mxu0
        %1149 = vdwg.mxu0
        %1150 = vmatpush.bf16.msra.mxu0 0
        %1151 = vmatpush.bf16.msra.mxu0 0
        %1152 = vmatpush.bf16.msra.mxu0 0
        %1153 = vmatpush.bf16.msra.mxu0 0
        %1154 = vmatpush.bf16.msra.mxu0 0
        %1155 = vmatpush.bf16.msra.mxu0 0
        %1156 = vmatpush.bf16.msra.mxu0 0
        %1157 = vmatpush.bf16.msra.mxu0 %v1056
        %1158 = vmatmul.bf16.gmra.mxu0 %v1070
        %v1159 = vpop.f32.mrf.mxu0
        %v1160 = vadd.f32 %v993, %v1159
        %v1161 = vpop.f32.mrf.mxu0
        %1162 = vdwg.mxu0
        %1163 = vmatpush.bf16.msra.mxu0 0
        %1164 = vmatpush.bf16.msra.mxu0 0
        %1165 = vmatpush.bf16.msra.mxu0 0
        %1166 = vmatpush.bf16.msra.mxu0 0
        %1167 = vmatpush.bf16.msra.mxu0 0
        %1168 = vmatpush.bf16.msra.mxu0 0
        %1169 = vmatpush.bf16.msra.mxu0 0
        %1170 = vmatpush.bf16.msra.mxu0 %v1057
        %1171 = vmatmul.bf16.gmra.mxu0 %v1070
        %v1172 = vpop.f32.mrf.mxu0
        %v1173 = vadd.f32 %v1006, %v1172
        %v1174 = vpop.f32.mrf.mxu0
        %1175 = vdwg.mxu0
        %1176 = vmatpush.bf16.msra.mxu0 0
        %1177 = vmatpush.bf16.msra.mxu0 0
        %1178 = vmatpush.bf16.msra.mxu0 0
        %1179 = vmatpush.bf16.msra.mxu0 0
        %1180 = vmatpush.bf16.msra.mxu0 0
        %1181 = vmatpush.bf16.msra.mxu0 0
        %1182 = vmatpush.bf16.msra.mxu0 0
        %1183 = vmatpush.bf16.msra.mxu0 %v1058
        %1184 = vmatmul.bf16.gmra.mxu0 %v1070
        %v1185 = vpop.f32.mrf.mxu0
        %v1186 = vadd.f32 %v1019, %v1185
        %v1187 = vpop.f32.mrf.mxu0
        %1188 = vdwg.mxu0
        %v1189 = vld [vmem:[#allocation10] sm:$0xff]
        %v1190 = vld [vmem:[#allocation10 + $0x8] sm:$0x1]
        %v1193 = vperm.slane %v1189, 0
        %v1194 = vperm.slane %v1189, 1
        %v1195 = vperm.slane %v1189, 2
        %v1196 = vperm.slane %v1189, 3
        %v1197 = vperm.slane %v1189, 4
        %v1198 = vperm.slane %v1189, 5
        %v1199 = vperm.slane %v1189, 6
        %v1200 = vperm.slane %v1189, 7
        %v1201 = vperm.slane %v1190, 0
        %v1211 = vadd.f32 %v1082, %v1193
        %v1212 = vadd.f32 %v1095, %v1194
        %v1213 = vadd.f32 %v1108, %v1195
        %v1214 = vadd.f32 %v1121, %v1196
        %v1215 = vadd.f32 %v1134, %v1197
        %v1216 = vadd.f32 %v1147, %v1198
        %v1217 = vadd.f32 %v1160, %v1199
        %v1218 = vadd.f32 %v1173, %v1200
        %v1219 = vadd.f32 %v1186, %v1201
        %v1220 = vmul.f32 %v1211, 0.2
        %v1221 = vmul.f32 %v1212, 0.2
        %v1222 = vmul.f32 %v1213, 0.2
        %v1223 = vmul.f32 %v1214, 0.2
        %v1224 = vmul.f32 %v1215, 0.2
        %v1225 = vmul.f32 %v1216, 0.2
        %v1226 = vmul.f32 %v1217, 0.2
        %v1227 = vmul.f32 %v1218, 0.2
        %v1228 = vmul.f32 %v1219, 0.2
        %v1229 = vmax.f32 %v1211, %v1220
        %v1230 = vmax.f32 %v1212, %v1221
        %v1231 = vmax.f32 %v1213, %v1222
        %v1232 = vmax.f32 %v1214, %v1223
        %v1233 = vmax.f32 %v1215, %v1224
        %v1234 = vmax.f32 %v1216, %v1225
        %v1235 = vmax.f32 %v1217, %v1226
        %v1236 = vmax.f32 %v1218, %v1227
        %v1237 = vmax.f32 %v1219, %v1228
        %v1238 = vrot.slane %v1229, 4
        %v1239 = vadd.f32 %v1229, %v1238
        %v1240 = vrot.slane %v1239, 2
        %v1241 = vadd.f32 %v1239, %v1240
        %v1242 = vrot.slane %v1241, 1
        %v1243 = vadd.f32 %v1241, %v1242
        %v1244 = vrot.slane %v1230, 4
        %v1245 = vadd.f32 %v1230, %v1244
        %v1246 = vrot.slane %v1245, 2
        %v1247 = vadd.f32 %v1245, %v1246
        %v1248 = vrot.slane %v1247, 1
        %v1249 = vadd.f32 %v1247, %v1248
        %v1250 = vrot.slane %v1231, 4
        %v1251 = vadd.f32 %v1231, %v1250
        %v1252 = vrot.slane %v1251, 2
        %v1253 = vadd.f32 %v1251, %v1252
        %v1254 = vrot.slane %v1253, 1
        %v1255 = vadd.f32 %v1253, %v1254
        %v1256 = vrot.slane %v1232, 4
        %v1257 = vadd.f32 %v1232, %v1256
        %v1258 = vrot.slane %v1257, 2
        %v1259 = vadd.f32 %v1257, %v1258
        %v1260 = vrot.slane %v1259, 1
        %v1261 = vadd.f32 %v1259, %v1260
        %v1262 = vrot.slane %v1233, 4
        %v1263 = vadd.f32 %v1233, %v1262
        %v1264 = vrot.slane %v1263, 2
        %v1265 = vadd.f32 %v1263, %v1264
        %v1266 = vrot.slane %v1265, 1
        %v1267 = vadd.f32 %v1265, %v1266
        %v1268 = vrot.slane %v1234, 4
        %v1269 = vadd.f32 %v1234, %v1268
        %v1270 = vrot.slane %v1269, 2
        %v1271 = vadd.f32 %v1269, %v1270
        %v1272 = vrot.slane %v1271, 1
        %v1273 = vadd.f32 %v1271, %v1272
        %v1274 = vrot.slane %v1235, 4
        %v1275 = vadd.f32 %v1235, %v1274
        %v1276 = vrot.slane %v1275, 2
        %v1277 = vadd.f32 %v1275, %v1276
        %v1278 = vrot.slane %v1277, 1
        %v1279 = vadd.f32 %v1277, %v1278
        %v1280 = vrot.slane %v1236, 4
        %v1281 = vadd.f32 %v1236, %v1280
        %v1282 = vrot.slane %v1281, 2
        %v1283 = vadd.f32 %v1281, %v1282
        %v1284 = vrot.slane %v1283, 1
        %v1285 = vadd.f32 %v1283, %v1284
        %v1286 = vrot.slane %v1237, 4
        %v1287 = vadd.f32 %v1237, %v1286
        %v1288 = vrot.slane %v1287, 2
        %v1289 = vadd.f32 %v1287, %v1288
        %v1290 = vrot.slane %v1289, 1
        %v1291 = vadd.f32 %v1289, %v1290
        %v1292 = vrcp.pop 8.0
        %v1293 = vmul.f32 8.0, %v1292
        %v1294 = vsub.f32 1.0, %v1293
        %v1295 = vmul.f32 %v1292, %v1294
        %v1296 = vadd.f32 %v1292, %v1295
        %vm1297 = vweird.f32 %v1292
        %v1298 = vsel %vm1297, %v1292, %v1296
        %v1299 = vmul.f32 %v1243, %v1298
        %v1300 = vmul.f32 %v1249, %v1298
        %v1301 = vmul.f32 %v1255, %v1298
        %v1302 = vmul.f32 %v1261, %v1298
        %v1303 = vmul.f32 %v1267, %v1298
        %v1304 = vmul.f32 %v1273, %v1298
        %v1305 = vmul.f32 %v1279, %v1298
        %v1306 = vmul.f32 %v1285, %v1298
        %v1307 = vmul.f32 %v1291, %v1298
        %v1308 = vmul.f32 %v1229, %v1229
        %v1309 = vmul.f32 %v1230, %v1230
        %v1310 = vmul.f32 %v1231, %v1231
        %v1311 = vmul.f32 %v1232, %v1232
        %v1312 = vmul.f32 %v1233, %v1233
        %v1313 = vmul.f32 %v1234, %v1234
        %v1314 = vmul.f32 %v1235, %v1235
        %v1315 = vmul.f32 %v1236, %v1236
        %v1316 = vmul.f32 %v1237, %v1237
        %v1317 = vrot.slane %v1308, 4
        %v1318 = vadd.f32 %v1308, %v1317
        %v1319 = vrot.slane %v1318, 2
        %v1320 = vadd.f32 %v1318, %v1319
        %v1321 = vrot.slane %v1320, 1
        %v1322 = vadd.f32 %v1320, %v1321
        %v1323 = vrot.slane %v1309, 4
        %v1324 = vadd.f32 %v1309, %v1323
        %v1325 = vrot.slane %v1324, 2
        %v1326 = vadd.f32 %v1324, %v1325
        %v1327 = vrot.slane %v1326, 1
        %v1328 = vadd.f32 %v1326, %v1327
        %v1329 = vrot.slane %v1310, 4
        %v1330 = vadd.f32 %v1310, %v1329
        %v1331 = vrot.slane %v1330, 2
        %v1332 = vadd.f32 %v1330, %v1331
        %v1333 = vrot.slane %v1332, 1
        %v1334 = vadd.f32 %v1332, %v1333
        %v1335 = vrot.slane %v1311, 4
        %v1336 = vadd.f32 %v1311, %v1335
        %v1337 = vrot.slane %v1336, 2
        %v1338 = vadd.f32 %v1336, %v1337
        %v1339 = vrot.slane %v1338, 1
        %v1340 = vadd.f32 %v1338, %v1339
        %v1341 = vrot.slane %v1312, 4
        %v1342 = vadd.f32 %v1312, %v1341
        %v1343 = vrot.slane %v1342, 2
        %v1344 = vadd.f32 %v1342, %v1343
        %v1345 = vrot.slane %v1344, 1
        %v1346 = vadd.f32 %v1344, %v1345
        %v1347 = vrot.slane %v1313, 4
        %v1348 = vadd.f32 %v1313, %v1347
        %v1349 = vrot.slane %v1348, 2
        %v1350 = vadd.f32 %v1348, %v1349
        %v1351 = vrot.slane %v1350, 1
        %v1352 = vadd.f32 %v1350, %v1351
        %v1353 = vrot.slane %v1314, 4
        %v1354 = vadd.f32 %v1314, %v1353
        %v1355 = vrot.slane %v1354, 2
        %v1356 = vadd.f32 %v1354, %v1355
        %v1357 = vrot.slane %v1356, 1
        %v1358 = vadd.f32 %v1356, %v1357
        %v1359 = vrot.slane %v1315, 4
        %v1360 = vadd.f32 %v1315, %v1359
        %v1361 = vrot.slane %v1360, 2
        %v1362 = vadd.f32 %v1360, %v1361
        %v1363 = vrot.slane %v1362, 1
        %v1364 = vadd.f32 %v1362, %v1363
        %v1365 = vrot.slane %v1316, 4
        %v1366 = vadd.f32 %v1316, %v1365
        %v1367 = vrot.slane %v1366, 2
        %v1368 = vadd.f32 %v1366, %v1367
        %v1369 = vrot.slane %v1368, 1
        %v1370 = vadd.f32 %v1368, %v1369
        %v1371 = vmul.f32 %v1322, %v1298
        %v1372 = vmul.f32 %v1328, %v1298
        %v1373 = vmul.f32 %v1334, %v1298
        %v1374 = vmul.f32 %v1340, %v1298
        %v1375 = vmul.f32 %v1346, %v1298
        %v1376 = vmul.f32 %v1352, %v1298
        %v1377 = vmul.f32 %v1358, %v1298
        %v1378 = vmul.f32 %v1364, %v1298
        %v1379 = vmul.f32 %v1370, %v1298
        %v1380 = vmul.f32 %v1299, %v1299
        %v1381 = vmul.f32 %v1300, %v1300
        %v1382 = vmul.f32 %v1301, %v1301
        %v1383 = vmul.f32 %v1302, %v1302
        %v1384 = vmul.f32 %v1303, %v1303
        %v1385 = vmul.f32 %v1304, %v1304
        %v1386 = vmul.f32 %v1305, %v1305
        %v1387 = vmul.f32 %v1306, %v1306
        %v1388 = vmul.f32 %v1307, %v1307
        %v1389 = vsub.f32 %v1371, %v1380
        %v1390 = vsub.f32 %v1372, %v1381
        %v1391 = vsub.f32 %v1373, %v1382
        %v1392 = vsub.f32 %v1374, %v1383
        %v1393 = vsub.f32 %v1375, %v1384
        %v1394 = vsub.f32 %v1376, %v1385
        %v1395 = vsub.f32 %v1377, %v1386
        %v1396 = vsub.f32 %v1378, %v1387
        %v1397 = vsub.f32 %v1379, %v1388
        %v1398 = vmax.f32 %v1389, 0.0
        %v1399 = vmax.f32 %v1390, 0.0
        %v1400 = vmax.f32 %v1391, 0.0
        %v1401 = vmax.f32 %v1392, 0.0
        %v1402 = vmax.f32 %v1393, 0.0
        %v1403 = vmax.f32 %v1394, 0.0
        %v1404 = vmax.f32 %v1395, 0.0
        %v1405 = vmax.f32 %v1396, 0.0
        %v1406 = vmax.f32 %v1397, 0.0
        %v1407 = vld [vmem:[#allocation11] sm:$0xff]
        %v1408 = vld [vmem:[#allocation11 + $0x8] sm:$0x1]
        %v1409 = vadd.f32 %v1398, 1e-05
        %v1410 = vadd.f32 %v1399, 1e-05
        %v1411 = vadd.f32 %v1400, 1e-05
        %v1412 = vadd.f32 %v1401, 1e-05
        %v1413 = vadd.f32 %v1402, 1e-05
        %v1414 = vadd.f32 %v1403, 1e-05
        %v1415 = vadd.f32 %v1404, 1e-05
        %v1416 = vadd.f32 %v1405, 1e-05
        %v1417 = vadd.f32 %v1406, 1e-05
        %v1418 = vrsqrt.pop %v1409
        %v1419 = vmul.f32 %v1418, %v1409
        %v1420 = vmul.f32 %v1419, %v1418
        %v1421 = vmul.f32 0.5, %v1420
        %v1422 = vsub.f32 1.5, %v1421
        %v1423 = vmul.f32 %v1418, %v1422
        %vm1424 = vweird.f32 %v1409
        %vm1425 = vweird.f32 %v1418
        %vm1426 = vmor %vm1424, %vm1425
        %v1427 = vsel %vm1426, %v1418, %v1423
        %v1428 = vrsqrt.pop %v1410
        %v1429 = vmul.f32 %v1428, %v1410
        %v1430 = vmul.f32 %v1429, %v1428
        %v1431 = vmul.f32 0.5, %v1430
        %v1432 = vsub.f32 1.5, %v1431
        %v1433 = vmul.f32 %v1428, %v1432
        %vm1434 = vweird.f32 %v1410
        %vm1435 = vweird.f32 %v1428
        %vm1436 = vmor %vm1434, %vm1435
        %v1437 = vsel %vm1436, %v1428, %v1433
        %v1438 = vrsqrt.pop %v1411
        %v1439 = vmul.f32 %v1438, %v1411
        %v1440 = vmul.f32 %v1439, %v1438
        %v1441 = vmul.f32 0.5, %v1440
        %v1442 = vsub.f32 1.5, %v1441
        %v1443 = vmul.f32 %v1438, %v1442
        %vm1444 = vweird.f32 %v1411
        %vm1445 = vweird.f32 %v1438
        %vm1446 = vmor %vm1444, %vm1445
        %v1447 = vsel %vm1446, %v1438, %v1443
        %v1448 = vrsqrt.pop %v1412
        %v1449 = vmul.f32 %v1448, %v1412
        %v1450 = vmul.f32 %v1449, %v1448
        %v1451 = vmul.f32 0.5, %v1450
        %v1452 = vsub.f32 1.5, %v1451
        %v1453 = vmul.f32 %v1448, %v1452
        %vm1454 = vweird.f32 %v1412
        %vm1455 = vweird.f32 %v1448
        %vm1456 = vmor %vm1454, %vm1455
        %v1457 = vsel %vm1456, %v1448, %v1453
        %v1458 = vrsqrt.pop %v1413
        %v1459 = vmul.f32 %v1458, %v1413
        %v1460 = vmul.f32 %v1459, %v1458
        %v1461 = vmul.f32 0.5, %v1460
        %v1462 = vsub.f32 1.5, %v1461
        %v1463 = vmul.f32 %v1458, %v1462
        %vm1464 = vweird.f32 %v1413
        %vm1465 = vweird.f32 %v1458
        %vm1466 = vmor %vm1464, %vm1465
        %v1467 = vsel %vm1466, %v1458, %v1463
        %v1468 = vrsqrt.pop %v1414
        %v1469 = vmul.f32 %v1468, %v1414
        %v1470 = vmul.f32 %v1469, %v1468
        %v1471 = vmul.f32 0.5, %v1470
        %v1472 = vsub.f32 1.5, %v1471
        %v1473 = vmul.f32 %v1468, %v1472
        %vm1474 = vweird.f32 %v1414
        %vm1475 = vweird.f32 %v1468
        %vm1476 = vmor %vm1474, %vm1475
        %v1477 = vsel %vm1476, %v1468, %v1473
        %v1478 = vrsqrt.pop %v1415
        %v1479 = vmul.f32 %v1478, %v1415
        %v1480 = vmul.f32 %v1479, %v1478
        %v1481 = vmul.f32 0.5, %v1480
        %v1482 = vsub.f32 1.5, %v1481
        %v1483 = vmul.f32 %v1478, %v1482
        %vm1484 = vweird.f32 %v1415
        %vm1485 = vweird.f32 %v1478
        %vm1486 = vmor %vm1484, %vm1485
        %v1487 = vsel %vm1486, %v1478, %v1483
        %v1488 = vrsqrt.pop %v1416
        %v1489 = vmul.f32 %v1488, %v1416
        %v1490 = vmul.f32 %v1489, %v1488
        %v1491 = vmul.f32 0.5, %v1490
        %v1492 = vsub.f32 1.5, %v1491
        %v1493 = vmul.f32 %v1488, %v1492
        %vm1494 = vweird.f32 %v1416
        %vm1495 = vweird.f32 %v1488
        %vm1496 = vmor %vm1494, %vm1495
        %v1497 = vsel %vm1496, %v1488, %v1493
        %v1498 = vrsqrt.pop %v1417
        %v1499 = vmul.f32 %v1498, %v1417
        %v1500 = vmul.f32 %v1499, %v1498
        %v1501 = vmul.f32 0.5, %v1500
        %v1502 = vsub.f32 1.5, %v1501
        %v1503 = vmul.f32 %v1498, %v1502
        %vm1504 = vweird.f32 %v1417
        %vm1505 = vweird.f32 %v1498
        %vm1506 = vmor %vm1504, %vm1505
        %v1507 = vsel %vm1506, %v1498, %v1503
        %v1516 = vrot.slane %v1437, 7
        %v1517 = vrot.slane %v1447, 6
        %v1518 = vrot.slane %v1457, 5
        %v1519 = vrot.slane %v1467, 4
        %v1520 = vrot.slane %v1477, 3
        %v1521 = vrot.slane %v1487, 2
        %v1522 = vrot.slane %v1497, 1
        %vm1523 = vcmask 1040384
        %v1524 = vsel %vm1523, %v1427, %v1516
        %vm1525 = vcmask 1042434
        %v1526 = vsel %vm1525, %v1517, %v1518
        %vm1527 = vcmask 1041408
        %v1528 = vsel %vm1527, %v1524, %v1526
        %vm1529 = vcmask 1044484
        %v1530 = vsel %vm1529, %v1519, %v1520
        %vm1531 = vcmask 1046534
        %v1532 = vsel %vm1531, %v1521, %v1522
        %vm1533 = vcmask 1045508
        %v1534 = vsel %vm1533, %v1530, %v1532
        %v1535 = vsel %vm877, %v1528, %v1534
        %v1537 = vmul.f32 %v1407, %v1535
        %v1538 = vmul.f32 %v1408, %v1507
        %v1539 = vld [vmem:[#allocation13] sm:$0xff]
        %v1540 = vld [vmem:[#allocation13 + $0x8] sm:$0x1]
        %v1543 = vperm.slane %v1537, 0
        %v1544 = vperm.slane %v1537, 1
        %v1545 = vperm.slane %v1537, 2
        %v1546 = vperm.slane %v1537, 3
        %v1547 = vperm.slane %v1537, 4
        %v1548 = vperm.slane %v1537, 5
        %v1549 = vperm.slane %v1537, 6
        %v1550 = vperm.slane %v1537, 7
        %v1551 = vperm.slane %v1538, 0
        %v1561 = vmul.f32 %v1299, %v1543
        %v1562 = vmul.f32 %v1300, %v1544
        %v1563 = vmul.f32 %v1301, %v1545
        %v1564 = vmul.f32 %v1302, %v1546
        %v1565 = vmul.f32 %v1303, %v1547
        %v1566 = vmul.f32 %v1304, %v1548
        %v1567 = vmul.f32 %v1305, %v1549
        %v1568 = vmul.f32 %v1306, %v1550
        %v1569 = vmul.f32 %v1307, %v1551
        %v1578 = vrot.slane %v1562, 7
        %v1579 = vrot.slane %v1563, 6
        %v1580 = vrot.slane %v1564, 5
        %v1581 = vrot.slane %v1565, 4
        %v1582 = vrot.slane %v1566, 3
        %v1583 = vrot.slane %v1567, 2
        %v1584 = vrot.slane %v1568, 1
        %v1585 = vsel %vm1523, %v1561, %v1578
        %v1586 = vsel %vm1525, %v1579, %v1580
        %v1587 = vsel %vm1527, %v1585, %v1586
        %v1588 = vsel %vm1529, %v1581, %v1582
        %v1589 = vsel %vm1531, %v1583, %v1584
        %v1590 = vsel %vm1533, %v1588, %v1589
        %v1591 = vsel %vm877, %v1587, %v1590
        %v1593 = vsub.f32 %v1539, %v1591
        %v1594 = vsub.f32 %v1540, %v1569
        %v1595 = vmul.f32 %v1229, %v1543
        %v1596 = vmul.f32 %v1230, %v1544
        %v1597 = vmul.f32 %v1231, %v1545
        %v1598 = vmul.f32 %v1232, %v1546
        %v1599 = vmul.f32 %v1233, %v1547
        %v1600 = vmul.f32 %v1234, %v1548
        %v1601 = vmul.f32 %v1235, %v1549
        %v1602 = vmul.f32 %v1236, %v1550
        %v1603 = vmul.f32 %v1237, %v1551
        %v1606 = vperm.slane %v1593, 0
        %v1607 = vperm.slane %v1593, 1
        %v1608 = vperm.slane %v1593, 2
        %v1609 = vperm.slane %v1593, 3
        %v1610 = vperm.slane %v1593, 4
        %v1611 = vperm.slane %v1593, 5
        %v1612 = vperm.slane %v1593, 6
        %v1613 = vperm.slane %v1593, 7
        %v1614 = vperm.slane %v1594, 0
        %v1624 = vadd.f32 %v1595, %v1606
        %v1625 = vadd.f32 %v1596, %v1607
        %v1626 = vadd.f32 %v1597, %v1608
        %v1627 = vadd.f32 %v1598, %v1609
        %v1628 = vadd.f32 %v1599, %v1610
        %v1629 = vadd.f32 %v1600, %v1611
        %v1630 = vadd.f32 %v1601, %v1612
        %v1631 = vadd.f32 %v1602, %v1613
        %v1632 = vadd.f32 %v1603, %v1614
        %v1633 = vpack.c.bf16 %v1624, %v1624
        %v1634 = vpack.c.bf16 %v1625, %v1625
        %v1635 = vpack.c.bf16 %v1626, %v1626
        %v1636 = vpack.c.bf16 %v1627, %v1627
        %v1637 = vpack.c.bf16 %v1628, %v1628
        %v1638 = vpack.c.bf16 %v1629, %v1629
        %v1639 = vpack.c.bf16 %v1630, %v1630
        %v1640 = vpack.c.bf16 %v1631, %v1631
        %v1641 = vpack.c.bf16 %v1632, %v1632
        %v1642 = vld [vmem:[#allocation14] sm:$0xff]
        %v1643 = vld [vmem:[#allocation14 + $0x8] sm:$0xff]
        %v1644 = vld [vmem:[#allocation14 + $0x10] sm:$0xff]
        %v1645 = vld [vmem:[#allocation14 + $0x18] sm:$0xff]
        %v1646 = vld [vmem:[#allocation14 + $0x20] sm:$0xff]
        %v1647 = vld [vmem:[#allocation14 + $0x28] sm:$0xff]
        %v1648 = vld [vmem:[#allocation14 + $0x30] sm:$0xff]
        %v1649 = vld [vmem:[#allocation14 + $0x38] sm:$0xff]
        %v1650 = vld [vmem:[#allocation14 + $0x40] sm:$0xff]
        %v1651 = vld [vmem:[#allocation14 + $0x48] sm:$0xff]
        %v1652 = vld [vmem:[#allocation14 + $0x50] sm:$0xff]
        %v1653 = vld [vmem:[#allocation14 + $0x58] sm:$0xff]
        %v1654 = vld [vmem:[#allocation14 + $0x60] sm:$0xff]
        %v1655 = vld [vmem:[#allocation14 + $0x68] sm:$0xff]
        %v1656 = vld [vmem:[#allocation14 + $0x70] sm:$0xff]
        %v1657 = vld [vmem:[#allocation14 + $0x78] sm:$0xff]
        %v1658 = vld [vmem:[#allocation14 + $0x80] sm:$0xff]
        %v1659 = vld [vmem:[#allocation14 + $0x88] sm:$0xff]
        %v1660 = vld [vmem:[#allocation14 + $0x90] sm:$0xff]
        %v1661 = vld [vmem:[#allocation14 + $0x98] sm:$0xff]
        %v1662 = vld [vmem:[#allocation14 + $0xa0] sm:$0xff]
        %v1663 = vld [vmem:[#allocation14 + $0xa8] sm:$0xff]
        %v1664 = vld [vmem:[#allocation14 + $0xb0] sm:$0xff]
        %v1665 = vld [vmem:[#allocation14 + $0xb8] sm:$0xff]
        %v1666 = vld [vmem:[#allocation14 + $0xc0] sm:$0xff]
        %v1667 = vld [vmem:[#allocation14 + $0xc8] sm:$0xff]
        %v1668 = vld [vmem:[#allocation14 + $0xd0] sm:$0xff]
        %v1669 = vld [vmem:[#allocation14 + $0xd8] sm:$0xff]
        %v1670 = vld [vmem:[#allocation14 + $0xe0] sm:$0xff]
        %v1671 = vld [vmem:[#allocation14 + $0xe8] sm:$0xff]
        %v1672 = vld [vmem:[#allocation14 + $0xf0] sm:$0xff]
        %v1673 = vld [vmem:[#allocation14 + $0xf8] sm:$0xff]
        %v1674 = vld [vmem:[#allocation14 + $0x100] sm:$0xff]
        %v1675 = vld [vmem:[#allocation14 + $0x108] sm:$0xff]
        %v1676 = vld [vmem:[#allocation14 + $0x110] sm:$0xff]
        %v1677 = vld [vmem:[#allocation14 + $0x118] sm:$0xff]
        %v1678 = vld [vmem:[#allocation14 + $0x120] sm:$0xff]
        %v1679 = vld [vmem:[#allocation14 + $0x128] sm:$0xff]
        %v1680 = vld [vmem:[#allocation14 + $0x130] sm:$0xff]
        %v1681 = vld [vmem:[#allocation14 + $0x138] sm:$0xff]
        %v1682 = vld [vmem:[#allocation14 + $0x140] sm:$0xff]
        %v1683 = vld [vmem:[#allocation14 + $0x148] sm:$0xff]
        %v1684 = vld [vmem:[#allocation14 + $0x150] sm:$0xff]
        %v1685 = vld [vmem:[#allocation14 + $0x158] sm:$0xff]
        %v1686 = vld [vmem:[#allocation14 + $0x160] sm:$0xff]
        %v1687 = vld [vmem:[#allocation14 + $0x168] sm:$0xff]
        %v1688 = vld [vmem:[#allocation14 + $0x170] sm:$0xff]
        %v1689 = vld [vmem:[#allocation14 + $0x178] sm:$0xff]
        %v1690 = vld [vmem:[#allocation14 + $0x180] sm:$0xff]
        %v1691 = vld [vmem:[#allocation14 + $0x188] sm:$0xff]
        %v1692 = vld [vmem:[#allocation14 + $0x190] sm:$0xff]
        %v1693 = vld [vmem:[#allocation14 + $0x198] sm:$0xff]
        %v1694 = vld [vmem:[#allocation14 + $0x1a0] sm:$0xff]
        %v1695 = vld [vmem:[#allocation14 + $0x1a8] sm:$0xff]
        %v1696 = vld [vmem:[#allocation14 + $0x1b0] sm:$0xff]
        %v1697 = vld [vmem:[#allocation14 + $0x1b8] sm:$0xff]
        %v1698 = vld [vmem:[#allocation14 + $0x1c0] sm:$0xff]
        %v1699 = vld [vmem:[#allocation14 + $0x1c8] sm:$0xff]
        %v1700 = vld [vmem:[#allocation14 + $0x1d0] sm:$0xff]
        %v1701 = vld [vmem:[#allocation14 + $0x1d8] sm:$0xff]
        %v1702 = vld [vmem:[#allocation14 + $0x1e0] sm:$0xff]
        %v1703 = vld [vmem:[#allocation14 + $0x1e8] sm:$0xff]
        %v1704 = vld [vmem:[#allocation14 + $0x1f0] sm:$0xff]
        %v1705 = vld [vmem:[#allocation14 + $0x1f8] sm:$0xff]
        %v1706 = vld [vmem:[#allocation14 + $0x200] sm:$0xff]
        %v1707 = vld [vmem:[#allocation14 + $0x208] sm:$0xff]
        %v1708 = vld [vmem:[#allocation14 + $0x210] sm:$0xff]
        %v1709 = vld [vmem:[#allocation14 + $0x218] sm:$0xff]
        %v1710 = vld [vmem:[#allocation14 + $0x220] sm:$0xff]
        %v1711 = vld [vmem:[#allocation14 + $0x228] sm:$0xff]
        %v1712 = vld [vmem:[#allocation14 + $0x230] sm:$0xff]
        %v1713 = vld [vmem:[#allocation14 + $0x238] sm:$0xff]
        %v1714 = vld [vmem:[#allocation14 + $0x240] sm:$0xff]
        %v1715 = vld [vmem:[#allocation14 + $0x248] sm:$0xff]
        %v1716 = vld [vmem:[#allocation14 + $0x250] sm:$0xff]
        %v1717 = vld [vmem:[#allocation14 + $0x258] sm:$0xff]
        %v1718 = vld [vmem:[#allocation14 + $0x260] sm:$0xff]
        %v1719 = vld [vmem:[#allocation14 + $0x268] sm:$0xff]
        %v1720 = vld [vmem:[#allocation14 + $0x270] sm:$0xff]
        %v1721 = vld [vmem:[#allocation14 + $0x278] sm:$0xff]
        %v1722 = vld [vmem:[#allocation14 + $0x280] sm:$0xff]
        %v1723 = vld [vmem:[#allocation14 + $0x288] sm:$0xff]
        %v1724 = vld [vmem:[#allocation14 + $0x290] sm:$0xff]
        %v1725 = vld [vmem:[#allocation14 + $0x298] sm:$0xff]
        %v1726 = vld [vmem:[#allocation14 + $0x2a0] sm:$0xff]
        %v1727 = vld [vmem:[#allocation14 + $0x2a8] sm:$0xff]
        %v1728 = vld [vmem:[#allocation14 + $0x2b0] sm:$0xff]
        %v1729 = vld [vmem:[#allocation14 + $0x2b8] sm:$0xff]
        %v1730 = vld [vmem:[#allocation14 + $0x2c0] sm:$0xff]
        %v1731 = vld [vmem:[#allocation14 + $0x2c8] sm:$0xff]
        %v1732 = vld [vmem:[#allocation14 + $0x2d0] sm:$0xff]
        %v1733 = vld [vmem:[#allocation14 + $0x2d8] sm:$0xff]
        %v1734 = vld [vmem:[#allocation14 + $0x2e0] sm:$0xff]
        %v1735 = vld [vmem:[#allocation14 + $0x2e8] sm:$0xff]
        %v1736 = vld [vmem:[#allocation14 + $0x2f0] sm:$0xff]
        %v1737 = vld [vmem:[#allocation14 + $0x2f8] sm:$0xff]
        %v1738 = vld [vmem:[#allocation14 + $0x300] sm:$0xff]
        %v1739 = vld [vmem:[#allocation14 + $0x308] sm:$0xff]
        %v1740 = vld [vmem:[#allocation14 + $0x310] sm:$0xff]
        %v1741 = vld [vmem:[#allocation14 + $0x318] sm:$0xff]
        %v1742 = vld [vmem:[#allocation14 + $0x320] sm:$0xff]
        %v1743 = vld [vmem:[#allocation14 + $0x328] sm:$0xff]
        %v1744 = vld [vmem:[#allocation14 + $0x330] sm:$0xff]
        %v1745 = vld [vmem:[#allocation14 + $0x338] sm:$0xff]
        %v1746 = vld [vmem:[#allocation14 + $0x340] sm:$0xff]
        %v1747 = vld [vmem:[#allocation14 + $0x348] sm:$0xff]
        %v1748 = vld [vmem:[#allocation14 + $0x350] sm:$0xff]
        %v1749 = vld [vmem:[#allocation14 + $0x358] sm:$0xff]
        %v1750 = vld [vmem:[#allocation14 + $0x360] sm:$0xff]
        %v1751 = vld [vmem:[#allocation14 + $0x368] sm:$0xff]
        %v1752 = vld [vmem:[#allocation14 + $0x370] sm:$0xff]
        %v1753 = vld [vmem:[#allocation14 + $0x378] sm:$0xff]
        %v1754 = vld [vmem:[#allocation14 + $0x380] sm:$0xff]
        %v1755 = vld [vmem:[#allocation14 + $0x388] sm:$0xff]
        %v1756 = vld [vmem:[#allocation14 + $0x390] sm:$0xff]
        %v1757 = vld [vmem:[#allocation14 + $0x398] sm:$0xff]
        %v1758 = vld [vmem:[#allocation14 + $0x3a0] sm:$0xff]
        %v1759 = vld [vmem:[#allocation14 + $0x3a8] sm:$0xff]
        %v1760 = vld [vmem:[#allocation14 + $0x3b0] sm:$0xff]
        %v1761 = vld [vmem:[#allocation14 + $0x3b8] sm:$0xff]
        %v1762 = vld [vmem:[#allocation14 + $0x3c0] sm:$0xff]
        %v1763 = vld [vmem:[#allocation14 + $0x3c8] sm:$0xff]
        %v1764 = vld [vmem:[#allocation14 + $0x3d0] sm:$0xff]
        %v1765 = vld [vmem:[#allocation14 + $0x3d8] sm:$0xff]
        %v1766 = vld [vmem:[#allocation14 + $0x3e0] sm:$0xff]
        %v1767 = vld [vmem:[#allocation14 + $0x3e8] sm:$0xff]
        %v1768 = vld [vmem:[#allocation14 + $0x3f0] sm:$0xff]
        %v1769 = vld [vmem:[#allocation14 + $0x3f8] sm:$0xff]
        %v1770 = vld [vmem:[#allocation14 + $0x400] sm:$0xff]
        %v1771 = vld [vmem:[#allocation14 + $0x408] sm:$0xff]
        %v1772 = vld [vmem:[#allocation14 + $0x410] sm:$0xff]
        %v1773 = vld [vmem:[#allocation14 + $0x418] sm:$0xff]
        %v1774 = vld [vmem:[#allocation14 + $0x420] sm:$0xff]
        %v1775 = vld [vmem:[#allocation14 + $0x428] sm:$0xff]
        %v1776 = vld [vmem:[#allocation14 + $0x430] sm:$0xff]
        %v1777 = vld [vmem:[#allocation14 + $0x438] sm:$0xff]
        %v1778 = vld [vmem:[#allocation14 + $0x440] sm:$0xff]
        %v1779 = vld [vmem:[#allocation14 + $0x448] sm:$0xff]
        %v1780 = vld [vmem:[#allocation14 + $0x450] sm:$0xff]
        %v1781 = vld [vmem:[#allocation14 + $0x458] sm:$0xff]
        %v1782 = vld [vmem:[#allocation14 + $0x460] sm:$0xff]
        %v1783 = vld [vmem:[#allocation14 + $0x468] sm:$0xff]
        %v1784 = vld [vmem:[#allocation14 + $0x470] sm:$0xff]
        %v1785 = vld [vmem:[#allocation14 + $0x478] sm:$0xff]
        %v1786 = vld [vmem:[#allocation14 + $0x480] sm:$0xff]
        %v1787 = vld [vmem:[#allocation14 + $0x488] sm:$0xff]
        %v1788 = vld [vmem:[#allocation14 + $0x490] sm:$0xff]
        %v1789 = vld [vmem:[#allocation14 + $0x498] sm:$0xff]
        %v1790 = vld [vmem:[#allocation14 + $0x4a0] sm:$0xff]
        %v1791 = vld [vmem:[#allocation14 + $0x4a8] sm:$0xff]
        %v1792 = vld [vmem:[#allocation14 + $0x4b0] sm:$0xff]
        %v1793 = vld [vmem:[#allocation14 + $0x4b8] sm:$0xff]
        %v1794 = vld [vmem:[#allocation14 + $0x4c0] sm:$0xff]
        %v1795 = vld [vmem:[#allocation14 + $0x4c8] sm:$0xff]
        %v1796 = vld [vmem:[#allocation14 + $0x4d0] sm:$0xff]
        %v1797 = vld [vmem:[#allocation14 + $0x4d8] sm:$0xff]
        %v1798 = vld [vmem:[#allocation14 + $0x4e0] sm:$0xff]
        %v1799 = vld [vmem:[#allocation14 + $0x4e8] sm:$0xff]
        %v1800 = vld [vmem:[#allocation14 + $0x4f0] sm:$0xff]
        %v1801 = vld [vmem:[#allocation14 + $0x4f8] sm:$0xff]
        %v1802 = vld [vmem:[#allocation14 + $0x500] sm:$0xff]
        %v1803 = vld [vmem:[#allocation14 + $0x508] sm:$0xff]
        %v1804 = vld [vmem:[#allocation14 + $0x510] sm:$0xff]
        %v1805 = vld [vmem:[#allocation14 + $0x518] sm:$0xff]
        %v1806 = vld [vmem:[#allocation14 + $0x520] sm:$0xff]
        %v1807 = vld [vmem:[#allocation14 + $0x528] sm:$0xff]
        %v1808 = vld [vmem:[#allocation14 + $0x530] sm:$0xff]
        %v1809 = vld [vmem:[#allocation14 + $0x538] sm:$0xff]
        %v1810 = vld [vmem:[#allocation14 + $0x540] sm:$0xff]
        %v1811 = vld [vmem:[#allocation14 + $0x548] sm:$0xff]
        %v1812 = vld [vmem:[#allocation14 + $0x550] sm:$0xff]
        %v1813 = vld [vmem:[#allocation14 + $0x558] sm:$0xff]
        %v1814 = vld [vmem:[#allocation14 + $0x560] sm:$0xff]
        %v1815 = vld [vmem:[#allocation14 + $0x568] sm:$0xff]
        %v1816 = vld [vmem:[#allocation14 + $0x570] sm:$0xff]
        %v1817 = vld [vmem:[#allocation14 + $0x578] sm:$0xff]
        %v1818 = vld [vmem:[#allocation14 + $0x580] sm:$0xff]
        %v1819 = vld [vmem:[#allocation14 + $0x588] sm:$0xff]
        %v1820 = vld [vmem:[#allocation14 + $0x590] sm:$0xff]
        %v1821 = vld [vmem:[#allocation14 + $0x598] sm:$0xff]
        %v1822 = vld [vmem:[#allocation14 + $0x5a0] sm:$0xff]
        %v1823 = vld [vmem:[#allocation14 + $0x5a8] sm:$0xff]
        %v1824 = vld [vmem:[#allocation14 + $0x5b0] sm:$0xff]
        %v1825 = vld [vmem:[#allocation14 + $0x5b8] sm:$0xff]
        %v1826 = vld [vmem:[#allocation14 + $0x5c0] sm:$0xff]
        %v1827 = vld [vmem:[#allocation14 + $0x5c8] sm:$0xff]
        %v1828 = vld [vmem:[#allocation14 + $0x5d0] sm:$0xff]
        %v1829 = vld [vmem:[#allocation14 + $0x5d8] sm:$0xff]
        %v1830 = vld [vmem:[#allocation14 + $0x5e0] sm:$0xff]
        %v1831 = vld [vmem:[#allocation14 + $0x5e8] sm:$0xff]
        %v1832 = vld [vmem:[#allocation14 + $0x5f0] sm:$0xff]
        %v1833 = vld [vmem:[#allocation14 + $0x5f8] sm:$0xff]
        %v1834 = vld [vmem:[#allocation14 + $0x600] sm:$0xff]
        %v1835 = vld [vmem:[#allocation14 + $0x608] sm:$0xff]
        %v1836 = vld [vmem:[#allocation14 + $0x610] sm:$0xff]
        %v1837 = vld [vmem:[#allocation14 + $0x618] sm:$0xff]
        %v1838 = vld [vmem:[#allocation14 + $0x620] sm:$0xff]
        %v1839 = vld [vmem:[#allocation14 + $0x628] sm:$0xff]
        %v1840 = vld [vmem:[#allocation14 + $0x630] sm:$0xff]
        %v1841 = vld [vmem:[#allocation14 + $0x638] sm:$0xff]
        %v1842 = vld [vmem:[#allocation14 + $0x640] sm:$0xff]
        %v1843 = vld [vmem:[#allocation14 + $0x648] sm:$0xff]
        %v1844 = vld [vmem:[#allocation14 + $0x650] sm:$0xff]
        %v1845 = vld [vmem:[#allocation14 + $0x658] sm:$0xff]
        %v1846 = vld [vmem:[#allocation14 + $0x660] sm:$0xff]
        %v1847 = vld [vmem:[#allocation14 + $0x668] sm:$0xff]
        %v1848 = vld [vmem:[#allocation14 + $0x670] sm:$0xff]
        %v1849 = vld [vmem:[#allocation14 + $0x678] sm:$0xff]
        %v1850 = vld [vmem:[#allocation14 + $0x680] sm:$0xff]
        %v1851 = vld [vmem:[#allocation14 + $0x688] sm:$0xff]
        %v1852 = vld [vmem:[#allocation14 + $0x690] sm:$0xff]
        %v1853 = vld [vmem:[#allocation14 + $0x698] sm:$0xff]
        %v1854 = vld [vmem:[#allocation14 + $0x6a0] sm:$0xff]
        %v1855 = vld [vmem:[#allocation14 + $0x6a8] sm:$0xff]
        %v1856 = vld [vmem:[#allocation14 + $0x6b0] sm:$0xff]
        %v1857 = vld [vmem:[#allocation14 + $0x6b8] sm:$0xff]
        %v1858 = vld [vmem:[#allocation14 + $0x6c0] sm:$0xff]
        %v1859 = vld [vmem:[#allocation14 + $0x6c8] sm:$0xff]
        %v1860 = vld [vmem:[#allocation14 + $0x6d0] sm:$0xff]
        %v1861 = vld [vmem:[#allocation14 + $0x6d8] sm:$0xff]
        %v1862 = vld [vmem:[#allocation14 + $0x6e0] sm:$0xff]
        %v1863 = vld [vmem:[#allocation14 + $0x6e8] sm:$0xff]
        %v1864 = vld [vmem:[#allocation14 + $0x6f0] sm:$0xff]
        %v1865 = vld [vmem:[#allocation14 + $0x6f8] sm:$0xff]
        %v1866 = vld [vmem:[#allocation14 + $0x700] sm:$0xff]
        %v1867 = vld [vmem:[#allocation14 + $0x708] sm:$0xff]
        %v1868 = vld [vmem:[#allocation14 + $0x710] sm:$0xff]
        %v1869 = vld [vmem:[#allocation14 + $0x718] sm:$0xff]
        %v1870 = vld [vmem:[#allocation14 + $0x720] sm:$0xff]
        %v1871 = vld [vmem:[#allocation14 + $0x728] sm:$0xff]
        %v1872 = vld [vmem:[#allocation14 + $0x730] sm:$0xff]
        %v1873 = vld [vmem:[#allocation14 + $0x738] sm:$0xff]
        %v1874 = vld [vmem:[#allocation14 + $0x740] sm:$0xff]
        %v1875 = vld [vmem:[#allocation14 + $0x748] sm:$0xff]
        %v1876 = vld [vmem:[#allocation14 + $0x750] sm:$0xff]
        %v1877 = vld [vmem:[#allocation14 + $0x758] sm:$0xff]
        %v1878 = vld [vmem:[#allocation14 + $0x760] sm:$0xff]
        %v1879 = vld [vmem:[#allocation14 + $0x768] sm:$0xff]
        %v1880 = vld [vmem:[#allocation14 + $0x770] sm:$0xff]
        %v1881 = vld [vmem:[#allocation14 + $0x778] sm:$0xff]
        %v1882 = vld [vmem:[#allocation14 + $0x780] sm:$0xff]
        %v1883 = vld [vmem:[#allocation14 + $0x788] sm:$0xff]
        %v1884 = vld [vmem:[#allocation14 + $0x790] sm:$0xff]
        %v1885 = vld [vmem:[#allocation14 + $0x798] sm:$0xff]
        %v1886 = vld [vmem:[#allocation14 + $0x7a0] sm:$0xff]
        %v1887 = vld [vmem:[#allocation14 + $0x7a8] sm:$0xff]
        %v1888 = vld [vmem:[#allocation14 + $0x7b0] sm:$0xff]
        %v1889 = vld [vmem:[#allocation14 + $0x7b8] sm:$0xff]
        %v1890 = vld [vmem:[#allocation14 + $0x7c0] sm:$0xff]
        %v1891 = vld [vmem:[#allocation14 + $0x7c8] sm:$0xff]
        %v1892 = vld [vmem:[#allocation14 + $0x7d0] sm:$0xff]
        %v1893 = vld [vmem:[#allocation14 + $0x7d8] sm:$0xff]
        %v1894 = vld [vmem:[#allocation14 + $0x7e0] sm:$0xff]
        %v1895 = vld [vmem:[#allocation14 + $0x7e8] sm:$0xff]
        %v1896 = vld [vmem:[#allocation14 + $0x7f0] sm:$0xff]
        %v1897 = vld [vmem:[#allocation14 + $0x7f8] sm:$0xff]
        %v1898 = vld [vmem:[#allocation14 + $0x800] sm:$0xff]
        %v1899 = vld [vmem:[#allocation14 + $0x808] sm:$0xff]
        %v1900 = vld [vmem:[#allocation14 + $0x810] sm:$0xff]
        %v1901 = vld [vmem:[#allocation14 + $0x818] sm:$0xff]
        %v1902 = vld [vmem:[#allocation14 + $0x820] sm:$0xff]
        %v1903 = vld [vmem:[#allocation14 + $0x828] sm:$0xff]
        %v1904 = vld [vmem:[#allocation14 + $0x830] sm:$0xff]
        %v1905 = vld [vmem:[#allocation14 + $0x838] sm:$0xff]
        %v1906 = vld [vmem:[#allocation14 + $0x840] sm:$0xff]
        %v1907 = vld [vmem:[#allocation14 + $0x848] sm:$0xff]
        %v1908 = vld [vmem:[#allocation14 + $0x850] sm:$0xff]
        %v1909 = vld [vmem:[#allocation14 + $0x858] sm:$0xff]
        %v1910 = vld [vmem:[#allocation14 + $0x860] sm:$0xff]
        %v1911 = vld [vmem:[#allocation14 + $0x868] sm:$0xff]
        %v1912 = vld [vmem:[#allocation14 + $0x870] sm:$0xff]
        %v1913 = vld [vmem:[#allocation14 + $0x878] sm:$0xff]
        %v1914 = vld [vmem:[#allocation14 + $0x880] sm:$0xff]
        %v1915 = vld [vmem:[#allocation14 + $0x888] sm:$0xff]
        %v1916 = vld [vmem:[#allocation14 + $0x890] sm:$0xff]
        %v1917 = vld [vmem:[#allocation14 + $0x898] sm:$0xff]
        %v1918 = vld [vmem:[#allocation14 + $0x8a0] sm:$0xff]
        %v1919 = vld [vmem:[#allocation14 + $0x8a8] sm:$0xff]
        %v1920 = vld [vmem:[#allocation14 + $0x8b0] sm:$0xff]
        %v1921 = vld [vmem:[#allocation14 + $0x8b8] sm:$0xff]
        %v1922 = vld [vmem:[#allocation14 + $0x8c0] sm:$0xff]
        %v1923 = vld [vmem:[#allocation14 + $0x8c8] sm:$0xff]
        %v1924 = vld [vmem:[#allocation14 + $0x8d0] sm:$0xff]
        %v1925 = vld [vmem:[#allocation14 + $0x8d8] sm:$0xff]
        %v1926 = vld [vmem:[#allocation14 + $0x8e0] sm:$0xff]
        %v1927 = vld [vmem:[#allocation14 + $0x8e8] sm:$0xff]
        %v1928 = vld [vmem:[#allocation14 + $0x8f0] sm:$0xff]
        %v1929 = vld [vmem:[#allocation14 + $0x8f8] sm:$0xff]
        %v1930 = vld [vmem:[#allocation16] sm:$0xf]
        %v1932 = vperm.slane %v1930, 0
        %v1933 = vperm.slane %v1930, 1
        %v1934 = vperm.slane %v1930, 2
        %v1935 = vperm.slane %v1930, 3
        %v2228 = vunpack.c.l.b16 %v1642
        %v2229 = vunpack.c.h.b16 %v1642
        %v2230 = vunpack.c.l.b16 %v1643
        %v2231 = vunpack.c.h.b16 %v1643
        %v2232 = vunpack.c.l.b16 %v1644
        %v2233 = vunpack.c.h.b16 %v1644
        %v2234 = vunpack.c.l.b16 %v1645
        %v2235 = vunpack.c.h.b16 %v1645
        %v2236 = vunpack.c.l.b16 %v1646
        %v2237 = vunpack.c.h.b16 %v1646
        %v2238 = vunpack.c.l.b16 %v1647
        %v2239 = vunpack.c.h.b16 %v1647
        %v2240 = vunpack.c.l.b16 %v1648
        %v2241 = vunpack.c.h.b16 %v1648
        %v2242 = vunpack.c.l.b16 %v1649
        %v2243 = vunpack.c.h.b16 %v1649
        %v2244 = vunpack.c.l.b16 %v1650
        %v2245 = vunpack.c.h.b16 %v1650
        %v2246 = vunpack.c.l.b16 %v1651
        %v2247 = vunpack.c.h.b16 %v1651
        %v2248 = vunpack.c.l.b16 %v1652
        %v2249 = vunpack.c.h.b16 %v1652
        %v2250 = vunpack.c.l.b16 %v1653
        %v2251 = vunpack.c.h.b16 %v1653
        %v2252 = vunpack.c.l.b16 %v1654
        %v2253 = vunpack.c.h.b16 %v1654
        %v2254 = vunpack.c.l.b16 %v1655
        %v2255 = vunpack.c.h.b16 %v1655
        %v2256 = vunpack.c.l.b16 %v1656
        %v2257 = vunpack.c.h.b16 %v1656
        %v2258 = vunpack.c.l.b16 %v1657
        %v2259 = vunpack.c.h.b16 %v1657
        %v2260 = vunpack.c.l.b16 %v1658
        %v2261 = vunpack.c.h.b16 %v1658
        %v2262 = vunpack.c.l.b16 %v1659
        %v2263 = vunpack.c.h.b16 %v1659
        %v2264 = vunpack.c.l.b16 %v1660
        %v2265 = vunpack.c.h.b16 %v1660
        %v2266 = vunpack.c.l.b16 %v1661
        %v2267 = vunpack.c.h.b16 %v1661
        %v2268 = vunpack.c.l.b16 %v1662
        %v2269 = vunpack.c.h.b16 %v1662
        %v2270 = vunpack.c.l.b16 %v1663
        %v2271 = vunpack.c.h.b16 %v1663
        %v2272 = vunpack.c.l.b16 %v1664
        %v2273 = vunpack.c.h.b16 %v1664
        %v2274 = vunpack.c.l.b16 %v1665
        %v2275 = vunpack.c.h.b16 %v1665
        %v2276 = vunpack.c.l.b16 %v1666
        %v2277 = vunpack.c.h.b16 %v1666
        %v2278 = vunpack.c.l.b16 %v1667
        %v2279 = vunpack.c.h.b16 %v1667
        %v2280 = vunpack.c.l.b16 %v1668
        %v2281 = vunpack.c.h.b16 %v1668
        %v2282 = vunpack.c.l.b16 %v1669
        %v2283 = vunpack.c.h.b16 %v1669
        %v2284 = vunpack.c.l.b16 %v1670
        %v2285 = vunpack.c.h.b16 %v1670
        %v2286 = vunpack.c.l.b16 %v1671
        %v2287 = vunpack.c.h.b16 %v1671
        %v2288 = vunpack.c.l.b16 %v1672
        %v2289 = vunpack.c.h.b16 %v1672
        %v2290 = vunpack.c.l.b16 %v1673
        %v2291 = vunpack.c.h.b16 %v1673
        %v2292 = vunpack.c.l.b16 %v1674
        %v2293 = vunpack.c.h.b16 %v1674
        %v2294 = vunpack.c.l.b16 %v1675
        %v2295 = vunpack.c.h.b16 %v1675
        %v2296 = vunpack.c.l.b16 %v1676
        %v2297 = vunpack.c.h.b16 %v1676
        %v2298 = vunpack.c.l.b16 %v1677
        %v2299 = vunpack.c.h.b16 %v1677
        %v2300 = vunpack.c.l.b16 %v1678
        %v2301 = vunpack.c.h.b16 %v1678
        %v2302 = vunpack.c.l.b16 %v1679
        %v2303 = vunpack.c.h.b16 %v1679
        %v2304 = vunpack.c.l.b16 %v1680
        %v2305 = vunpack.c.h.b16 %v1680
        %v2306 = vunpack.c.l.b16 %v1681
        %v2307 = vunpack.c.h.b16 %v1681
        %v2308 = vunpack.c.l.b16 %v1682
        %v2309 = vunpack.c.h.b16 %v1682
        %v2310 = vunpack.c.l.b16 %v1683
        %v2311 = vunpack.c.h.b16 %v1683
        %v2312 = vunpack.c.l.b16 %v1684
        %v2313 = vunpack.c.h.b16 %v1684
        %v2314 = vunpack.c.l.b16 %v1685
        %v2315 = vunpack.c.h.b16 %v1685
        %v2316 = vunpack.c.l.b16 %v1686
        %v2317 = vunpack.c.h.b16 %v1686
        %v2318 = vunpack.c.l.b16 %v1687
        %v2319 = vunpack.c.h.b16 %v1687
        %v2320 = vunpack.c.l.b16 %v1688
        %v2321 = vunpack.c.h.b16 %v1688
        %v2322 = vunpack.c.l.b16 %v1689
        %v2323 = vunpack.c.h.b16 %v1689
        %v2324 = vunpack.c.l.b16 %v1690
        %v2325 = vunpack.c.h.b16 %v1690
        %v2326 = vunpack.c.l.b16 %v1691
        %v2327 = vunpack.c.h.b16 %v1691
        %v2328 = vunpack.c.l.b16 %v1692
        %v2329 = vunpack.c.h.b16 %v1692
        %v2330 = vunpack.c.l.b16 %v1693
        %v2331 = vunpack.c.h.b16 %v1693
        %v2332 = vunpack.c.l.b16 %v1694
        %v2333 = vunpack.c.h.b16 %v1694
        %v2334 = vunpack.c.l.b16 %v1695
        %v2335 = vunpack.c.h.b16 %v1695
        %v2336 = vunpack.c.l.b16 %v1696
        %v2337 = vunpack.c.h.b16 %v1696
        %v2338 = vunpack.c.l.b16 %v1697
        %v2339 = vunpack.c.h.b16 %v1697
        %v2340 = vunpack.c.l.b16 %v1698
        %v2341 = vunpack.c.h.b16 %v1698
        %v2342 = vunpack.c.l.b16 %v1699
        %v2343 = vunpack.c.h.b16 %v1699
        %v2344 = vunpack.c.l.b16 %v1700
        %v2345 = vunpack.c.h.b16 %v1700
        %v2346 = vunpack.c.l.b16 %v1701
        %v2347 = vunpack.c.h.b16 %v1701
        %v2348 = vunpack.c.l.b16 %v1702
        %v2349 = vunpack.c.h.b16 %v1702
        %v2350 = vunpack.c.l.b16 %v1703
        %v2351 = vunpack.c.h.b16 %v1703
        %v2352 = vunpack.c.l.b16 %v1704
        %v2353 = vunpack.c.h.b16 %v1704
        %v2354 = vunpack.c.l.b16 %v1705
        %v2355 = vunpack.c.h.b16 %v1705
        %v2356 = vunpack.c.l.b16 %v1706
        %v2357 = vunpack.c.h.b16 %v1706
        %v2358 = vunpack.c.l.b16 %v1707
        %v2359 = vunpack.c.h.b16 %v1707
        %v2360 = vunpack.c.l.b16 %v1708
        %v2361 = vunpack.c.h.b16 %v1708
        %v2362 = vunpack.c.l.b16 %v1709
        %v2363 = vunpack.c.h.b16 %v1709
        %v2364 = vunpack.c.l.b16 %v1710
        %v2365 = vunpack.c.h.b16 %v1710
        %v2366 = vunpack.c.l.b16 %v1711
        %v2367 = vunpack.c.h.b16 %v1711
        %v2368 = vunpack.c.l.b16 %v1712
        %v2369 = vunpack.c.h.b16 %v1712
        %v2370 = vunpack.c.l.b16 %v1713
        %v2371 = vunpack.c.h.b16 %v1713
        %v2372 = vunpack.c.l.b16 %v1714
        %v2373 = vunpack.c.h.b16 %v1714
        %v2374 = vunpack.c.l.b16 %v1715
        %v2375 = vunpack.c.h.b16 %v1715
        %v2376 = vunpack.c.l.b16 %v1716
        %v2377 = vunpack.c.h.b16 %v1716
        %v2378 = vunpack.c.l.b16 %v1717
        %v2379 = vunpack.c.h.b16 %v1717
        %v2380 = vunpack.c.l.b16 %v1718
        %v2381 = vunpack.c.h.b16 %v1718
        %v2382 = vunpack.c.l.b16 %v1719
        %v2383 = vunpack.c.h.b16 %v1719
        %v2384 = vunpack.c.l.b16 %v1720
        %v2385 = vunpack.c.h.b16 %v1720
        %v2386 = vunpack.c.l.b16 %v1721
        %v2387 = vunpack.c.h.b16 %v1721
        %v2388 = vunpack.c.l.b16 %v1722
        %v2389 = vunpack.c.h.b16 %v1722
        %v2390 = vunpack.c.l.b16 %v1723
        %v2391 = vunpack.c.h.b16 %v1723
        %v2392 = vunpack.c.l.b16 %v1724
        %v2393 = vunpack.c.h.b16 %v1724
        %v2394 = vunpack.c.l.b16 %v1725
        %v2395 = vunpack.c.h.b16 %v1725
        %v2396 = vunpack.c.l.b16 %v1726
        %v2397 = vunpack.c.h.b16 %v1726
        %v2398 = vunpack.c.l.b16 %v1727
        %v2399 = vunpack.c.h.b16 %v1727
        %v2400 = vunpack.c.l.b16 %v1728
        %v2401 = vunpack.c.h.b16 %v1728
        %v2402 = vunpack.c.l.b16 %v1729
        %v2403 = vunpack.c.h.b16 %v1729
        %v2404 = vunpack.c.l.b16 %v1730
        %v2405 = vunpack.c.h.b16 %v1730
        %v2406 = vunpack.c.l.b16 %v1731
        %v2407 = vunpack.c.h.b16 %v1731
        %v2408 = vunpack.c.l.b16 %v1732
        %v2409 = vunpack.c.h.b16 %v1732
        %v2410 = vunpack.c.l.b16 %v1733
        %v2411 = vunpack.c.h.b16 %v1733
        %v2412 = vunpack.c.l.b16 %v1734
        %v2413 = vunpack.c.h.b16 %v1734
        %v2414 = vunpack.c.l.b16 %v1735
        %v2415 = vunpack.c.h.b16 %v1735
        %v2416 = vunpack.c.l.b16 %v1736
        %v2417 = vunpack.c.h.b16 %v1736
        %v2418 = vunpack.c.l.b16 %v1737
        %v2419 = vunpack.c.h.b16 %v1737
        %v2420 = vunpack.c.l.b16 %v1738
        %v2421 = vunpack.c.h.b16 %v1738
        %v2422 = vunpack.c.l.b16 %v1739
        %v2423 = vunpack.c.h.b16 %v1739
        %v2424 = vunpack.c.l.b16 %v1740
        %v2425 = vunpack.c.h.b16 %v1740
        %v2426 = vunpack.c.l.b16 %v1741
        %v2427 = vunpack.c.h.b16 %v1741
        %v2428 = vunpack.c.l.b16 %v1742
        %v2429 = vunpack.c.h.b16 %v1742
        %v2430 = vunpack.c.l.b16 %v1743
        %v2431 = vunpack.c.h.b16 %v1743
        %v2432 = vunpack.c.l.b16 %v1744
        %v2433 = vunpack.c.h.b16 %v1744
        %v2434 = vunpack.c.l.b16 %v1745
        %v2435 = vunpack.c.h.b16 %v1745
        %v2436 = vunpack.c.l.b16 %v1746
        %v2437 = vunpack.c.h.b16 %v1746
        %v2438 = vunpack.c.l.b16 %v1747
        %v2439 = vunpack.c.h.b16 %v1747
        %v2440 = vunpack.c.l.b16 %v1748
        %v2441 = vunpack.c.h.b16 %v1748
        %v2442 = vunpack.c.l.b16 %v1749
        %v2443 = vunpack.c.h.b16 %v1749
        %v2444 = vunpack.c.l.b16 %v1750
        %v2445 = vunpack.c.h.b16 %v1750
        %v2446 = vunpack.c.l.b16 %v1751
        %v2447 = vunpack.c.h.b16 %v1751
        %v2448 = vunpack.c.l.b16 %v1752
        %v2449 = vunpack.c.h.b16 %v1752
        %v2450 = vunpack.c.l.b16 %v1753
        %v2451 = vunpack.c.h.b16 %v1753
        %v2452 = vunpack.c.l.b16 %v1754
        %v2453 = vunpack.c.h.b16 %v1754
        %v2454 = vunpack.c.l.b16 %v1755
        %v2455 = vunpack.c.h.b16 %v1755
        %v2456 = vunpack.c.l.b16 %v1756
        %v2457 = vunpack.c.h.b16 %v1756
        %v2458 = vunpack.c.l.b16 %v1757
        %v2459 = vunpack.c.h.b16 %v1757
        %v2460 = vunpack.c.l.b16 %v1758
        %v2461 = vunpack.c.h.b16 %v1758
        %v2462 = vunpack.c.l.b16 %v1759
        %v2463 = vunpack.c.h.b16 %v1759
        %v2464 = vunpack.c.l.b16 %v1760
        %v2465 = vunpack.c.h.b16 %v1760
        %v2466 = vunpack.c.l.b16 %v1761
        %v2467 = vunpack.c.h.b16 %v1761
        %v2468 = vunpack.c.l.b16 %v1762
        %v2469 = vunpack.c.h.b16 %v1762
        %v2470 = vunpack.c.l.b16 %v1763
        %v2471 = vunpack.c.h.b16 %v1763
        %v2472 = vunpack.c.l.b16 %v1764
        %v2473 = vunpack.c.h.b16 %v1764
        %v2474 = vunpack.c.l.b16 %v1765
        %v2475 = vunpack.c.h.b16 %v1765
        %v2476 = vunpack.c.l.b16 %v1766
        %v2477 = vunpack.c.h.b16 %v1766
        %v2478 = vunpack.c.l.b16 %v1767
        %v2479 = vunpack.c.h.b16 %v1767
        %v2480 = vunpack.c.l.b16 %v1768
        %v2481 = vunpack.c.h.b16 %v1768
        %v2482 = vunpack.c.l.b16 %v1769
        %v2483 = vunpack.c.h.b16 %v1769
        %v2484 = vunpack.c.l.b16 %v1770
        %v2485 = vunpack.c.h.b16 %v1770
        %v2486 = vunpack.c.l.b16 %v1771
        %v2487 = vunpack.c.h.b16 %v1771
        %v2488 = vunpack.c.l.b16 %v1772
        %v2489 = vunpack.c.h.b16 %v1772
        %v2490 = vunpack.c.l.b16 %v1773
        %v2491 = vunpack.c.h.b16 %v1773
        %v2492 = vunpack.c.l.b16 %v1774
        %v2493 = vunpack.c.h.b16 %v1774
        %v2494 = vunpack.c.l.b16 %v1775
        %v2495 = vunpack.c.h.b16 %v1775
        %v2496 = vunpack.c.l.b16 %v1776
        %v2497 = vunpack.c.h.b16 %v1776
        %v2498 = vunpack.c.l.b16 %v1777
        %v2499 = vunpack.c.h.b16 %v1777
        %v2500 = vunpack.c.l.b16 %v1778
        %v2501 = vunpack.c.h.b16 %v1778
        %v2502 = vunpack.c.l.b16 %v1779
        %v2503 = vunpack.c.h.b16 %v1779
        %v2504 = vunpack.c.l.b16 %v1780
        %v2505 = vunpack.c.h.b16 %v1780
        %v2506 = vunpack.c.l.b16 %v1781
        %v2507 = vunpack.c.h.b16 %v1781
        %v2508 = vunpack.c.l.b16 %v1782
        %v2509 = vunpack.c.h.b16 %v1782
        %v2510 = vunpack.c.l.b16 %v1783
        %v2511 = vunpack.c.h.b16 %v1783
        %v2512 = vunpack.c.l.b16 %v1784
        %v2513 = vunpack.c.h.b16 %v1784
        %v2514 = vunpack.c.l.b16 %v1785
        %v2515 = vunpack.c.h.b16 %v1785
        %v2516 = vunpack.c.l.b16 %v1786
        %v2517 = vunpack.c.h.b16 %v1786
        %v2518 = vunpack.c.l.b16 %v1787
        %v2519 = vunpack.c.h.b16 %v1787
        %v2520 = vunpack.c.l.b16 %v1788
        %v2521 = vunpack.c.h.b16 %v1788
        %v2522 = vunpack.c.l.b16 %v1789
        %v2523 = vunpack.c.h.b16 %v1789
        %v2524 = vunpack.c.l.b16 %v1790
        %v2525 = vunpack.c.h.b16 %v1790
        %v2526 = vunpack.c.l.b16 %v1791
        %v2527 = vunpack.c.h.b16 %v1791
        %v2528 = vunpack.c.l.b16 %v1792
        %v2529 = vunpack.c.h.b16 %v1792
        %v2530 = vunpack.c.l.b16 %v1793
        %v2531 = vunpack.c.h.b16 %v1793
        %v2532 = vunpack.c.l.b16 %v1794
        %v2533 = vunpack.c.h.b16 %v1794
        %v2534 = vunpack.c.l.b16 %v1795
        %v2535 = vunpack.c.h.b16 %v1795
        %v2536 = vunpack.c.l.b16 %v1796
        %v2537 = vunpack.c.h.b16 %v1796
        %v2538 = vunpack.c.l.b16 %v1797
        %v2539 = vunpack.c.h.b16 %v1797
        %v2540 = vunpack.c.l.b16 %v1798
        %v2541 = vunpack.c.h.b16 %v1798
        %v2542 = vunpack.c.l.b16 %v1799
        %v2543 = vunpack.c.h.b16 %v1799
        %v2544 = vunpack.c.l.b16 %v1800
        %v2545 = vunpack.c.h.b16 %v1800
        %v2546 = vunpack.c.l.b16 %v1801
        %v2547 = vunpack.c.h.b16 %v1801
        %v2548 = vunpack.c.l.b16 %v1802
        %v2549 = vunpack.c.h.b16 %v1802
        %v2550 = vunpack.c.l.b16 %v1803
        %v2551 = vunpack.c.h.b16 %v1803
        %v2552 = vunpack.c.l.b16 %v1804
        %v2553 = vunpack.c.h.b16 %v1804
        %v2554 = vunpack.c.l.b16 %v1805
        %v2555 = vunpack.c.h.b16 %v1805
        %v2556 = vunpack.c.l.b16 %v1806
        %v2557 = vunpack.c.h.b16 %v1806
        %v2558 = vunpack.c.l.b16 %v1807
        %v2559 = vunpack.c.h.b16 %v1807
        %v2560 = vunpack.c.l.b16 %v1808
        %v2561 = vunpack.c.h.b16 %v1808
        %v2562 = vunpack.c.l.b16 %v1809
        %v2563 = vunpack.c.h.b16 %v1809
        %v2564 = vunpack.c.l.b16 %v1810
        %v2565 = vunpack.c.h.b16 %v1810
        %v2566 = vunpack.c.l.b16 %v1811
        %v2567 = vunpack.c.h.b16 %v1811
        %v2568 = vunpack.c.l.b16 %v1812
        %v2569 = vunpack.c.h.b16 %v1812
        %v2570 = vunpack.c.l.b16 %v1813
        %v2571 = vunpack.c.h.b16 %v1813
        %v2572 = vunpack.c.l.b16 %v1814
        %v2573 = vunpack.c.h.b16 %v1814
        %v2574 = vunpack.c.l.b16 %v1815
        %v2575 = vunpack.c.h.b16 %v1815
        %v2576 = vunpack.c.l.b16 %v1816
        %v2577 = vunpack.c.h.b16 %v1816
        %v2578 = vunpack.c.l.b16 %v1817
        %v2579 = vunpack.c.h.b16 %v1817
        %v2580 = vunpack.c.l.b16 %v1818
        %v2581 = vunpack.c.h.b16 %v1818
        %v2582 = vunpack.c.l.b16 %v1819
        %v2583 = vunpack.c.h.b16 %v1819
        %v2584 = vunpack.c.l.b16 %v1820
        %v2585 = vunpack.c.h.b16 %v1820
        %v2586 = vunpack.c.l.b16 %v1821
        %v2587 = vunpack.c.h.b16 %v1821
        %v2588 = vunpack.c.l.b16 %v1822
        %v2589 = vunpack.c.h.b16 %v1822
        %v2590 = vunpack.c.l.b16 %v1823
        %v2591 = vunpack.c.h.b16 %v1823
        %v2592 = vunpack.c.l.b16 %v1824
        %v2593 = vunpack.c.h.b16 %v1824
        %v2594 = vunpack.c.l.b16 %v1825
        %v2595 = vunpack.c.h.b16 %v1825
        %v2596 = vunpack.c.l.b16 %v1826
        %v2597 = vunpack.c.h.b16 %v1826
        %v2598 = vunpack.c.l.b16 %v1827
        %v2599 = vunpack.c.h.b16 %v1827
        %v2600 = vunpack.c.l.b16 %v1828
        %v2601 = vunpack.c.h.b16 %v1828
        %v2602 = vunpack.c.l.b16 %v1829
        %v2603 = vunpack.c.h.b16 %v1829
        %v2604 = vunpack.c.l.b16 %v1830
        %v2605 = vunpack.c.h.b16 %v1830
        %v2606 = vunpack.c.l.b16 %v1831
        %v2607 = vunpack.c.h.b16 %v1831
        %v2608 = vunpack.c.l.b16 %v1832
        %v2609 = vunpack.c.h.b16 %v1832
        %v2610 = vunpack.c.l.b16 %v1833
        %v2611 = vunpack.c.h.b16 %v1833
        %v2612 = vunpack.c.l.b16 %v1834
        %v2613 = vunpack.c.h.b16 %v1834
        %v2614 = vunpack.c.l.b16 %v1835
        %v2615 = vunpack.c.h.b16 %v1835
        %v2616 = vunpack.c.l.b16 %v1836
        %v2617 = vunpack.c.h.b16 %v1836
        %v2618 = vunpack.c.l.b16 %v1837
        %v2619 = vunpack.c.h.b16 %v1837
        %v2620 = vunpack.c.l.b16 %v1838
        %v2621 = vunpack.c.h.b16 %v1838
        %v2622 = vunpack.c.l.b16 %v1839
        %v2623 = vunpack.c.h.b16 %v1839
        %v2624 = vunpack.c.l.b16 %v1840
        %v2625 = vunpack.c.h.b16 %v1840
        %v2626 = vunpack.c.l.b16 %v1841
        %v2627 = vunpack.c.h.b16 %v1841
        %v2628 = vunpack.c.l.b16 %v1842
        %v2629 = vunpack.c.h.b16 %v1842
        %v2630 = vunpack.c.l.b16 %v1843
        %v2631 = vunpack.c.h.b16 %v1843
        %v2632 = vunpack.c.l.b16 %v1844
        %v2633 = vunpack.c.h.b16 %v1844
        %v2634 = vunpack.c.l.b16 %v1845
        %v2635 = vunpack.c.h.b16 %v1845
        %v2636 = vunpack.c.l.b16 %v1846
        %v2637 = vunpack.c.h.b16 %v1846
        %v2638 = vunpack.c.l.b16 %v1847
        %v2639 = vunpack.c.h.b16 %v1847
        %v2640 = vunpack.c.l.b16 %v1848
        %v2641 = vunpack.c.h.b16 %v1848
        %v2642 = vunpack.c.l.b16 %v1849
        %v2643 = vunpack.c.h.b16 %v1849
        %v2644 = vunpack.c.l.b16 %v1850
        %v2645 = vunpack.c.h.b16 %v1850
        %v2646 = vunpack.c.l.b16 %v1851
        %v2647 = vunpack.c.h.b16 %v1851
        %v2648 = vunpack.c.l.b16 %v1852
        %v2649 = vunpack.c.h.b16 %v1852
        %v2650 = vunpack.c.l.b16 %v1853
        %v2651 = vunpack.c.h.b16 %v1853
        %v2652 = vunpack.c.l.b16 %v1854
        %v2653 = vunpack.c.h.b16 %v1854
        %v2654 = vunpack.c.l.b16 %v1855
        %v2655 = vunpack.c.h.b16 %v1855
        %v2656 = vunpack.c.l.b16 %v1856
        %v2657 = vunpack.c.h.b16 %v1856
        %v2658 = vunpack.c.l.b16 %v1857
        %v2659 = vunpack.c.h.b16 %v1857
        %v2660 = vunpack.c.l.b16 %v1858
        %v2661 = vunpack.c.h.b16 %v1858
        %v2662 = vunpack.c.l.b16 %v1859
        %v2663 = vunpack.c.h.b16 %v1859
        %v2664 = vunpack.c.l.b16 %v1860
        %v2665 = vunpack.c.h.b16 %v1860
        %v2666 = vunpack.c.l.b16 %v1861
        %v2667 = vunpack.c.h.b16 %v1861
        %v2668 = vunpack.c.l.b16 %v1862
        %v2669 = vunpack.c.h.b16 %v1862
        %v2670 = vunpack.c.l.b16 %v1863
        %v2671 = vunpack.c.h.b16 %v1863
        %v2672 = vunpack.c.l.b16 %v1864
        %v2673 = vunpack.c.h.b16 %v1864
        %v2674 = vunpack.c.l.b16 %v1865
        %v2675 = vunpack.c.h.b16 %v1865
        %v2676 = vunpack.c.l.b16 %v1866
        %v2677 = vunpack.c.h.b16 %v1866
        %v2678 = vunpack.c.l.b16 %v1867
        %v2679 = vunpack.c.h.b16 %v1867
        %v2680 = vunpack.c.l.b16 %v1868
        %v2681 = vunpack.c.h.b16 %v1868
        %v2682 = vunpack.c.l.b16 %v1869
        %v2683 = vunpack.c.h.b16 %v1869
        %v2684 = vunpack.c.l.b16 %v1870
        %v2685 = vunpack.c.h.b16 %v1870
        %v2686 = vunpack.c.l.b16 %v1871
        %v2687 = vunpack.c.h.b16 %v1871
        %v2688 = vunpack.c.l.b16 %v1872
        %v2689 = vunpack.c.h.b16 %v1872
        %v2690 = vunpack.c.l.b16 %v1873
        %v2691 = vunpack.c.h.b16 %v1873
        %v2692 = vunpack.c.l.b16 %v1874
        %v2693 = vunpack.c.h.b16 %v1874
        %v2694 = vunpack.c.l.b16 %v1875
        %v2695 = vunpack.c.h.b16 %v1875
        %v2696 = vunpack.c.l.b16 %v1876
        %v2697 = vunpack.c.h.b16 %v1876
        %v2698 = vunpack.c.l.b16 %v1877
        %v2699 = vunpack.c.h.b16 %v1877
        %v2700 = vunpack.c.l.b16 %v1878
        %v2701 = vunpack.c.h.b16 %v1878
        %v2702 = vunpack.c.l.b16 %v1879
        %v2703 = vunpack.c.h.b16 %v1879
        %v2704 = vunpack.c.l.b16 %v1880
        %v2705 = vunpack.c.h.b16 %v1880
        %v2706 = vunpack.c.l.b16 %v1881
        %v2707 = vunpack.c.h.b16 %v1881
        %v2708 = vunpack.c.l.b16 %v1882
        %v2709 = vunpack.c.h.b16 %v1882
        %v2710 = vunpack.c.l.b16 %v1883
        %v2711 = vunpack.c.h.b16 %v1883
        %v2712 = vunpack.c.l.b16 %v1884
        %v2713 = vunpack.c.h.b16 %v1884
        %v2714 = vunpack.c.l.b16 %v1885
        %v2715 = vunpack.c.h.b16 %v1885
        %v2716 = vunpack.c.l.b16 %v1886
        %v2717 = vunpack.c.h.b16 %v1886
        %v2718 = vunpack.c.l.b16 %v1887
        %v2719 = vunpack.c.h.b16 %v1887
        %v2720 = vunpack.c.l.b16 %v1888
        %v2721 = vunpack.c.h.b16 %v1888
        %v2722 = vunpack.c.l.b16 %v1889
        %v2723 = vunpack.c.h.b16 %v1889
        %v2724 = vunpack.c.l.b16 %v1890
        %v2725 = vunpack.c.h.b16 %v1890
        %v2726 = vunpack.c.l.b16 %v1891
        %v2727 = vunpack.c.h.b16 %v1891
        %v2728 = vunpack.c.l.b16 %v1892
        %v2729 = vunpack.c.h.b16 %v1892
        %v2730 = vunpack.c.l.b16 %v1893
        %v2731 = vunpack.c.h.b16 %v1893
        %v2732 = vunpack.c.l.b16 %v1894
        %v2733 = vunpack.c.h.b16 %v1894
        %v2734 = vunpack.c.l.b16 %v1895
        %v2735 = vunpack.c.h.b16 %v1895
        %v2736 = vunpack.c.l.b16 %v1896
        %v2737 = vunpack.c.h.b16 %v1896
        %v2738 = vunpack.c.l.b16 %v1897
        %v2739 = vunpack.c.h.b16 %v1897
        %v2740 = vunpack.c.l.b16 %v1898
        %v2741 = vunpack.c.h.b16 %v1898
        %v2742 = vunpack.c.l.b16 %v1899
        %v2743 = vunpack.c.h.b16 %v1899
        %v2744 = vunpack.c.l.b16 %v1900
        %v2745 = vunpack.c.h.b16 %v1900
        %v2746 = vunpack.c.l.b16 %v1901
        %v2747 = vunpack.c.h.b16 %v1901
        %v2748 = vunpack.c.l.b16 %v1902
        %v2749 = vunpack.c.h.b16 %v1902
        %v2750 = vunpack.c.l.b16 %v1903
        %v2751 = vunpack.c.h.b16 %v1903
        %v2752 = vunpack.c.l.b16 %v1904
        %v2753 = vunpack.c.h.b16 %v1904
        %v2754 = vunpack.c.l.b16 %v1905
        %v2755 = vunpack.c.h.b16 %v1905
        %v2756 = vunpack.c.l.b16 %v1906
        %v2757 = vunpack.c.h.b16 %v1906
        %v2758 = vunpack.c.l.b16 %v1907
        %v2759 = vunpack.c.h.b16 %v1907
        %v2760 = vunpack.c.l.b16 %v1908
        %v2761 = vunpack.c.h.b16 %v1908
        %v2762 = vunpack.c.l.b16 %v1909
        %v2763 = vunpack.c.h.b16 %v1909
        %v2764 = vunpack.c.l.b16 %v1910
        %v2765 = vunpack.c.h.b16 %v1910
        %v2766 = vunpack.c.l.b16 %v1911
        %v2767 = vunpack.c.h.b16 %v1911
        %v2768 = vunpack.c.l.b16 %v1912
        %v2769 = vunpack.c.h.b16 %v1912
        %v2770 = vunpack.c.l.b16 %v1913
        %v2771 = vunpack.c.h.b16 %v1913
        %v2772 = vunpack.c.l.b16 %v1914
        %v2773 = vunpack.c.h.b16 %v1914
        %v2774 = vunpack.c.l.b16 %v1915
        %v2775 = vunpack.c.h.b16 %v1915
        %v2776 = vunpack.c.l.b16 %v1916
        %v2777 = vunpack.c.h.b16 %v1916
        %v2778 = vunpack.c.l.b16 %v1917
        %v2779 = vunpack.c.h.b16 %v1917
        %v2780 = vunpack.c.l.b16 %v1918
        %v2781 = vunpack.c.h.b16 %v1918
        %v2782 = vunpack.c.l.b16 %v1919
        %v2783 = vunpack.c.h.b16 %v1919
        %v2784 = vunpack.c.l.b16 %v1920
        %v2785 = vunpack.c.h.b16 %v1920
        %v2786 = vunpack.c.l.b16 %v1921
        %v2787 = vunpack.c.h.b16 %v1921
        %v2788 = vunpack.c.l.b16 %v1922
        %v2789 = vunpack.c.h.b16 %v1922
        %v2790 = vunpack.c.l.b16 %v1923
        %v2791 = vunpack.c.h.b16 %v1923
        %v2792 = vunpack.c.l.b16 %v1924
        %v2793 = vunpack.c.h.b16 %v1924
        %v2794 = vunpack.c.l.b16 %v1925
        %v2795 = vunpack.c.h.b16 %v1925
        %v2796 = vunpack.c.l.b16 %v1926
        %v2797 = vunpack.c.h.b16 %v1926
        %v2798 = vunpack.c.l.b16 %v1927
        %v2799 = vunpack.c.h.b16 %v1927
        %v2800 = vunpack.c.l.b16 %v1928
        %v2801 = vunpack.c.h.b16 %v1928
        %v2802 = vunpack.c.l.b16 %v1929
        %v2803 = vunpack.c.h.b16 %v1929
        %v2804 = vpack.c.b16 %v2232, %v2228
        %v2805 = vpack.c.b16 %v2233, %v2229
        %v2806 = vpack.c.b16 %v2234, %v2230
        %v2807 = vpack.c.b16 %v2235, %v2231
        %v2808 = vpack.c.b16 %v2240, %v2236
        %v2809 = vpack.c.b16 %v2241, %v2237
        %v2810 = vpack.c.b16 %v2242, %v2238
        %v2811 = vpack.c.b16 %v2243, %v2239
        %v2812 = vpack.c.b16 %v2248, %v2244
        %v2813 = vpack.c.b16 %v2249, %v2245
        %v2814 = vpack.c.b16 %v2250, %v2246
        %v2815 = vpack.c.b16 %v2251, %v2247
        %v2816 = vpack.c.b16 %v2256, %v2252
        %v2817 = vpack.c.b16 %v2257, %v2253
        %v2818 = vpack.c.b16 %v2258, %v2254
        %v2819 = vpack.c.b16 %v2259, %v2255
        %v2820 = vpack.c.b16 %v2264, %v2260
        %v2821 = vpack.c.b16 %v2265, %v2261
        %v2822 = vpack.c.b16 %v2266, %v2262
        %v2823 = vpack.c.b16 %v2267, %v2263
        %v2824 = vpack.c.b16 %v2272, %v2268
        %v2825 = vpack.c.b16 %v2273, %v2269
        %v2826 = vpack.c.b16 %v2274, %v2270
        %v2827 = vpack.c.b16 %v2275, %v2271
        %v2828 = vpack.c.b16 %v2280, %v2276
        %v2829 = vpack.c.b16 %v2281, %v2277
        %v2830 = vpack.c.b16 %v2282, %v2278
        %v2831 = vpack.c.b16 %v2283, %v2279
        %v2832 = vpack.c.b16 %v2288, %v2284
        %v2833 = vpack.c.b16 %v2289, %v2285
        %v2834 = vpack.c.b16 %v2290, %v2286
        %v2835 = vpack.c.b16 %v2291, %v2287
        %v2836 = vpack.c.b16 %v2296, %v2292
        %v2837 = vpack.c.b16 %v2297, %v2293
        %v2838 = vpack.c.b16 %v2298, %v2294
        %v2839 = vpack.c.b16 %v2299, %v2295
        %v2840 = vpack.c.b16 %v2304, %v2300
        %v2841 = vpack.c.b16 %v2305, %v2301
        %v2842 = vpack.c.b16 %v2306, %v2302
        %v2843 = vpack.c.b16 %v2307, %v2303
        %v2844 = vpack.c.b16 %v2312, %v2308
        %v2845 = vpack.c.b16 %v2313, %v2309
        %v2846 = vpack.c.b16 %v2314, %v2310
        %v2847 = vpack.c.b16 %v2315, %v2311
        %v2848 = vpack.c.b16 %v2320, %v2316
        %v2849 = vpack.c.b16 %v2321, %v2317
        %v2850 = vpack.c.b16 %v2322, %v2318
        %v2851 = vpack.c.b16 %v2323, %v2319
        %v2852 = vpack.c.b16 %v2328, %v2324
        %v2853 = vpack.c.b16 %v2329, %v2325
        %v2854 = vpack.c.b16 %v2330, %v2326
        %v2855 = vpack.c.b16 %v2331, %v2327
        %v2856 = vpack.c.b16 %v2336, %v2332
        %v2857 = vpack.c.b16 %v2337, %v2333
        %v2858 = vpack.c.b16 %v2338, %v2334
        %v2859 = vpack.c.b16 %v2339, %v2335
        %v2860 = vpack.c.b16 %v2344, %v2340
        %v2861 = vpack.c.b16 %v2345, %v2341
        %v2862 = vpack.c.b16 %v2346, %v2342
        %v2863 = vpack.c.b16 %v2347, %v2343
        %v2864 = vpack.c.b16 %v2352, %v2348
        %v2865 = vpack.c.b16 %v2353, %v2349
        %v2866 = vpack.c.b16 %v2354, %v2350
        %v2867 = vpack.c.b16 %v2355, %v2351
        %v2868 = vpack.c.b16 %v2360, %v2356
        %v2869 = vpack.c.b16 %v2361, %v2357
        %v2870 = vpack.c.b16 %v2362, %v2358
        %v2871 = vpack.c.b16 %v2363, %v2359
        %v2872 = vpack.c.b16 %v2368, %v2364
        %v2873 = vpack.c.b16 %v2369, %v2365
        %v2874 = vpack.c.b16 %v2370, %v2366
        %v2875 = vpack.c.b16 %v2371, %v2367
        %v2876 = vpack.c.b16 %v2376, %v2372
        %v2877 = vpack.c.b16 %v2377, %v2373
        %v2878 = vpack.c.b16 %v2378, %v2374
        %v2879 = vpack.c.b16 %v2379, %v2375
        %v2880 = vpack.c.b16 %v2384, %v2380
        %v2881 = vpack.c.b16 %v2385, %v2381
        %v2882 = vpack.c.b16 %v2386, %v2382
        %v2883 = vpack.c.b16 %v2387, %v2383
        %v2884 = vpack.c.b16 %v2392, %v2388
        %v2885 = vpack.c.b16 %v2393, %v2389
        %v2886 = vpack.c.b16 %v2394, %v2390
        %v2887 = vpack.c.b16 %v2395, %v2391
        %v2888 = vpack.c.b16 %v2400, %v2396
        %v2889 = vpack.c.b16 %v2401, %v2397
        %v2890 = vpack.c.b16 %v2402, %v2398
        %v2891 = vpack.c.b16 %v2403, %v2399
        %v2892 = vpack.c.b16 %v2408, %v2404
        %v2893 = vpack.c.b16 %v2409, %v2405
        %v2894 = vpack.c.b16 %v2410, %v2406
        %v2895 = vpack.c.b16 %v2411, %v2407
        %v2896 = vpack.c.b16 %v2416, %v2412
        %v2897 = vpack.c.b16 %v2417, %v2413
        %v2898 = vpack.c.b16 %v2418, %v2414
        %v2899 = vpack.c.b16 %v2419, %v2415
        %v2900 = vpack.c.b16 %v2424, %v2420
        %v2901 = vpack.c.b16 %v2425, %v2421
        %v2902 = vpack.c.b16 %v2426, %v2422
        %v2903 = vpack.c.b16 %v2427, %v2423
        %v2904 = vpack.c.b16 %v2432, %v2428
        %v2905 = vpack.c.b16 %v2433, %v2429
        %v2906 = vpack.c.b16 %v2434, %v2430
        %v2907 = vpack.c.b16 %v2435, %v2431
        %v2908 = vpack.c.b16 %v2440, %v2436
        %v2909 = vpack.c.b16 %v2441, %v2437
        %v2910 = vpack.c.b16 %v2442, %v2438
        %v2911 = vpack.c.b16 %v2443, %v2439
        %v2912 = vpack.c.b16 %v2448, %v2444
        %v2913 = vpack.c.b16 %v2449, %v2445
        %v2914 = vpack.c.b16 %v2450, %v2446
        %v2915 = vpack.c.b16 %v2451, %v2447
        %v2916 = vpack.c.b16 %v2456, %v2452
        %v2917 = vpack.c.b16 %v2457, %v2453
        %v2918 = vpack.c.b16 %v2458, %v2454
        %v2919 = vpack.c.b16 %v2459, %v2455
        %v2920 = vpack.c.b16 %v2464, %v2460
        %v2921 = vpack.c.b16 %v2465, %v2461
        %v2922 = vpack.c.b16 %v2466, %v2462
        %v2923 = vpack.c.b16 %v2467, %v2463
        %v2924 = vpack.c.b16 %v2472, %v2468
        %v2925 = vpack.c.b16 %v2473, %v2469
        %v2926 = vpack.c.b16 %v2474, %v2470
        %v2927 = vpack.c.b16 %v2475, %v2471
        %v2928 = vpack.c.b16 %v2480, %v2476
        %v2929 = vpack.c.b16 %v2481, %v2477
        %v2930 = vpack.c.b16 %v2482, %v2478
        %v2931 = vpack.c.b16 %v2483, %v2479
        %v2932 = vpack.c.b16 %v2488, %v2484
        %v2933 = vpack.c.b16 %v2489, %v2485
        %v2934 = vpack.c.b16 %v2490, %v2486
        %v2935 = vpack.c.b16 %v2491, %v2487
        %v2936 = vpack.c.b16 %v2496, %v2492
        %v2937 = vpack.c.b16 %v2497, %v2493
        %v2938 = vpack.c.b16 %v2498, %v2494
        %v2939 = vpack.c.b16 %v2499, %v2495
        %v2940 = vpack.c.b16 %v2504, %v2500
        %v2941 = vpack.c.b16 %v2505, %v2501
        %v2942 = vpack.c.b16 %v2506, %v2502
        %v2943 = vpack.c.b16 %v2507, %v2503
        %v2944 = vpack.c.b16 %v2512, %v2508
        %v2945 = vpack.c.b16 %v2513, %v2509
        %v2946 = vpack.c.b16 %v2514, %v2510
        %v2947 = vpack.c.b16 %v2515, %v2511
        %v2948 = vpack.c.b16 %v2520, %v2516
        %v2949 = vpack.c.b16 %v2521, %v2517
        %v2950 = vpack.c.b16 %v2522, %v2518
        %v2951 = vpack.c.b16 %v2523, %v2519
        %v2952 = vpack.c.b16 %v2528, %v2524
        %v2953 = vpack.c.b16 %v2529, %v2525
        %v2954 = vpack.c.b16 %v2530, %v2526
        %v2955 = vpack.c.b16 %v2531, %v2527
        %v2956 = vpack.c.b16 %v2536, %v2532
        %v2957 = vpack.c.b16 %v2537, %v2533
        %v2958 = vpack.c.b16 %v2538, %v2534
        %v2959 = vpack.c.b16 %v2539, %v2535
        %v2960 = vpack.c.b16 %v2544, %v2540
        %v2961 = vpack.c.b16 %v2545, %v2541
        %v2962 = vpack.c.b16 %v2546, %v2542
        %v2963 = vpack.c.b16 %v2547, %v2543
        %v2964 = vpack.c.b16 %v2552, %v2548
        %v2965 = vpack.c.b16 %v2553, %v2549
        %v2966 = vpack.c.b16 %v2554, %v2550
        %v2967 = vpack.c.b16 %v2555, %v2551
        %v2968 = vpack.c.b16 %v2560, %v2556
        %v2969 = vpack.c.b16 %v2561, %v2557
        %v2970 = vpack.c.b16 %v2562, %v2558
        %v2971 = vpack.c.b16 %v2563, %v2559
        %v2972 = vpack.c.b16 %v2568, %v2564
        %v2973 = vpack.c.b16 %v2569, %v2565
        %v2974 = vpack.c.b16 %v2570, %v2566
        %v2975 = vpack.c.b16 %v2571, %v2567
        %v2976 = vpack.c.b16 %v2576, %v2572
        %v2977 = vpack.c.b16 %v2577, %v2573
        %v2978 = vpack.c.b16 %v2578, %v2574
        %v2979 = vpack.c.b16 %v2579, %v2575
        %v2980 = vpack.c.b16 %v2584, %v2580
        %v2981 = vpack.c.b16 %v2585, %v2581
        %v2982 = vpack.c.b16 %v2586, %v2582
        %v2983 = vpack.c.b16 %v2587, %v2583
        %v2984 = vpack.c.b16 %v2592, %v2588
        %v2985 = vpack.c.b16 %v2593, %v2589
        %v2986 = vpack.c.b16 %v2594, %v2590
        %v2987 = vpack.c.b16 %v2595, %v2591
        %v2988 = vpack.c.b16 %v2600, %v2596
        %v2989 = vpack.c.b16 %v2601, %v2597
        %v2990 = vpack.c.b16 %v2602, %v2598
        %v2991 = vpack.c.b16 %v2603, %v2599
        %v2992 = vpack.c.b16 %v2608, %v2604
        %v2993 = vpack.c.b16 %v2609, %v2605
        %v2994 = vpack.c.b16 %v2610, %v2606
        %v2995 = vpack.c.b16 %v2611, %v2607
        %v2996 = vpack.c.b16 %v2616, %v2612
        %v2997 = vpack.c.b16 %v2617, %v2613
        %v2998 = vpack.c.b16 %v2618, %v2614
        %v2999 = vpack.c.b16 %v2619, %v2615
        %v3000 = vpack.c.b16 %v2624, %v2620
        %v3001 = vpack.c.b16 %v2625, %v2621
        %v3002 = vpack.c.b16 %v2626, %v2622
        %v3003 = vpack.c.b16 %v2627, %v2623
        %v3004 = vpack.c.b16 %v2632, %v2628
        %v3005 = vpack.c.b16 %v2633, %v2629
        %v3006 = vpack.c.b16 %v2634, %v2630
        %v3007 = vpack.c.b16 %v2635, %v2631
        %v3008 = vpack.c.b16 %v2640, %v2636
        %v3009 = vpack.c.b16 %v2641, %v2637
        %v3010 = vpack.c.b16 %v2642, %v2638
        %v3011 = vpack.c.b16 %v2643, %v2639
        %v3012 = vpack.c.b16 %v2648, %v2644
        %v3013 = vpack.c.b16 %v2649, %v2645
        %v3014 = vpack.c.b16 %v2650, %v2646
        %v3015 = vpack.c.b16 %v2651, %v2647
        %v3016 = vpack.c.b16 %v2656, %v2652
        %v3017 = vpack.c.b16 %v2657, %v2653
        %v3018 = vpack.c.b16 %v2658, %v2654
        %v3019 = vpack.c.b16 %v2659, %v2655
        %v3020 = vpack.c.b16 %v2664, %v2660
        %v3021 = vpack.c.b16 %v2665, %v2661
        %v3022 = vpack.c.b16 %v2666, %v2662
        %v3023 = vpack.c.b16 %v2667, %v2663
        %v3024 = vpack.c.b16 %v2672, %v2668
        %v3025 = vpack.c.b16 %v2673, %v2669
        %v3026 = vpack.c.b16 %v2674, %v2670
        %v3027 = vpack.c.b16 %v2675, %v2671
        %v3028 = vpack.c.b16 %v2680, %v2676
        %v3029 = vpack.c.b16 %v2681, %v2677
        %v3030 = vpack.c.b16 %v2682, %v2678
        %v3031 = vpack.c.b16 %v2683, %v2679
        %v3032 = vpack.c.b16 %v2688, %v2684
        %v3033 = vpack.c.b16 %v2689, %v2685
        %v3034 = vpack.c.b16 %v2690, %v2686
        %v3035 = vpack.c.b16 %v2691, %v2687
        %v3036 = vpack.c.b16 %v2696, %v2692
        %v3037 = vpack.c.b16 %v2697, %v2693
        %v3038 = vpack.c.b16 %v2698, %v2694
        %v3039 = vpack.c.b16 %v2699, %v2695
        %v3040 = vpack.c.b16 %v2704, %v2700
        %v3041 = vpack.c.b16 %v2705, %v2701
        %v3042 = vpack.c.b16 %v2706, %v2702
        %v3043 = vpack.c.b16 %v2707, %v2703
        %v3044 = vpack.c.b16 %v2712, %v2708
        %v3045 = vpack.c.b16 %v2713, %v2709
        %v3046 = vpack.c.b16 %v2714, %v2710
        %v3047 = vpack.c.b16 %v2715, %v2711
        %v3048 = vpack.c.b16 %v2720, %v2716
        %v3049 = vpack.c.b16 %v2721, %v2717
        %v3050 = vpack.c.b16 %v2722, %v2718
        %v3051 = vpack.c.b16 %v2723, %v2719
        %v3052 = vpack.c.b16 %v2728, %v2724
        %v3053 = vpack.c.b16 %v2729, %v2725
        %v3054 = vpack.c.b16 %v2730, %v2726
        %v3055 = vpack.c.b16 %v2731, %v2727
        %v3056 = vpack.c.b16 %v2736, %v2732
        %v3057 = vpack.c.b16 %v2737, %v2733
        %v3058 = vpack.c.b16 %v2738, %v2734
        %v3059 = vpack.c.b16 %v2739, %v2735
        %v3060 = vpack.c.b16 %v2744, %v2740
        %v3061 = vpack.c.b16 %v2745, %v2741
        %v3062 = vpack.c.b16 %v2746, %v2742
        %v3063 = vpack.c.b16 %v2747, %v2743
        %v3064 = vpack.c.b16 %v2752, %v2748
        %v3065 = vpack.c.b16 %v2753, %v2749
        %v3066 = vpack.c.b16 %v2754, %v2750
        %v3067 = vpack.c.b16 %v2755, %v2751
        %v3068 = vpack.c.b16 %v2760, %v2756
        %v3069 = vpack.c.b16 %v2761, %v2757
        %v3070 = vpack.c.b16 %v2762, %v2758
        %v3071 = vpack.c.b16 %v2763, %v2759
        %v3072 = vpack.c.b16 %v2768, %v2764
        %v3073 = vpack.c.b16 %v2769, %v2765
        %v3074 = vpack.c.b16 %v2770, %v2766
        %v3075 = vpack.c.b16 %v2771, %v2767
        %v3076 = vpack.c.b16 %v2776, %v2772
        %v3077 = vpack.c.b16 %v2777, %v2773
        %v3078 = vpack.c.b16 %v2778, %v2774
        %v3079 = vpack.c.b16 %v2779, %v2775
        %v3080 = vpack.c.b16 %v2784, %v2780
        %v3081 = vpack.c.b16 %v2785, %v2781
        %v3082 = vpack.c.b16 %v2786, %v2782
        %v3083 = vpack.c.b16 %v2787, %v2783
        %v3084 = vpack.c.b16 %v2792, %v2788
        %v3085 = vpack.c.b16 %v2793, %v2789
        %v3086 = vpack.c.b16 %v2794, %v2790
        %v3087 = vpack.c.b16 %v2795, %v2791
        %v3088 = vpack.c.b16 %v2800, %v2796
        %v3089 = vpack.c.b16 %v2801, %v2797
        %v3090 = vpack.c.b16 %v2802, %v2798
        %v3091 = vpack.c.b16 %v2803, %v2799
        %3380 = vmatpush.bf16.msra.mxu0 %v2832
        %3381 = vmatpush.bf16.msra.mxu0 %v2828
        %3382 = vmatpush.bf16.msra.mxu0 %v2824
        %3383 = vmatpush.bf16.msra.mxu0 %v2820
        %3384 = vmatpush.bf16.msra.mxu0 %v2816
        %3385 = vmatpush.bf16.msra.mxu0 %v2812
        %3386 = vmatpush.bf16.msra.mxu0 %v2808
        %3387 = vmatpush.bf16.msra.mxu0 %v2804
        %3388 = vmatmul.bf16.gmra.mxu0 %v1633
        %v3389 = vpop.f32.mrf.mxu0
        %v3390 = vadd.f32 %v1932, %v3389
        %v3391 = vpop.f32.mrf.mxu0
        %3392 = vdwg.mxu0
        %3393 = vmatpush.bf16.msra.mxu0 %v2864
        %3394 = vmatpush.bf16.msra.mxu0 %v2860
        %3395 = vmatpush.bf16.msra.mxu0 %v2856
        %3396 = vmatpush.bf16.msra.mxu0 %v2852
        %3397 = vmatpush.bf16.msra.mxu0 %v2848
        %3398 = vmatpush.bf16.msra.mxu0 %v2844
        %3399 = vmatpush.bf16.msra.mxu0 %v2840
        %3400 = vmatpush.bf16.msra.mxu0 %v2836
        %3401 = vmatmul.bf16.gmra.mxu0 %v1634
        %v3402 = vpop.f32.mrf.mxu0
        %v3403 = vadd.f32 %v3390, %v3402
        %v3404 = vpop.f32.mrf.mxu0
        %3405 = vdwg.mxu0
        %3406 = vmatpush.bf16.msra.mxu0 %v2896
        %3407 = vmatpush.bf16.msra.mxu0 %v2892
        %3408 = vmatpush.bf16.msra.mxu0 %v2888
        %3409 = vmatpush.bf16.msra.mxu0 %v2884
        %3410 = vmatpush.bf16.msra.mxu0 %v2880
        %3411 = vmatpush.bf16.msra.mxu0 %v2876
        %3412 = vmatpush.bf16.msra.mxu0 %v2872
        %3413 = vmatpush.bf16.msra.mxu0 %v2868
        %3414 = vmatmul.bf16.gmra.mxu0 %v1635
        %v3415 = vpop.f32.mrf.mxu0
        %v3416 = vadd.f32 %v3403, %v3415
        %v3417 = vpop.f32.mrf.mxu0
        %3418 = vdwg.mxu0
        %3419 = vmatpush.bf16.msra.mxu0 %v2928
        %3420 = vmatpush.bf16.msra.mxu0 %v2924
        %3421 = vmatpush.bf16.msra.mxu0 %v2920
        %3422 = vmatpush.bf16.msra.mxu0 %v2916
        %3423 = vmatpush.bf16.msra.mxu0 %v2912
        %3424 = vmatpush.bf16.msra.mxu0 %v2908
        %3425 = vmatpush.bf16.msra.mxu0 %v2904
        %3426 = vmatpush.bf16.msra.mxu0 %v2900
        %3427 = vmatmul.bf16.gmra.mxu0 %v1636
        %v3428 = vpop.f32.mrf.mxu0
        %v3429 = vadd.f32 %v3416, %v3428
        %v3430 = vpop.f32.mrf.mxu0
        %3431 = vdwg.mxu0
        %3432 = vmatpush.bf16.msra.mxu0 %v2960
        %3433 = vmatpush.bf16.msra.mxu0 %v2956
        %3434 = vmatpush.bf16.msra.mxu0 %v2952
        %3435 = vmatpush.bf16.msra.mxu0 %v2948
        %3436 = vmatpush.bf16.msra.mxu0 %v2944
        %3437 = vmatpush.bf16.msra.mxu0 %v2940
        %3438 = vmatpush.bf16.msra.mxu0 %v2936
        %3439 = vmatpush.bf16.msra.mxu0 %v2932
        %3440 = vmatmul.bf16.gmra.mxu0 %v1637
        %v3441 = vpop.f32.mrf.mxu0
        %v3442 = vadd.f32 %v3429, %v3441
        %v3443 = vpop.f32.mrf.mxu0
        %3444 = vdwg.mxu0
        %3445 = vmatpush.bf16.msra.mxu0 %v2992
        %3446 = vmatpush.bf16.msra.mxu0 %v2988
        %3447 = vmatpush.bf16.msra.mxu0 %v2984
        %3448 = vmatpush.bf16.msra.mxu0 %v2980
        %3449 = vmatpush.bf16.msra.mxu0 %v2976
        %3450 = vmatpush.bf16.msra.mxu0 %v2972
        %3451 = vmatpush.bf16.msra.mxu0 %v2968
        %3452 = vmatpush.bf16.msra.mxu0 %v2964
        %3453 = vmatmul.bf16.gmra.mxu0 %v1638
        %v3454 = vpop.f32.mrf.mxu0
        %v3455 = vadd.f32 %v3442, %v3454
        %v3456 = vpop.f32.mrf.mxu0
        %3457 = vdwg.mxu0
        %3458 = vmatpush.bf16.msra.mxu0 %v3024
        %3459 = vmatpush.bf16.msra.mxu0 %v3020
        %3460 = vmatpush.bf16.msra.mxu0 %v3016
        %3461 = vmatpush.bf16.msra.mxu0 %v3012
        %3462 = vmatpush.bf16.msra.mxu0 %v3008
        %3463 = vmatpush.bf16.msra.mxu0 %v3004
        %3464 = vmatpush.bf16.msra.mxu0 %v3000
        %3465 = vmatpush.bf16.msra.mxu0 %v2996
        %3466 = vmatmul.bf16.gmra.mxu0 %v1639
        %v3467 = vpop.f32.mrf.mxu0
        %v3468 = vadd.f32 %v3455, %v3467
        %v3469 = vpop.f32.mrf.mxu0
        %3470 = vdwg.mxu0
        %3471 = vmatpush.bf16.msra.mxu0 %v3056
        %3472 = vmatpush.bf16.msra.mxu0 %v3052
        %3473 = vmatpush.bf16.msra.mxu0 %v3048
        %3474 = vmatpush.bf16.msra.mxu0 %v3044
        %3475 = vmatpush.bf16.msra.mxu0 %v3040
        %3476 = vmatpush.bf16.msra.mxu0 %v3036
        %3477 = vmatpush.bf16.msra.mxu0 %v3032
        %3478 = vmatpush.bf16.msra.mxu0 %v3028
        %3479 = vmatmul.bf16.gmra.mxu0 %v1640
        %v3480 = vpop.f32.mrf.mxu0
        %v3481 = vadd.f32 %v3468, %v3480
        %v3482 = vpop.f32.mrf.mxu0
        %3483 = vdwg.mxu0
        %3484 = vmatpush.bf16.msra.mxu0 %v3088
        %3485 = vmatpush.bf16.msra.mxu0 %v3084
        %3486 = vmatpush.bf16.msra.mxu0 %v3080
        %3487 = vmatpush.bf16.msra.mxu0 %v3076
        %3488 = vmatpush.bf16.msra.mxu0 %v3072
        %3489 = vmatpush.bf16.msra.mxu0 %v3068
        %3490 = vmatpush.bf16.msra.mxu0 %v3064
        %3491 = vmatpush.bf16.msra.mxu0 %v3060
        %3492 = vmatmul.bf16.gmra.mxu0 %v1641
        %v3493 = vpop.f32.mrf.mxu0
        %v3494 = vadd.f32 %v3481, %v3493
        %v3495 = vpop.f32.mrf.mxu0
        %3496 = vdwg.mxu0
        %3497 = vmatpush.bf16.msra.mxu0 %v2833
        %3498 = vmatpush.bf16.msra.mxu0 %v2829
        %3499 = vmatpush.bf16.msra.mxu0 %v2825
        %3500 = vmatpush.bf16.msra.mxu0 %v2821
        %3501 = vmatpush.bf16.msra.mxu0 %v2817
        %3502 = vmatpush.bf16.msra.mxu0 %v2813
        %3503 = vmatpush.bf16.msra.mxu0 %v2809
        %3504 = vmatpush.bf16.msra.mxu0 %v2805
        %3505 = vmatmul.bf16.gmra.mxu0 %v1633
        %v3506 = vpop.f32.mrf.mxu0
        %v3507 = vadd.f32 %v1933, %v3506
        %v3508 = vpop.f32.mrf.mxu0
        %3509 = vdwg.mxu0
        %3510 = vmatpush.bf16.msra.mxu0 %v2865
        %3511 = vmatpush.bf16.msra.mxu0 %v2861
        %3512 = vmatpush.bf16.msra.mxu0 %v2857
        %3513 = vmatpush.bf16.msra.mxu0 %v2853
        %3514 = vmatpush.bf16.msra.mxu0 %v2849
        %3515 = vmatpush.bf16.msra.mxu0 %v2845
        %3516 = vmatpush.bf16.msra.mxu0 %v2841
        %3517 = vmatpush.bf16.msra.mxu0 %v2837
        %3518 = vmatmul.bf16.gmra.mxu0 %v1634
        %v3519 = vpop.f32.mrf.mxu0
        %v3520 = vadd.f32 %v3507, %v3519
        %v3521 = vpop.f32.mrf.mxu0
        %3522 = vdwg.mxu0
        %3523 = vmatpush.bf16.msra.mxu0 %v2897
        %3524 = vmatpush.bf16.msra.mxu0 %v2893
        %3525 = vmatpush.bf16.msra.mxu0 %v2889
        %3526 = vmatpush.bf16.msra.mxu0 %v2885
        %3527 = vmatpush.bf16.msra.mxu0 %v2881
        %3528 = vmatpush.bf16.msra.mxu0 %v2877
        %3529 = vmatpush.bf16.msra.mxu0 %v2873
        %3530 = vmatpush.bf16.msra.mxu0 %v2869
        %3531 = vmatmul.bf16.gmra.mxu0 %v1635
        %v3532 = vpop.f32.mrf.mxu0
        %v3533 = vadd.f32 %v3520, %v3532
        %v3534 = vpop.f32.mrf.mxu0
        %3535 = vdwg.mxu0
        %3536 = vmatpush.bf16.msra.mxu0 %v2929
        %3537 = vmatpush.bf16.msra.mxu0 %v2925
        %3538 = vmatpush.bf16.msra.mxu0 %v2921
        %3539 = vmatpush.bf16.msra.mxu0 %v2917
        %3540 = vmatpush.bf16.msra.mxu0 %v2913
        %3541 = vmatpush.bf16.msra.mxu0 %v2909
        %3542 = vmatpush.bf16.msra.mxu0 %v2905
        %3543 = vmatpush.bf16.msra.mxu0 %v2901
        %3544 = vmatmul.bf16.gmra.mxu0 %v1636
        %v3545 = vpop.f32.mrf.mxu0
        %v3546 = vadd.f32 %v3533, %v3545
        %v3547 = vpop.f32.mrf.mxu0
        %3548 = vdwg.mxu0
        %3549 = vmatpush.bf16.msra.mxu0 %v2961
        %3550 = vmatpush.bf16.msra.mxu0 %v2957
        %3551 = vmatpush.bf16.msra.mxu0 %v2953
        %3552 = vmatpush.bf16.msra.mxu0 %v2949
        %3553 = vmatpush.bf16.msra.mxu0 %v2945
        %3554 = vmatpush.bf16.msra.mxu0 %v2941
        %3555 = vmatpush.bf16.msra.mxu0 %v2937
        %3556 = vmatpush.bf16.msra.mxu0 %v2933
        %3557 = vmatmul.bf16.gmra.mxu0 %v1637
        %v3558 = vpop.f32.mrf.mxu0
        %v3559 = vadd.f32 %v3546, %v3558
        %v3560 = vpop.f32.mrf.mxu0
        %3561 = vdwg.mxu0
        %3562 = vmatpush.bf16.msra.mxu0 %v2993
        %3563 = vmatpush.bf16.msra.mxu0 %v2989
        %3564 = vmatpush.bf16.msra.mxu0 %v2985
        %3565 = vmatpush.bf16.msra.mxu0 %v2981
        %3566 = vmatpush.bf16.msra.mxu0 %v2977
        %3567 = vmatpush.bf16.msra.mxu0 %v2973
        %3568 = vmatpush.bf16.msra.mxu0 %v2969
        %3569 = vmatpush.bf16.msra.mxu0 %v2965
        %3570 = vmatmul.bf16.gmra.mxu0 %v1638
        %v3571 = vpop.f32.mrf.mxu0
        %v3572 = vadd.f32 %v3559, %v3571
        %v3573 = vpop.f32.mrf.mxu0
        %3574 = vdwg.mxu0
        %3575 = vmatpush.bf16.msra.mxu0 %v3025
        %3576 = vmatpush.bf16.msra.mxu0 %v3021
        %3577 = vmatpush.bf16.msra.mxu0 %v3017
        %3578 = vmatpush.bf16.msra.mxu0 %v3013
        %3579 = vmatpush.bf16.msra.mxu0 %v3009
        %3580 = vmatpush.bf16.msra.mxu0 %v3005
        %3581 = vmatpush.bf16.msra.mxu0 %v3001
        %3582 = vmatpush.bf16.msra.mxu0 %v2997
        %3583 = vmatmul.bf16.gmra.mxu0 %v1639
        %v3584 = vpop.f32.mrf.mxu0
        %v3585 = vadd.f32 %v3572, %v3584
        %v3586 = vpop.f32.mrf.mxu0
        %3587 = vdwg.mxu0
        %3588 = vmatpush.bf16.msra.mxu0 %v3057
        %3589 = vmatpush.bf16.msra.mxu0 %v3053
        %3590 = vmatpush.bf16.msra.mxu0 %v3049
        %3591 = vmatpush.bf16.msra.mxu0 %v3045
        %3592 = vmatpush.bf16.msra.mxu0 %v3041
        %3593 = vmatpush.bf16.msra.mxu0 %v3037
        %3594 = vmatpush.bf16.msra.mxu0 %v3033
        %3595 = vmatpush.bf16.msra.mxu0 %v3029
        %3596 = vmatmul.bf16.gmra.mxu0 %v1640
        %v3597 = vpop.f32.mrf.mxu0
        %v3598 = vadd.f32 %v3585, %v3597
        %v3599 = vpop.f32.mrf.mxu0
        %3600 = vdwg.mxu0
        %3601 = vmatpush.bf16.msra.mxu0 %v3089
        %3602 = vmatpush.bf16.msra.mxu0 %v3085
        %3603 = vmatpush.bf16.msra.mxu0 %v3081
        %3604 = vmatpush.bf16.msra.mxu0 %v3077
        %3605 = vmatpush.bf16.msra.mxu0 %v3073
        %3606 = vmatpush.bf16.msra.mxu0 %v3069
        %3607 = vmatpush.bf16.msra.mxu0 %v3065
        %3608 = vmatpush.bf16.msra.mxu0 %v3061
        %3609 = vmatmul.bf16.gmra.mxu0 %v1641
        %v3610 = vpop.f32.mrf.mxu0
        %v3611 = vadd.f32 %v3598, %v3610
        %v3612 = vpop.f32.mrf.mxu0
        %3613 = vdwg.mxu0
        %3614 = vmatpush.bf16.msra.mxu0 %v2834
        %3615 = vmatpush.bf16.msra.mxu0 %v2830
        %3616 = vmatpush.bf16.msra.mxu0 %v2826
        %3617 = vmatpush.bf16.msra.mxu0 %v2822
        %3618 = vmatpush.bf16.msra.mxu0 %v2818
        %3619 = vmatpush.bf16.msra.mxu0 %v2814
        %3620 = vmatpush.bf16.msra.mxu0 %v2810
        %3621 = vmatpush.bf16.msra.mxu0 %v2806
        %3622 = vmatmul.bf16.gmra.mxu0 %v1633
        %v3623 = vpop.f32.mrf.mxu0
        %v3624 = vadd.f32 %v1934, %v3623
        %v3625 = vpop.f32.mrf.mxu0
        %3626 = vdwg.mxu0
        %3627 = vmatpush.bf16.msra.mxu0 %v2866
        %3628 = vmatpush.bf16.msra.mxu0 %v2862
        %3629 = vmatpush.bf16.msra.mxu0 %v2858
        %3630 = vmatpush.bf16.msra.mxu0 %v2854
        %3631 = vmatpush.bf16.msra.mxu0 %v2850
        %3632 = vmatpush.bf16.msra.mxu0 %v2846
        %3633 = vmatpush.bf16.msra.mxu0 %v2842
        %3634 = vmatpush.bf16.msra.mxu0 %v2838
        %3635 = vmatmul.bf16.gmra.mxu0 %v1634
        %v3636 = vpop.f32.mrf.mxu0
        %v3637 = vadd.f32 %v3624, %v3636
        %v3638 = vpop.f32.mrf.mxu0
        %3639 = vdwg.mxu0
        %3640 = vmatpush.bf16.msra.mxu0 %v2898
        %3641 = vmatpush.bf16.msra.mxu0 %v2894
        %3642 = vmatpush.bf16.msra.mxu0 %v2890
        %3643 = vmatpush.bf16.msra.mxu0 %v2886
        %3644 = vmatpush.bf16.msra.mxu0 %v2882
        %3645 = vmatpush.bf16.msra.mxu0 %v2878
        %3646 = vmatpush.bf16.msra.mxu0 %v2874
        %3647 = vmatpush.bf16.msra.mxu0 %v2870
        %3648 = vmatmul.bf16.gmra.mxu0 %v1635
        %v3649 = vpop.f32.mrf.mxu0
        %v3650 = vadd.f32 %v3637, %v3649
        %v3651 = vpop.f32.mrf.mxu0
        %3652 = vdwg.mxu0
        %3653 = vmatpush.bf16.msra.mxu0 %v2930
        %3654 = vmatpush.bf16.msra.mxu0 %v2926
        %3655 = vmatpush.bf16.msra.mxu0 %v2922
        %3656 = vmatpush.bf16.msra.mxu0 %v2918
        %3657 = vmatpush.bf16.msra.mxu0 %v2914
        %3658 = vmatpush.bf16.msra.mxu0 %v2910
        %3659 = vmatpush.bf16.msra.mxu0 %v2906
        %3660 = vmatpush.bf16.msra.mxu0 %v2902
        %3661 = vmatmul.bf16.gmra.mxu0 %v1636
        %v3662 = vpop.f32.mrf.mxu0
        %v3663 = vadd.f32 %v3650, %v3662
        %v3664 = vpop.f32.mrf.mxu0
        %3665 = vdwg.mxu0
        %3666 = vmatpush.bf16.msra.mxu0 %v2962
        %3667 = vmatpush.bf16.msra.mxu0 %v2958
        %3668 = vmatpush.bf16.msra.mxu0 %v2954
        %3669 = vmatpush.bf16.msra.mxu0 %v2950
        %3670 = vmatpush.bf16.msra.mxu0 %v2946
        %3671 = vmatpush.bf16.msra.mxu0 %v2942
        %3672 = vmatpush.bf16.msra.mxu0 %v2938
        %3673 = vmatpush.bf16.msra.mxu0 %v2934
        %3674 = vmatmul.bf16.gmra.mxu0 %v1637
        %v3675 = vpop.f32.mrf.mxu0
        %v3676 = vadd.f32 %v3663, %v3675
        %v3677 = vpop.f32.mrf.mxu0
        %3678 = vdwg.mxu0
        %3679 = vmatpush.bf16.msra.mxu0 %v2994
        %3680 = vmatpush.bf16.msra.mxu0 %v2990
        %3681 = vmatpush.bf16.msra.mxu0 %v2986
        %3682 = vmatpush.bf16.msra.mxu0 %v2982
        %3683 = vmatpush.bf16.msra.mxu0 %v2978
        %3684 = vmatpush.bf16.msra.mxu0 %v2974
        %3685 = vmatpush.bf16.msra.mxu0 %v2970
        %3686 = vmatpush.bf16.msra.mxu0 %v2966
        %3687 = vmatmul.bf16.gmra.mxu0 %v1638
        %v3688 = vpop.f32.mrf.mxu0
        %v3689 = vadd.f32 %v3676, %v3688
        %v3690 = vpop.f32.mrf.mxu0
        %3691 = vdwg.mxu0
        %3692 = vmatpush.bf16.msra.mxu0 %v3026
        %3693 = vmatpush.bf16.msra.mxu0 %v3022
        %3694 = vmatpush.bf16.msra.mxu0 %v3018
        %3695 = vmatpush.bf16.msra.mxu0 %v3014
        %3696 = vmatpush.bf16.msra.mxu0 %v3010
        %3697 = vmatpush.bf16.msra.mxu0 %v3006
        %3698 = vmatpush.bf16.msra.mxu0 %v3002
        %3699 = vmatpush.bf16.msra.mxu0 %v2998
        %3700 = vmatmul.bf16.gmra.mxu0 %v1639
        %v3701 = vpop.f32.mrf.mxu0
        %v3702 = vadd.f32 %v3689, %v3701
        %v3703 = vpop.f32.mrf.mxu0
        %3704 = vdwg.mxu0
        %3705 = vmatpush.bf16.msra.mxu0 %v3058
        %3706 = vmatpush.bf16.msra.mxu0 %v3054
        %3707 = vmatpush.bf16.msra.mxu0 %v3050
        %3708 = vmatpush.bf16.msra.mxu0 %v3046
        %3709 = vmatpush.bf16.msra.mxu0 %v3042
        %3710 = vmatpush.bf16.msra.mxu0 %v3038
        %3711 = vmatpush.bf16.msra.mxu0 %v3034
        %3712 = vmatpush.bf16.msra.mxu0 %v3030
        %3713 = vmatmul.bf16.gmra.mxu0 %v1640
        %v3714 = vpop.f32.mrf.mxu0
        %v3715 = vadd.f32 %v3702, %v3714
        %v3716 = vpop.f32.mrf.mxu0
        %3717 = vdwg.mxu0
        %3718 = vmatpush.bf16.msra.mxu0 %v3090
        %3719 = vmatpush.bf16.msra.mxu0 %v3086
        %3720 = vmatpush.bf16.msra.mxu0 %v3082
        %3721 = vmatpush.bf16.msra.mxu0 %v3078
        %3722 = vmatpush.bf16.msra.mxu0 %v3074
        %3723 = vmatpush.bf16.msra.mxu0 %v3070
        %3724 = vmatpush.bf16.msra.mxu0 %v3066
        %3725 = vmatpush.bf16.msra.mxu0 %v3062
        %3726 = vmatmul.bf16.gmra.mxu0 %v1641
        %v3727 = vpop.f32.mrf.mxu0
        %v3728 = vadd.f32 %v3715, %v3727
        %v3729 = vpop.f32.mrf.mxu0
        %3730 = vdwg.mxu0
        %3731 = vmatpush.bf16.msra.mxu0 %v2835
        %3732 = vmatpush.bf16.msra.mxu0 %v2831
        %3733 = vmatpush.bf16.msra.mxu0 %v2827
        %3734 = vmatpush.bf16.msra.mxu0 %v2823
        %3735 = vmatpush.bf16.msra.mxu0 %v2819
        %3736 = vmatpush.bf16.msra.mxu0 %v2815
        %3737 = vmatpush.bf16.msra.mxu0 %v2811
        %3738 = vmatpush.bf16.msra.mxu0 %v2807
        %3739 = vmatmul.bf16.gmra.mxu0 %v1633
        %v3740 = vpop.f32.mrf.mxu0
        %v3741 = vadd.f32 %v1935, %v3740
        %v3742 = vpop.f32.mrf.mxu0
        %3743 = vdwg.mxu0
        %3744 = vmatpush.bf16.msra.mxu0 %v2867
        %3745 = vmatpush.bf16.msra.mxu0 %v2863
        %3746 = vmatpush.bf16.msra.mxu0 %v2859
        %3747 = vmatpush.bf16.msra.mxu0 %v2855
        %3748 = vmatpush.bf16.msra.mxu0 %v2851
        %3749 = vmatpush.bf16.msra.mxu0 %v2847
        %3750 = vmatpush.bf16.msra.mxu0 %v2843
        %3751 = vmatpush.bf16.msra.mxu0 %v2839
        %3752 = vmatmul.bf16.gmra.mxu0 %v1634
        %v3753 = vpop.f32.mrf.mxu0
        %v3754 = vadd.f32 %v3741, %v3753
        %v3755 = vpop.f32.mrf.mxu0
        %3756 = vdwg.mxu0
        %3757 = vmatpush.bf16.msra.mxu0 %v2899
        %3758 = vmatpush.bf16.msra.mxu0 %v2895
        %3759 = vmatpush.bf16.msra.mxu0 %v2891
        %3760 = vmatpush.bf16.msra.mxu0 %v2887
        %3761 = vmatpush.bf16.msra.mxu0 %v2883
        %3762 = vmatpush.bf16.msra.mxu0 %v2879
        %3763 = vmatpush.bf16.msra.mxu0 %v2875
        %3764 = vmatpush.bf16.msra.mxu0 %v2871
        %3765 = vmatmul.bf16.gmra.mxu0 %v1635
        %v3766 = vpop.f32.mrf.mxu0
        %v3767 = vadd.f32 %v3754, %v3766
        %v3768 = vpop.f32.mrf.mxu0
        %3769 = vdwg.mxu0
        %3770 = vmatpush.bf16.msra.mxu0 %v2931
        %3771 = vmatpush.bf16.msra.mxu0 %v2927
        %3772 = vmatpush.bf16.msra.mxu0 %v2923
        %3773 = vmatpush.bf16.msra.mxu0 %v2919
        %3774 = vmatpush.bf16.msra.mxu0 %v2915
        %3775 = vmatpush.bf16.msra.mxu0 %v2911
        %3776 = vmatpush.bf16.msra.mxu0 %v2907
        %3777 = vmatpush.bf16.msra.mxu0 %v2903
        %3778 = vmatmul.bf16.gmra.mxu0 %v1636
        %v3779 = vpop.f32.mrf.mxu0
        %v3780 = vadd.f32 %v3767, %v3779
        %v3781 = vpop.f32.mrf.mxu0
        %3782 = vdwg.mxu0
        %3783 = vmatpush.bf16.msra.mxu0 %v2963
        %3784 = vmatpush.bf16.msra.mxu0 %v2959
        %3785 = vmatpush.bf16.msra.mxu0 %v2955
        %3786 = vmatpush.bf16.msra.mxu0 %v2951
        %3787 = vmatpush.bf16.msra.mxu0 %v2947
        %3788 = vmatpush.bf16.msra.mxu0 %v2943
        %3789 = vmatpush.bf16.msra.mxu0 %v2939
        %3790 = vmatpush.bf16.msra.mxu0 %v2935
        %3791 = vmatmul.bf16.gmra.mxu0 %v1637
        %v3792 = vpop.f32.mrf.mxu0
        %v3793 = vadd.f32 %v3780, %v3792
        %v3794 = vpop.f32.mrf.mxu0
        %3795 = vdwg.mxu0
        %3796 = vmatpush.bf16.msra.mxu0 %v2995
        %3797 = vmatpush.bf16.msra.mxu0 %v2991
        %3798 = vmatpush.bf16.msra.mxu0 %v2987
        %3799 = vmatpush.bf16.msra.mxu0 %v2983
        %3800 = vmatpush.bf16.msra.mxu0 %v2979
        %3801 = vmatpush.bf16.msra.mxu0 %v2975
        %3802 = vmatpush.bf16.msra.mxu0 %v2971
        %3803 = vmatpush.bf16.msra.mxu0 %v2967
        %3804 = vmatmul.bf16.gmra.mxu0 %v1638
        %v3805 = vpop.f32.mrf.mxu0
        %v3806 = vadd.f32 %v3793, %v3805
        %v3807 = vpop.f32.mrf.mxu0
        %3808 = vdwg.mxu0
        %3809 = vmatpush.bf16.msra.mxu0 %v3027
        %3810 = vmatpush.bf16.msra.mxu0 %v3023
        %3811 = vmatpush.bf16.msra.mxu0 %v3019
        %3812 = vmatpush.bf16.msra.mxu0 %v3015
        %3813 = vmatpush.bf16.msra.mxu0 %v3011
        %3814 = vmatpush.bf16.msra.mxu0 %v3007
        %3815 = vmatpush.bf16.msra.mxu0 %v3003
        %3816 = vmatpush.bf16.msra.mxu0 %v2999
        %3817 = vmatmul.bf16.gmra.mxu0 %v1639
        %v3818 = vpop.f32.mrf.mxu0
        %v3819 = vadd.f32 %v3806, %v3818
        %v3820 = vpop.f32.mrf.mxu0
        %3821 = vdwg.mxu0
        %3822 = vmatpush.bf16.msra.mxu0 %v3059
        %3823 = vmatpush.bf16.msra.mxu0 %v3055
        %3824 = vmatpush.bf16.msra.mxu0 %v3051
        %3825 = vmatpush.bf16.msra.mxu0 %v3047
        %3826 = vmatpush.bf16.msra.mxu0 %v3043
        %3827 = vmatpush.bf16.msra.mxu0 %v3039
        %3828 = vmatpush.bf16.msra.mxu0 %v3035
        %3829 = vmatpush.bf16.msra.mxu0 %v3031
        %3830 = vmatmul.bf16.gmra.mxu0 %v1640
        %v3831 = vpop.f32.mrf.mxu0
        %v3832 = vadd.f32 %v3819, %v3831
        %v3833 = vpop.f32.mrf.mxu0
        %3834 = vdwg.mxu0
        %3835 = vmatpush.bf16.msra.mxu0 %v3091
        %3836 = vmatpush.bf16.msra.mxu0 %v3087
        %3837 = vmatpush.bf16.msra.mxu0 %v3083
        %3838 = vmatpush.bf16.msra.mxu0 %v3079
        %3839 = vmatpush.bf16.msra.mxu0 %v3075
        %3840 = vmatpush.bf16.msra.mxu0 %v3071
        %3841 = vmatpush.bf16.msra.mxu0 %v3067
        %3842 = vmatpush.bf16.msra.mxu0 %v3063
        %3843 = vmatmul.bf16.gmra.mxu0 %v1641
        %v3844 = vpop.f32.mrf.mxu0
        %v3845 = vadd.f32 %v3832, %v3844
        %v3846 = vpop.f32.mrf.mxu0
        %3847 = vdwg.mxu0
        %v3848 = vmul.f32 %v3494, 0.2
        %v3849 = vmul.f32 %v3611, 0.2
        %v3850 = vmul.f32 %v3728, 0.2
        %v3851 = vmul.f32 %v3845, 0.2
        %v3852 = vmax.f32 %v3494, %v3848
        %v3853 = vmax.f32 %v3611, %v3849
        %v3854 = vmax.f32 %v3728, %v3850
        %v3855 = vmax.f32 %v3845, %v3851
        %v3856 = vrot.slane %v3852, 4
        %v3857 = vadd.f32 %v3852, %v3856
        %v3858 = vrot.slane %v3857, 2
        %v3859 = vadd.f32 %v3857, %v3858
        %v3860 = vrot.slane %v3859, 1
        %v3861 = vadd.f32 %v3859, %v3860
        %v3862 = vrot.slane %v3853, 4
        %v3863 = vadd.f32 %v3853, %v3862
        %v3864 = vrot.slane %v3863, 2
        %v3865 = vadd.f32 %v3863, %v3864
        %v3866 = vrot.slane %v3865, 1
        %v3867 = vadd.f32 %v3865, %v3866
        %v3868 = vrot.slane %v3854, 4
        %v3869 = vadd.f32 %v3854, %v3868
        %v3870 = vrot.slane %v3869, 2
        %v3871 = vadd.f32 %v3869, %v3870
        %v3872 = vrot.slane %v3871, 1
        %v3873 = vadd.f32 %v3871, %v3872
        %v3874 = vrot.slane %v3855, 4
        %v3875 = vadd.f32 %v3855, %v3874
        %v3876 = vrot.slane %v3875, 2
        %v3877 = vadd.f32 %v3875, %v3876
        %v3878 = vrot.slane %v3877, 1
        %v3879 = vadd.f32 %v3877, %v3878
        %v3880 = vmul.f32 %v3861, %v1298
        %v3881 = vmul.f32 %v3867, %v1298
        %v3882 = vmul.f32 %v3873, %v1298
        %v3883 = vmul.f32 %v3879, %v1298
        %v3884 = vmul.f32 %v3852, %v3852
        %v3885 = vmul.f32 %v3853, %v3853
        %v3886 = vmul.f32 %v3854, %v3854
        %v3887 = vmul.f32 %v3855, %v3855
        %v3888 = vrot.slane %v3884, 4
        %v3889 = vadd.f32 %v3884, %v3888
        %v3890 = vrot.slane %v3889, 2
        %v3891 = vadd.f32 %v3889, %v3890
        %v3892 = vrot.slane %v3891, 1
        %v3893 = vadd.f32 %v3891, %v3892
        %v3894 = vrot.slane %v3885, 4
        %v3895 = vadd.f32 %v3885, %v3894
        %v3896 = vrot.slane %v3895, 2
        %v3897 = vadd.f32 %v3895, %v3896
        %v3898 = vrot.slane %v3897, 1
        %v3899 = vadd.f32 %v3897, %v3898
        %v3900 = vrot.slane %v3886, 4
        %v3901 = vadd.f32 %v3886, %v3900
        %v3902 = vrot.slane %v3901, 2
        %v3903 = vadd.f32 %v3901, %v3902
        %v3904 = vrot.slane %v3903, 1
        %v3905 = vadd.f32 %v3903, %v3904
        %v3906 = vrot.slane %v3887, 4
        %v3907 = vadd.f32 %v3887, %v3906
        %v3908 = vrot.slane %v3907, 2
        %v3909 = vadd.f32 %v3907, %v3908
        %v3910 = vrot.slane %v3909, 1
        %v3911 = vadd.f32 %v3909, %v3910
        %v3912 = vmul.f32 %v3893, %v1298
        %v3913 = vmul.f32 %v3899, %v1298
        %v3914 = vmul.f32 %v3905, %v1298
        %v3915 = vmul.f32 %v3911, %v1298
        %v3916 = vmul.f32 %v3880, %v3880
        %v3917 = vmul.f32 %v3881, %v3881
        %v3918 = vmul.f32 %v3882, %v3882
        %v3919 = vmul.f32 %v3883, %v3883
        %v3920 = vsub.f32 %v3912, %v3916
        %v3921 = vsub.f32 %v3913, %v3917
        %v3922 = vsub.f32 %v3914, %v3918
        %v3923 = vsub.f32 %v3915, %v3919
        %v3924 = vmax.f32 %v3920, 0.0
        %v3925 = vmax.f32 %v3921, 0.0
        %v3926 = vmax.f32 %v3922, 0.0
        %v3927 = vmax.f32 %v3923, 0.0
        %v3928 = vld [vmem:[#allocation17] sm:$0xf]
        %v3929 = vadd.f32 %v3924, 1e-05
        %v3930 = vadd.f32 %v3925, 1e-05
        %v3931 = vadd.f32 %v3926, 1e-05
        %v3932 = vadd.f32 %v3927, 1e-05
        %v3933 = vrsqrt.pop %v3929
        %v3934 = vmul.f32 %v3933, %v3929
        %v3935 = vmul.f32 %v3934, %v3933
        %v3936 = vmul.f32 0.5, %v3935
        %v3937 = vsub.f32 1.5, %v3936
        %v3938 = vmul.f32 %v3933, %v3937
        %vm3939 = vweird.f32 %v3929
        %vm3940 = vweird.f32 %v3933
        %vm3941 = vmor %vm3939, %vm3940
        %v3942 = vsel %vm3941, %v3933, %v3938
        %v3943 = vrsqrt.pop %v3930
        %v3944 = vmul.f32 %v3943, %v3930
        %v3945 = vmul.f32 %v3944, %v3943
        %v3946 = vmul.f32 0.5, %v3945
        %v3947 = vsub.f32 1.5, %v3946
        %v3948 = vmul.f32 %v3943, %v3947
        %vm3949 = vweird.f32 %v3930
        %vm3950 = vweird.f32 %v3943
        %vm3951 = vmor %vm3949, %vm3950
        %v3952 = vsel %vm3951, %v3943, %v3948
        %v3953 = vrsqrt.pop %v3931
        %v3954 = vmul.f32 %v3953, %v3931
        %v3955 = vmul.f32 %v3954, %v3953
        %v3956 = vmul.f32 0.5, %v3955
        %v3957 = vsub.f32 1.5, %v3956
        %v3958 = vmul.f32 %v3953, %v3957
        %vm3959 = vweird.f32 %v3931
        %vm3960 = vweird.f32 %v3953
        %vm3961 = vmor %vm3959, %vm3960
        %v3962 = vsel %vm3961, %v3953, %v3958
        %v3963 = vrsqrt.pop %v3932
        %v3964 = vmul.f32 %v3963, %v3932
        %v3965 = vmul.f32 %v3964, %v3963
        %v3966 = vmul.f32 0.5, %v3965
        %v3967 = vsub.f32 1.5, %v3966
        %v3968 = vmul.f32 %v3963, %v3967
        %vm3969 = vweird.f32 %v3932
        %vm3970 = vweird.f32 %v3963
        %vm3971 = vmor %vm3969, %vm3970
        %v3972 = vsel %vm3971, %v3963, %v3968
        %v3977 = vrot.slane %v3952, 7
        %v3978 = vrot.slane %v3962, 6
        %v3979 = vrot.slane %v3972, 5
        %v3980 = vsel %vm1523, %v3942, %v3977
        %v3981 = vsel %vm1525, %v3978, %v3979
        %v3982 = vsel %vm1527, %v3980, %v3981
        %v3984 = vmul.f32 %v3928, %v3982
        %v3985 = vld [vmem:[#allocation19] sm:$0xf]
        %v3987 = vperm.slane %v3984, 0
        %v3988 = vperm.slane %v3984, 1
        %v3989 = vperm.slane %v3984, 2
        %v3990 = vperm.slane %v3984, 3
        %v3995 = vmul.f32 %v3880, %v3987
        %v3996 = vmul.f32 %v3881, %v3988
        %v3997 = vmul.f32 %v3882, %v3989
        %v3998 = vmul.f32 %v3883, %v3990
        %v4003 = vrot.slane %v3996, 7
        %v4004 = vrot.slane %v3997, 6
        %v4005 = vrot.slane %v3998, 5
        %v4006 = vsel %vm1523, %v3995, %v4003
        %v4007 = vsel %vm1525, %v4004, %v4005
        %v4008 = vsel %vm1527, %v4006, %v4007
        %v4010 = vsub.f32 %v3985, %v4008
        %v4011 = vmul.f32 %v3852, %v3987
        %v4012 = vmul.f32 %v3853, %v3988
        %v4013 = vmul.f32 %v3854, %v3989
        %v4014 = vmul.f32 %v3855, %v3990
        %v4016 = vperm.slane %v4010, 0
        %v4017 = vperm.slane %v4010, 1
        %v4018 = vperm.slane %v4010, 2
        %v4019 = vperm.slane %v4010, 3
        %v4024 = vadd.f32 %v4011, %v4016
        %v4025 = vadd.f32 %v4012, %v4017
        %v4026 = vadd.f32 %v4013, %v4018
        %v4027 = vadd.f32 %v4014, %v4019
        %v4028 = vpack.c.bf16 %v4024, %v4024
        %v4029 = vpack.c.bf16 %v4025, %v4025
        %v4030 = vpack.c.bf16 %v4026, %v4026
        %v4031 = vpack.c.bf16 %v4027, %v4027
        %v4032 = vld [vmem:[#allocation20] sm:$0xf]
        %v4033 = vld [vmem:[#allocation20 + $0x4] sm:$0xf]
        %v4034 = vld [vmem:[#allocation20 + $0x8] sm:$0xf]
        %v4035 = vld [vmem:[#allocation20 + $0xc] sm:$0xf]
        %v4036 = vld [vmem:[#allocation20 + $0x10] sm:$0xf]
        %v4037 = vld [vmem:[#allocation20 + $0x14] sm:$0xf]
        %v4038 = vld [vmem:[#allocation20 + $0x18] sm:$0xf]
        %v4039 = vld [vmem:[#allocation20 + $0x1c] sm:$0xf]
        %v4040 = vld [vmem:[#allocation20 + $0x20] sm:$0xf]
        %v4041 = vld [vmem:[#allocation20 + $0x24] sm:$0xf]
        %v4042 = vld [vmem:[#allocation20 + $0x28] sm:$0xf]
        %v4043 = vld [vmem:[#allocation20 + $0x2c] sm:$0xf]
        %v4044 = vld [vmem:[#allocation20 + $0x30] sm:$0xf]
        %v4045 = vld [vmem:[#allocation20 + $0x34] sm:$0xf]
        %v4046 = vld [vmem:[#allocation20 + $0x38] sm:$0xf]
        %v4047 = vld [vmem:[#allocation20 + $0x3c] sm:$0xf]
        %v4048 = vld [vmem:[#allocation20 + $0x40] sm:$0xf]
        %v4049 = vld [vmem:[#allocation20 + $0x44] sm:$0xf]
        %v4050 = vld [vmem:[#allocation20 + $0x48] sm:$0xf]
        %v4051 = vld [vmem:[#allocation20 + $0x4c] sm:$0xf]
        %v4052 = vld [vmem:[#allocation20 + $0x50] sm:$0xf]
        %v4053 = vld [vmem:[#allocation20 + $0x54] sm:$0xf]
        %v4054 = vld [vmem:[#allocation20 + $0x58] sm:$0xf]
        %v4055 = vld [vmem:[#allocation20 + $0x5c] sm:$0xf]
        %v4056 = vld [vmem:[#allocation20 + $0x60] sm:$0xf]
        %v4057 = vld [vmem:[#allocation20 + $0x64] sm:$0xf]
        %v4058 = vld [vmem:[#allocation20 + $0x68] sm:$0xf]
        %v4059 = vld [vmem:[#allocation20 + $0x6c] sm:$0xf]
        %v4060 = vld [vmem:[#allocation20 + $0x70] sm:$0xf]
        %v4061 = vld [vmem:[#allocation20 + $0x74] sm:$0xf]
        %v4062 = vld [vmem:[#allocation20 + $0x78] sm:$0xf]
        %v4063 = vld [vmem:[#allocation20 + $0x7c] sm:$0xf]
        %v4064 = vld [vmem:[#allocation20 + $0x80] sm:$0xf]
        %v4065 = vld [vmem:[#allocation20 + $0x84] sm:$0xf]
        %v4066 = vld [vmem:[#allocation20 + $0x88] sm:$0xf]
        %v4067 = vld [vmem:[#allocation20 + $0x8c] sm:$0xf]
        %v4068 = vld [vmem:[#allocation20 + $0x90] sm:$0xf]
        %v4069 = vld [vmem:[#allocation20 + $0x94] sm:$0xf]
        %v4070 = vld [vmem:[#allocation20 + $0x98] sm:$0xf]
        %v4071 = vld [vmem:[#allocation20 + $0x9c] sm:$0xf]
        %v4072 = vld [vmem:[#allocation20 + $0xa0] sm:$0xf]
        %v4073 = vld [vmem:[#allocation20 + $0xa4] sm:$0xf]
        %v4074 = vld [vmem:[#allocation20 + $0xa8] sm:$0xf]
        %v4075 = vld [vmem:[#allocation20 + $0xac] sm:$0xf]
        %v4076 = vld [vmem:[#allocation20 + $0xb0] sm:$0xf]
        %v4077 = vld [vmem:[#allocation20 + $0xb4] sm:$0xf]
        %v4078 = vld [vmem:[#allocation20 + $0xb8] sm:$0xf]
        %v4079 = vld [vmem:[#allocation20 + $0xbc] sm:$0xf]
        %v4080 = vld [vmem:[#allocation20 + $0xc0] sm:$0xf]
        %v4081 = vld [vmem:[#allocation20 + $0xc4] sm:$0xf]
        %v4082 = vld [vmem:[#allocation20 + $0xc8] sm:$0xf]
        %v4083 = vld [vmem:[#allocation20 + $0xcc] sm:$0xf]
        %v4084 = vld [vmem:[#allocation20 + $0xd0] sm:$0xf]
        %v4085 = vld [vmem:[#allocation20 + $0xd4] sm:$0xf]
        %v4086 = vld [vmem:[#allocation20 + $0xd8] sm:$0xf]
        %v4087 = vld [vmem:[#allocation20 + $0xdc] sm:$0xf]
        %v4088 = vld [vmem:[#allocation20 + $0xe0] sm:$0xf]
        %v4089 = vld [vmem:[#allocation20 + $0xe4] sm:$0xf]
        %v4090 = vld [vmem:[#allocation20 + $0xe8] sm:$0xf]
        %v4091 = vld [vmem:[#allocation20 + $0xec] sm:$0xf]
        %v4092 = vld [vmem:[#allocation20 + $0xf0] sm:$0xf]
        %v4093 = vld [vmem:[#allocation20 + $0xf4] sm:$0xf]
        %v4094 = vld [vmem:[#allocation20 + $0xf8] sm:$0xf]
        %v4095 = vld [vmem:[#allocation20 + $0xfc] sm:$0xf]
        %v4096 = vld [vmem:[#allocation22] sm:$0x1]
        %v4098 = vperm.slane %v4096, 0
        %v4164 = vunpack.c.l.b16 %v4032
        %v4165 = vunpack.c.l.b16 %v4033
        %v4166 = vunpack.c.l.b16 %v4034
        %v4167 = vunpack.c.l.b16 %v4035
        %v4168 = vunpack.c.l.b16 %v4036
        %v4169 = vunpack.c.l.b16 %v4037
        %v4170 = vunpack.c.l.b16 %v4038
        %v4171 = vunpack.c.l.b16 %v4039
        %v4172 = vunpack.c.l.b16 %v4040
        %v4173 = vunpack.c.l.b16 %v4041
        %v4174 = vunpack.c.l.b16 %v4042
        %v4175 = vunpack.c.l.b16 %v4043
        %v4176 = vunpack.c.l.b16 %v4044
        %v4177 = vunpack.c.l.b16 %v4045
        %v4178 = vunpack.c.l.b16 %v4046
        %v4179 = vunpack.c.l.b16 %v4047
        %v4180 = vunpack.c.l.b16 %v4048
        %v4181 = vunpack.c.l.b16 %v4049
        %v4182 = vunpack.c.l.b16 %v4050
        %v4183 = vunpack.c.l.b16 %v4051
        %v4184 = vunpack.c.l.b16 %v4052
        %v4185 = vunpack.c.l.b16 %v4053
        %v4186 = vunpack.c.l.b16 %v4054
        %v4187 = vunpack.c.l.b16 %v4055
        %v4188 = vunpack.c.l.b16 %v4056
        %v4189 = vunpack.c.l.b16 %v4057
        %v4190 = vunpack.c.l.b16 %v4058
        %v4191 = vunpack.c.l.b16 %v4059
        %v4192 = vunpack.c.l.b16 %v4060
        %v4193 = vunpack.c.l.b16 %v4061
        %v4194 = vunpack.c.l.b16 %v4062
        %v4195 = vunpack.c.l.b16 %v4063
        %v4196 = vunpack.c.l.b16 %v4064
        %v4197 = vunpack.c.l.b16 %v4065
        %v4198 = vunpack.c.l.b16 %v4066
        %v4199 = vunpack.c.l.b16 %v4067
        %v4200 = vunpack.c.l.b16 %v4068
        %v4201 = vunpack.c.l.b16 %v4069
        %v4202 = vunpack.c.l.b16 %v4070
        %v4203 = vunpack.c.l.b16 %v4071
        %v4204 = vunpack.c.l.b16 %v4072
        %v4205 = vunpack.c.l.b16 %v4073
        %v4206 = vunpack.c.l.b16 %v4074
        %v4207 = vunpack.c.l.b16 %v4075
        %v4208 = vunpack.c.l.b16 %v4076
        %v4209 = vunpack.c.l.b16 %v4077
        %v4210 = vunpack.c.l.b16 %v4078
        %v4211 = vunpack.c.l.b16 %v4079
        %v4212 = vunpack.c.l.b16 %v4080
        %v4213 = vunpack.c.l.b16 %v4081
        %v4214 = vunpack.c.l.b16 %v4082
        %v4215 = vunpack.c.l.b16 %v4083
        %v4216 = vunpack.c.l.b16 %v4084
        %v4217 = vunpack.c.l.b16 %v4085
        %v4218 = vunpack.c.l.b16 %v4086
        %v4219 = vunpack.c.l.b16 %v4087
        %v4220 = vunpack.c.l.b16 %v4088
        %v4221 = vunpack.c.l.b16 %v4089
        %v4222 = vunpack.c.l.b16 %v4090
        %v4223 = vunpack.c.l.b16 %v4091
        %v4224 = vunpack.c.l.b16 %v4092
        %v4225 = vunpack.c.l.b16 %v4093
        %v4226 = vunpack.c.l.b16 %v4094
        %v4227 = vunpack.c.l.b16 %v4095
        %v4228 = vpack.c.b16 %v4165, %v4164
        %v4229 = vpack.c.b16 %v4167, %v4166
        %v4230 = vpack.c.b16 %v4169, %v4168
        %v4231 = vpack.c.b16 %v4171, %v4170
        %v4232 = vpack.c.b16 %v4173, %v4172
        %v4233 = vpack.c.b16 %v4175, %v4174
        %v4234 = vpack.c.b16 %v4177, %v4176
        %v4235 = vpack.c.b16 %v4179, %v4178
        %v4236 = vpack.c.b16 %v4181, %v4180
        %v4237 = vpack.c.b16 %v4183, %v4182
        %v4238 = vpack.c.b16 %v4185, %v4184
        %v4239 = vpack.c.b16 %v4187, %v4186
        %v4240 = vpack.c.b16 %v4189, %v4188
        %v4241 = vpack.c.b16 %v4191, %v4190
        %v4242 = vpack.c.b16 %v4193, %v4192
        %v4243 = vpack.c.b16 %v4195, %v4194
        %v4244 = vpack.c.b16 %v4197, %v4196
        %v4245 = vpack.c.b16 %v4199, %v4198
        %v4246 = vpack.c.b16 %v4201, %v4200
        %v4247 = vpack.c.b16 %v4203, %v4202
        %v4248 = vpack.c.b16 %v4205, %v4204
        %v4249 = vpack.c.b16 %v4207, %v4206
        %v4250 = vpack.c.b16 %v4209, %v4208
        %v4251 = vpack.c.b16 %v4211, %v4210
        %v4252 = vpack.c.b16 %v4213, %v4212
        %v4253 = vpack.c.b16 %v4215, %v4214
        %v4254 = vpack.c.b16 %v4217, %v4216
        %v4255 = vpack.c.b16 %v4219, %v4218
        %v4256 = vpack.c.b16 %v4221, %v4220
        %v4257 = vpack.c.b16 %v4223, %v4222
        %v4258 = vpack.c.b16 %v4225, %v4224
        %v4259 = vpack.c.b16 %v4227, %v4226
        %4292 = vmatpush.bf16.msra.mxu0 %v4235
        %4293 = vmatpush.bf16.msra.mxu0 %v4234
        %4294 = vmatpush.bf16.msra.mxu0 %v4233
        %4295 = vmatpush.bf16.msra.mxu0 %v4232
        %4296 = vmatpush.bf16.msra.mxu0 %v4231
        %4297 = vmatpush.bf16.msra.mxu0 %v4230
        %4298 = vmatpush.bf16.msra.mxu0 %v4229
        %4299 = vmatpush.bf16.msra.mxu0 %v4228
        %4300 = vmatmul.bf16.gmra.mxu0 %v4028
        %v4301 = vpop.f32.mrf.mxu0
        %v4302 = vadd.f32 %v4098, %v4301
        %v4303 = vpop.f32.mrf.mxu0
        %4304 = vdwg.mxu0
        %4305 = vmatpush.bf16.msra.mxu0 %v4243
        %4306 = vmatpush.bf16.msra.mxu0 %v4242
        %4307 = vmatpush.bf16.msra.mxu0 %v4241
        %4308 = vmatpush.bf16.msra.mxu0 %v4240
        %4309 = vmatpush.bf16.msra.mxu0 %v4239
        %4310 = vmatpush.bf16.msra.mxu0 %v4238
        %4311 = vmatpush.bf16.msra.mxu0 %v4237
        %4312 = vmatpush.bf16.msra.mxu0 %v4236
        %4313 = vmatmul.bf16.gmra.mxu0 %v4029
        %v4314 = vpop.f32.mrf.mxu0
        %v4315 = vadd.f32 %v4302, %v4314
        %v4316 = vpop.f32.mrf.mxu0
        %4317 = vdwg.mxu0
        %4318 = vmatpush.bf16.msra.mxu0 %v4251
        %4319 = vmatpush.bf16.msra.mxu0 %v4250
        %4320 = vmatpush.bf16.msra.mxu0 %v4249
        %4321 = vmatpush.bf16.msra.mxu0 %v4248
        %4322 = vmatpush.bf16.msra.mxu0 %v4247
        %4323 = vmatpush.bf16.msra.mxu0 %v4246
        %4324 = vmatpush.bf16.msra.mxu0 %v4245
        %4325 = vmatpush.bf16.msra.mxu0 %v4244
        %4326 = vmatmul.bf16.gmra.mxu0 %v4030
        %v4327 = vpop.f32.mrf.mxu0
        %v4328 = vadd.f32 %v4315, %v4327
        %v4329 = vpop.f32.mrf.mxu0
        %4330 = vdwg.mxu0
        %4331 = vmatpush.bf16.msra.mxu0 %v4259
        %4332 = vmatpush.bf16.msra.mxu0 %v4258
        %4333 = vmatpush.bf16.msra.mxu0 %v4257
        %4334 = vmatpush.bf16.msra.mxu0 %v4256
        %4335 = vmatpush.bf16.msra.mxu0 %v4255
        %4336 = vmatpush.bf16.msra.mxu0 %v4254
        %4337 = vmatpush.bf16.msra.mxu0 %v4253
        %4338 = vmatpush.bf16.msra.mxu0 %v4252
        %4339 = vmatmul.bf16.gmra.mxu0 %v4031
        %v4340 = vpop.f32.mrf.mxu0
        %v4341 = vadd.f32 %v4328, %v4340
        %v4342 = vpop.f32.mrf.mxu0
        %4343 = vdwg.mxu0
        %v4344 = vmul.f32 %v4341, 0.2
        %v4345 = vmax.f32 %v4341, %v4344
        %v4346 = vrot.slane %v4345, 4
        %v4347 = vadd.f32 %v4345, %v4346
        %v4348 = vrot.slane %v4347, 2
        %v4349 = vadd.f32 %v4347, %v4348
        %v4350 = vrot.slane %v4349, 1
        %v4351 = vadd.f32 %v4349, %v4350
        %v4352 = vmul.f32 %v4351, %v1298
        %v4353 = vmul.f32 %v4345, %v4345
        %v4354 = vrot.slane %v4353, 4
        %v4355 = vadd.f32 %v4353, %v4354
        %v4356 = vrot.slane %v4355, 2
        %v4357 = vadd.f32 %v4355, %v4356
        %v4358 = vrot.slane %v4357, 1
        %v4359 = vadd.f32 %v4357, %v4358
        %v4360 = vmul.f32 %v4359, %v1298
        %v4361 = vmul.f32 %v4352, %v4352
        %v4362 = vsub.f32 %v4360, %v4361
        %v4363 = vmax.f32 %v4362, 0.0
        %v4364 = vld [vmem:[#allocation23] sm:$0x1]
        %v4365 = vadd.f32 %v4363, 1e-05
        %v4366 = vrsqrt.pop %v4365
        %v4367 = vmul.f32 %v4366, %v4365
        %v4368 = vmul.f32 %v4367, %v4366
        %v4369 = vmul.f32 0.5, %v4368
        %v4370 = vsub.f32 1.5, %v4369
        %v4371 = vmul.f32 %v4366, %v4370
        %vm4372 = vweird.f32 %v4365
        %vm4373 = vweird.f32 %v4366
        %vm4374 = vmor %vm4372, %vm4373
        %v4375 = vsel %vm4374, %v4366, %v4371
        %v4376 = vmul.f32 %v4364, %v4375
        %v4377 = vld [vmem:[#allocation25] sm:$0x1]
        %v4378 = vmul.f32 %v4352, %v4376
        %v4379 = vsub.f32 %v4377, %v4378
        %v4381 = vperm.slane %v4376, 0
        %v4383 = vmul.f32 %v4345, %v4381
        %v4385 = vperm.slane %v4379, 0
        %v4387 = vadd.f32 %v4383, %v4385
        %v4388 = vpack.c.bf16 %v4387, %v4387
        %v4389 = vld [vmem:[#allocation26] sm:$0xf]
        %v4390 = vld [vmem:[#allocation26 + $0x4] sm:$0xf]
        %v4391 = vld [vmem:[#allocation26 + $0x8] sm:$0xf]
        %v4392 = vld [vmem:[#allocation26 + $0xc] sm:$0xf]
        %v4393 = vld [vmem:[#allocation26 + $0x10] sm:$0xf]
        %v4394 = vld [vmem:[#allocation26 + $0x14] sm:$0xf]
        %v4395 = vld [vmem:[#allocation26 + $0x18] sm:$0xf]
        %v4396 = vld [vmem:[#allocation26 + $0x1c] sm:$0xf]
        %v4397 = vld [vmem:[#allocation26 + $0x20] sm:$0xf]
        %v4398 = vld [vmem:[#allocation26 + $0x24] sm:$0xf]
        %v4399 = vld [vmem:[#allocation26 + $0x28] sm:$0xf]
        %v4400 = vld [vmem:[#allocation26 + $0x2c] sm:$0xf]
        %v4401 = vld [vmem:[#allocation26 + $0x30] sm:$0xf]
        %v4402 = vld [vmem:[#allocation26 + $0x34] sm:$0xf]
        %v4403 = vld [vmem:[#allocation26 + $0x38] sm:$0xf]
        %v4404 = vld [vmem:[#allocation26 + $0x3c] sm:$0xf]
        %v4405 = vld [vmem:[#allocation28] sm:$0x1]
        %v4407 = vperm.slane %v4405, 0
        %v4425 = vunpack.c.l.b16 %v4389
        %v4426 = vunpack.c.l.b16 %v4390
        %v4427 = vunpack.c.l.b16 %v4391
        %v4428 = vunpack.c.l.b16 %v4392
        %v4429 = vunpack.c.l.b16 %v4393
        %v4430 = vunpack.c.l.b16 %v4394
        %v4431 = vunpack.c.l.b16 %v4395
        %v4432 = vunpack.c.l.b16 %v4396
        %v4433 = vunpack.c.l.b16 %v4397
        %v4434 = vunpack.c.l.b16 %v4398
        %v4435 = vunpack.c.l.b16 %v4399
        %v4436 = vunpack.c.l.b16 %v4400
        %v4437 = vunpack.c.l.b16 %v4401
        %v4438 = vunpack.c.l.b16 %v4402
        %v4439 = vunpack.c.l.b16 %v4403
        %v4440 = vunpack.c.l.b16 %v4404
        %v4441 = vpack.c.b16 %v4426, %v4425
        %v4442 = vpack.c.b16 %v4428, %v4427
        %v4443 = vpack.c.b16 %v4430, %v4429
        %v4444 = vpack.c.b16 %v4432, %v4431
        %v4445 = vpack.c.b16 %v4434, %v4433
        %v4446 = vpack.c.b16 %v4436, %v4435
        %v4447 = vpack.c.b16 %v4438, %v4437
        %v4448 = vpack.c.b16 %v4440, %v4439
        %4457 = vmatpush.bf16.msra.mxu0 %v4448
        %4458 = vmatpush.bf16.msra.mxu0 %v4447
        %4459 = vmatpush.bf16.msra.mxu0 %v4446
        %4460 = vmatpush.bf16.msra.mxu0 %v4445
        %4461 = vmatpush.bf16.msra.mxu0 %v4444
        %4462 = vmatpush.bf16.msra.mxu0 %v4443
        %4463 = vmatpush.bf16.msra.mxu0 %v4442
        %4464 = vmatpush.bf16.msra.mxu0 %v4441
        %4465 = vmatmul.bf16.gmra.mxu0 %v4388
        %v4466 = vpop.f32.mrf.mxu0
        %v4467 = vadd.f32 %v4407, %v4466
        %v4468 = vpop.f32.mrf.mxu0
        %4469 = vdwg.mxu0
        %4470 = vst [vmem:[%s829] sm:$0xff] %v4467
        %s4471 = sand.u32 %s419, 1
        %s4472 = scalar_lea.sflag [#allocation4], %s4471
        %s4473 = sand.u32 %s419, 1
        %s4474 = smul.addr %s4473, 8
        %s4475 = scalar_lea.vmem [#allocation29], %s4474
        // Predicated region
        $region157: #{generator_forward.1} parent=87 // pred_check
          %p4476 = pneg %p429
        $region158: #{generator_forward.1} parent=87 // pred_check_branch
          %4478 = sbr.rel (%p4476) target = $region160
        $region159: #{generator_forward.1} parent=87 // pred_region
          %4480 = vsyncadd %s4472, 0
          %s4481 = smul.addr %s44, 8
          %s4482 = scalar_lea.hbm %s17, %s4481
          %s4484 = sshll.u32 %s4475, 4
          %s4485 = int_to_ptr.vmem [resolvable:$true] %s4484
          %s4486 = sshll.u32 %s4482, 4
          %s4487 = int_to_ptr.hbm [resolvable:$true] %s4486
          %4489 = dma.vmem_to_hbm [thread:$0]  %s4485, 128, %s4487, %s4472
        $region160: #{generator_forward.1} parent=87 // pred_fallthru
          _
      $region88: #{generator_forward.1} parent=5 // pred_fallthru
        _
      %p4490 = scmp.le.s32.totalorder 2, %s39
      // Predicated region
      $region161: #{generator_forward.1} parent=5 // pred_check
        %p4491 = pneg %p4490
      $region162: #{generator_forward.1} parent=5 // pred_check_branch
        %4493 = sbr.rel (%p4491) target = $region164
      $region163: #{generator_forward.1} parent=5 // pred_region
        %s4494 = ssub.s32 %s39, 2
        // Predicated region
        $region165: #{generator_forward.1} parent=163 // pred_check
          %p4495 = pneg %p435
        $region166: #{generator_forward.1} parent=163 // pred_check_branch
          %4497 = sbr.rel (%p4495) target = $region168
        $region167: #{generator_forward.1} parent=163 // pred_region
          %s4498 = sand.u32 %s420, 1
          %s4499 = scalar_lea.sflag [#allocation4], %s4498
          %s4500 = sand.u32 %s420, 1
          %s4501 = smul.addr %s4500, 8
          %s4502 = scalar_lea.vmem [#allocation29], %s4501
          %4504 = dma.done %s4499, 128
        $region168: #{generator_forward.1} parent=163 // pred_fallthru
          _
      $region164: #{generator_forward.1} parent=5 // pred_fallthru
        _
    $region6: #{generator_forward.1} parent=1 // loop_footer
      %s43 = sadd.s32 1, %s39
    $region7: #{generator_forward.1} parent=1 // loop_footer_branch
      %38 = sbr.rel target = $region3
    $region8: #{generator_forward.1} parent=1 // loop_exit
      _
    %4505 = vsyncpa [#allocation3], 1
    %s4506 = scalar_lea.sflag [#allocation3], 1
    %4507 = vsyncpa %s4506, 1
    %4508 = vsyncpa [#allocation6], 1
    %s4509 = scalar_lea.sflag [#allocation6], 1
    %4510 = vsyncpa %s4509, 1
    %4511 = vsyncpa [#allocation9], 1
    %4512 = vsyncpa [#allocation12], 1
    %4513 = vsyncpa [#allocation15], 1
    %4514 = vsyncpa [#allocation18], 1
    %4515 = vsyncpa [#allocation21], 1
    %4516 = vsyncpa [#allocation24], 1
    %4517 = vsyncpa [#allocation27], 1
    %4518 = vsyncpa [#allocation4], 1
    %s4519 = scalar_lea.sflag [#allocation4], 1
    %4520 = vsyncpa %s4519, 1

</llo_original>
